<compile_context>
chip_gen: v7x
topology: tpu7x:2x2x1
jax: 0.10.0
libtpu: 0.0.40
codegen_flags: <defaults>
</compile_context>

<pallas_src>
import functools

import jax
import jax.numpy as jnp
from jax import lax
from jax.experimental import pallas as pl
from jax.experimental.pallas import tpu as pltpu

BN_EPS = 1e-5


@functools.lru_cache(maxsize=None)
def _vmem_limit_bytes():
    # Generation-aware cap: ~3/4 of physical VMEM (v5e/v6e: 128 MiB -> 96 MiB,
    # v7x: 64 MiB -> 48 MiB), clamped to 100 MiB.
    try:
        cap = getattr(pltpu.get_tpu_info(), "vmem_capacity_bytes", None)
        if cap:
            return int(min(int(cap) * 3 // 4, 100 * 1024 * 1024))
    except Exception:
        pass
    return 48 * 1024 * 1024


def _cparams():
    return pltpu.CompilerParams(dimension_semantics=("parallel",),
                                vmem_limit_bytes=_vmem_limit_bytes())


# ---------------------------------------------------------------------------
# Kernel 1: implicit-GEMM conv (stride-1 "same") with fused producer BN+SiLU
#           prologue and packed per-tile BN partial stats.
# ---------------------------------------------------------------------------
def _conv_stats_kernel(*refs, n_inputs, prologues, KH, KW, W, HW, padding):
    # Per input t (in order):
    #   x_ref    : (1, Cin_t, L) bf16  flattened (row-padded) input; either an
    #              already-activated tensor or the producer's RAW pre-BN output.
    #   [scale_ref, shift_ref : (Cin_t, 1) f32]  only if prologues[t]: the
    #              producer's folded BN affine -> BN+SiLU applied here (fused).
    #   w_ref    : (KH*KW, Cout, Cin_t) bf16 tap-major weights.
    # Trailing:
    #   y_ref    : (1, Cout, HW) bf16  raw (pre-BN) conv output, lane-dense.
    #   stats_ref: (1, Cout, 2)  f32   per-tile BN partials [sum, centered M2].
    y_ref, stats_ref = refs[-2], refs[-1]
    slab_len = HW + (KH - 1) * W

    col = None
    if KW > 1:
        col = lax.broadcasted_iota(jnp.int32, (1, slab_len), 1) % W

    acc = None
    pos = 0
    for t in range(n_inputs):
        x_ref = refs[pos]; pos += 1
        sc_ref = sh_ref = None
        if prologues[t]:
            sc_ref, sh_ref = refs[pos], refs[pos + 1]
            pos += 2
        w_ref = refs[pos]; pos += 1

        xall = x_ref[0]                                        # (Cin, L) bf16
        if prologues[t]:
            # Fused producer BN affine + SiLU (deferred from the previous layer).
            xf = xall.astype(jnp.float32) * sc_ref[...] + sh_ref[...]
            xf = xf * pl.reciprocal(1.0 + jnp.exp(-xf), approx=True)
            if padding > 0:
                # Spatial-pad positions must stay 0 in *activated* space (the
                # prologue maps raw 0 -> SiLU(shift) != 0), so zero them again.
                L = HW + 2 * padding * W + 2 * padding
                start = padding + padding * W
                fidx = lax.broadcasted_iota(jnp.int32, (1, L), 1)
                inside = jnp.logical_and(fidx >= start, fidx < start + HW)
                xf = jnp.where(inside, xf, 0.0)
            xall = xf.astype(jnp.bfloat16)

        for j in range(KW):
            # Column-wrap mask depends only on j: hoist it out of the KH loop
            # by pre-masking one slab per j that covers all row offsets.
            slab = xall[:, j:j + slab_len]
            shift = j - padding
            if shift != 0:
                c = col + shift
                valid = jnp.logical_and(c >= 0, c < W)
                slab = jnp.where(valid, slab, jnp.zeros_like(slab))
            for i in range(KH):
                xs = slab[:, i * W:i * W + HW] if KH > 1 else slab
                part = jnp.dot(w_ref[i * KW + j], xs,
                               preferred_element_type=jnp.float32)
                acc = part if acc is None else acc + part

    y_ref[0] = acc.astype(y_ref.dtype)

    # Per-tile BN partials (M2 centered at the tile mean -> numerically stable),
    # packed into one small output.
    s = jnp.sum(acc, axis=1, keepdims=True)                    # (Cout, 1)
    m = s * (1.0 / HW)
    m2 = jnp.sum((acc - m) ** 2, axis=1, keepdims=True)        # (Cout, 1)
    stats_ref[0] = jnp.concatenate([s, m2], axis=1)            # (Cout, 2)


# ---------------------------------------------------------------------------
# Kernel 2: standalone BN affine + SiLU (final cv3 output only)
# ---------------------------------------------------------------------------
def _bn_silu_kernel(y_ref, sc_ref, sh_ref, o_ref):
    t = y_ref[0].astype(jnp.float32) * sc_ref[...] + sh_ref[...]
    o_ref[0] = (t * pl.reciprocal(1.0 + jnp.exp(-t), approx=True)).astype(o_ref.dtype)


# ---------------------------------------------------------------------------
# Kernel 3: BN affine + SiLU + residual add (bottleneck shortcut only)
# ---------------------------------------------------------------------------
def _bn_silu_add_kernel(*refs, r_is_raw):
    if r_is_raw:
        y_ref, sc_ref, sh_ref, r_ref, rsc_ref, rsh_ref, o_ref = refs
    else:
        y_ref, sc_ref, sh_ref, r_ref, o_ref = refs
    t = y_ref[0].astype(jnp.float32) * sc_ref[...] + sh_ref[...]
    act = t * pl.reciprocal(1.0 + jnp.exp(-t), approx=True)
    if r_is_raw:
        r = r_ref[0].astype(jnp.float32) * rsc_ref[...] + rsh_ref[...]
        r = r * pl.reciprocal(1.0 + jnp.exp(-r), approx=True)
    else:
        r = r_ref[0].astype(jnp.float32)
    o_ref[0] = (act + r).astype(o_ref.dtype)


# ---------------------------------------------------------------------------
# Wrappers
# ---------------------------------------------------------------------------
def _flatten_padded(x_nchw, padding):
    # (N, C, H, W) bf16 -> (N, C, (H+2p)*W + 2p) with zero spatial padding.
    if padding > 0:
        x_nchw = jnp.pad(x_nchw, ((0, 0), (0, 0), (padding, padding), (0, 0)))
    xf = x_nchw.reshape(x_nchw.shape[0], x_nchw.shape[1], -1)
    if padding > 0:
        xf = jnp.pad(xf, ((0, 0), (0, 0), (padding, padding)))
    return xf


def _conv_raw(inputs, *, kernel_size, padding, H, W):
    """Pass 1 of a ConvBlock: raw (pre-BN) conv + per-tile BN partials.

    inputs: list of (xflat, cblk, scale, shift, w) where
      xflat : (N, C_total, L) bf16; the channel dim may contain several channel
              blocks and `cblk` selects one purely via BlockSpec (no concat/slice
              ever materialized);
      scale/shift : (Cin, 1) f32 or None; if given, the producer's BN+SiLU is
              applied inside the kernel (fused prologue);
      w     : (Cout, Cin, KH, KW) weights (bias-free conv).
    Returns raw (N, Cout, HW) bf16 and stats (N, Cout, 2) f32.
    """
    KH = KW = kernel_size
    assert 2 * padding == KH - 1, "stride-1 'same' conv only"
    T = KH * KW
    HW = H * W
    N = inputs[0][0].shape[0]
    Cout = inputs[0][4].shape[0]

    args, in_specs, prologues = [], [], []
    for (xflat, cblk, scale, shift, w) in inputs:
        assert w.shape[0] == Cout and w.shape[2] == KH and w.shape[3] == KW
        Cin = w.shape[1]
        L = xflat.shape[-1]
        assert L == HW + 2 * padding * W + 2 * padding
        args.append(xflat)
        in_specs.append(pl.BlockSpec((1, Cin, L), lambda n, _b=cblk: (n, _b, 0)))
        if scale is not None:
            args += [scale, shift]
            in_specs += [pl.BlockSpec((Cin, 1), lambda n: (0, 0)),
                         pl.BlockSpec((Cin, 1), lambda n: (0, 0))]
            prologues.append(True)
        else:
            prologues.append(False)
        wt = jnp.transpose(w, (2, 3, 0, 1)).reshape(T, Cout, Cin).astype(jnp.bfloat16)
        args.append(wt)
        in_specs.append(pl.BlockSpec((T, Cout, Cin), lambda n: (0, 0, 0)))

    kern = functools.partial(_conv_stats_kernel, n_inputs=len(inputs),
                             prologues=tuple(prologues), KH=KH, KW=KW,
                             W=W, HW=HW, padding=padding)
    raw, stats = pl.pallas_call(
        kern,
        grid=(N,),
        in_specs=in_specs,
        out_shape=(jax.ShapeDtypeStruct((N, Cout, HW), jnp.bfloat16),
                   jax.ShapeDtypeStruct((N, Cout, 2), jnp.float32)),
        out_specs=(pl.BlockSpec((1, Cout, HW), lambda n: (n, 0, 0)),
                   pl.BlockSpec((1, Cout, 2), lambda n: (n, 0, 0))),
        compiler_params=_cparams(),
    )(*args)
    return raw, stats


def _bn_scale_shift(stats, gamma, beta, hw):
    # Combine per-tile [sum, centered M2] with the stable parallel-variance
    # formula; fold BN into a per-channel affine (scale, shift), each (C, 1).
    sums = stats[:, :, 0]
    m2s = stats[:, :, 1]
    n_tiles = stats.shape[0]
    total = n_tiles * hw
    mean = jnp.sum(sums, axis=0) / total
    tile_mean = sums / hw
    var = (jnp.sum(m2s, axis=0)
           + hw * jnp.sum((tile_mean - mean[None, :]) ** 2, axis=0)) / total
    scale = gamma.astype(jnp.float32) * lax.rsqrt(var + BN_EPS)
    shift = beta.astype(jnp.float32) - mean * scale
    return scale.reshape(-1, 1), shift.reshape(-1, 1)


def _bn_silu_apply(raw, scale, shift, out_dtype=jnp.float32):
    N, C, HW = raw.shape
    return pl.pallas_call(
        _bn_silu_kernel,
        grid=(N,),
        in_specs=[pl.BlockSpec((1, C, HW), lambda n: (n, 0, 0)),
                  pl.BlockSpec((C, 1), lambda n: (0, 0)),
                  pl.BlockSpec((C, 1), lambda n: (0, 0))],
        out_shape=jax.ShapeDtypeStruct((N, C, HW), out_dtype),
        out_specs=pl.BlockSpec((1, C, HW), lambda n: (n, 0, 0)),
        compiler_params=_cparams(),
    )(raw, scale, shift)


def _bn_silu_residual(raw, scale, shift, res, res_scale=None, res_shift=None,
                      out_dtype=jnp.bfloat16):
    N, C, HW = raw.shape
    r_is_raw = res_scale is not None
    kern = functools.partial(_bn_silu_add_kernel, r_is_raw=r_is_raw)
    in_specs = [pl.BlockSpec((1, C, HW), lambda n: (n, 0, 0)),
                pl.BlockSpec((C, 1), lambda n: (0, 0)),
                pl.BlockSpec((C, 1), lambda n: (0, 0)),
                pl.BlockSpec((1, C, HW), lambda n: (n, 0, 0))]
    args = [raw, scale, shift, res]
    if r_is_raw:
        in_specs += [pl.BlockSpec((C, 1), lambda n: (0, 0)),
                     pl.BlockSpec((C, 1), lambda n: (0, 0))]
        args += [res_scale, res_shift]
    return pl.pallas_call(
        kern,
        grid=(N,),
        in_specs=in_specs,
        out_shape=jax.ShapeDtypeStruct((N, C, HW), out_dtype),
        out_specs=pl.BlockSpec((1, C, HW), lambda n: (n, 0, 0)),
        compiler_params=_cparams(),
    )(*args)


# ---------------------------------------------------------------------------
# C3Block forward: cv3(concat(bottlenecks(cv1(x)), cv2(x)))
# ---------------------------------------------------------------------------
def c3_block(x, params, shortcut=True):
    N, C1, H, W = x.shape
    HW = H * W
    w1, g1, b1 = params["cv1"]
    w2, g2, b2 = params["cv2"]
    w3, g3, b3 = params["cv3"]
    c_ = w1.shape[0]
    C2 = w3.shape[0]

    xb = x.astype(jnp.bfloat16).reshape(N, C1, HW)

    # --- cv1 + cv2 fused into one 1x1-conv kernel (x read from HBM once) ----
    w12 = jnp.concatenate([w1, w2], axis=0)                  # (2c_, C1, 1, 1)
    raw12, st12 = _conv_raw([(xb, 0, None, None, w12)],
                            kernel_size=1, padding=0, H=H, W=W)
    sc12, sh12 = _bn_scale_shift(st12, jnp.concatenate([g1, g2]),
                                 jnp.concatenate([b1, b2]), HW)
    sc1, sh1 = sc12[:c_], sh12[:c_]
    sc2, sh2 = sc12[c_:], sh12[c_:]

    # --- bottlenecks ----------------------------------------------------------
    # y1 state: (tensor (N,c_,HW), scale, shift).  scale/shift not None means y1
    # is still RAW (its BN+SiLU is deferred into the consumer's prologue).
    y1, y1_sc, y1_sh = raw12[:, :c_, :], sc1, sh1

    for bp in params["m"]:
        wb1, gb1, bb1 = bp["conv1"]
        wb2, gb2, bb2 = bp["conv2"]

        x1f = _flatten_padded(y1.reshape(N, c_, H, W), 1)
        rb1, stb1 = _conv_raw([(x1f, 0, y1_sc, y1_sh, wb1)],
                              kernel_size=3, padding=1, H=H, W=W)
        scb1, shb1 = _bn_scale_shift(stb1, gb1, bb1, HW)

        x2f = _flatten_padded(rb1.reshape(N, c_, H, W), 1)
        rb2, stb2 = _conv_raw([(x2f, 0, scb1, shb1, wb2)],
                              kernel_size=3, padding=1, H=H, W=W)
        scb2, shb2 = _bn_scale_shift(stb2, gb2, bb2, HW)

        if shortcut:
            # Only the residual add needs an explicit BN+SiLU pass.
            y1 = _bn_silu_residual(rb2, scb2, shb2, y1, y1_sc, y1_sh)
            y1_sc = y1_sh = None
        else:
            y1, y1_sc, y1_sh = rb2, scb2, shb2

    # --- cv3 on concat(y1, y2) WITHOUT materializing the concat --------------
    # The kernel takes two channel-block inputs and accumulates both Cin
    # contractions into the same fp32 acc; y2 is read straight out of raw12.
    raw3, st3 = _conv_raw(
        [(y1, 0, y1_sc, y1_sh, w3[:, :c_]),
         (raw12, 1, sc2, sh2, w3[:, c_:])],
        kernel_size=1, padding=0, H=H, W=W)
    sc3, sh3 = _bn_scale_shift(st3, g3, b3, HW)
    out = _bn_silu_apply(raw3, sc3, sh3, out_dtype=jnp.float32)
    return out.reshape(N, C2, H, W)


# ---------------------------------------------------------------------------
# Pure-JAX fp32 reference (mirrors the PyTorch module exactly)
# ---------------------------------------------------------------------------
def _ref_conv_block(x, w, gamma, beta, *, padding):
    y = lax.conv_general_dilated(
        x.astype(jnp.float32), w.astype(jnp.float32), (1, 1),
        [(padding, padding), (padding, padding)],
        dimension_numbers=("NCHW", "OIHW", "NCHW"))
    mean = jnp.mean(y, axis=(0, 2, 3), keepdims=True)
    var = jnp.mean((y - mean) ** 2, axis=(0, 2, 3), keepdims=True)
    yn = ((y - mean) * lax.rsqrt(var + BN_EPS) * gamma.reshape(1, -1, 1, 1)
          + beta.reshape(1, -1, 1, 1))
    return yn * jax.nn.sigmoid(yn)


def _ref_c3(x, params, shortcut=True):
    y1 = _ref_conv_block(x, *params["cv1"], padding=0)
    for bp in params["m"]:
        t = _ref_conv_block(y1, *bp["conv1"], padding=1)
        y = _ref_conv_block(t, *bp["conv2"], padding=1)
        y1 = y1 + y if shortcut else y
    y2 = _ref_conv_block(x, *params["cv2"], padding=0)
    return _ref_conv_block(jnp.concatenate([y1, y2], axis=1), *params["cv3"], padding=0)


if __name__ == "__main__":
    # C3Block(c1=8, c2=16, n=1, shortcut=True, g=1, e=0.5)  ->  c_ = 8
    N, C1, H, W = 2, 8, 16, 16
    C2, n_bn = 16, 1
    c_hidden = int(C2 * 0.5)

    def make_conv(k, cin, cout, ksize):
        kw, kg, kb = jax.random.split(k, 3)
        w = 0.1 * jax.random.normal(kw, (cout, cin, ksize, ksize), dtype=jnp.float32)
        gamma = 1.0 + 0.1 * jax.random.normal(kg, (cout,), dtype=jnp.float32)
        beta = 0.05 * jax.random.normal(kb, (cout,), dtype=jnp.float32)
        return (w, gamma, beta)

    keys = jax.random.split(jax.random.PRNGKey(0), 4 + 2 * n_bn)
    x = jax.random.normal(keys[0], (N, C1, H, W), dtype=jnp.float32)
    params = {
        "cv1": make_conv(keys[1], C1, c_hidden, 1),
        "cv2": make_conv(keys[2], C1, c_hidden, 1),
        "cv3": make_conv(keys[3], 2 * c_hidden, C2, 1),
        "m": [
            {"conv1": make_conv(keys[4 + 2 * i], c_hidden, c_hidden, 3),
             "conv2": make_conv(keys[5 + 2 * i], c_hidden, c_hidden, 3)}
            for i in range(n_bn)
        ],
    }

    out = jax.jit(c3_block)(x, params)
    out = jax.block_until_ready(out)

    ref = jax.block_until_ready(_ref_c3(x, params))
    assert out.shape == ref.shape == (N, C2, H, W), (out.shape, ref.shape)
    max_err = float(jnp.max(jnp.abs(out - ref)))
    # bf16 MXU inputs + bf16 raw (pre-BN) activation storage across 5 fused conv
    # layers vs a pure-fp32 reference.
    assert jnp.allclose(out, ref, atol=5e-2, rtol=5e-2), max_err

    print("KERNEL_OK")
</pallas_src>

<mosaic_0001>
module attributes {stable_mosaic.version = 11 : i64} {
  func.func @_conv_stats_kernel(%arg0: i32, %arg1: memref<1x8x256xbf16, #tpu.memory_space<vmem>>, %arg2: memref<1x16x8xbf16, #tpu.memory_space<vmem>>, %arg3: memref<1x16x256xbf16, #tpu.memory_space<vmem>>, %arg4: memref<1x16x2xf32, #tpu.memory_space<vmem>>) attributes {dimension_semantics = [#tpu.dimension_semantics<parallel>], iteration_bounds = array<i64: 2>, scalar_prefetch = 0 : i64, scratch_operands = 0 : i64, tpu.core_type = #tpu.core_type<tc>, window_params = [{transform_indices = @transform_0, window_bounds = array<i64: 1, 8, 256>}, {pipeline_mode = #tpu.pipeline_mode<synchronous>, transform_indices = @transform_1, window_bounds = array<i64: 1, 16, 8>}, {transform_indices = @transform_2, window_bounds = array<i64: 1, 16, 256>}, {transform_indices = @transform_3, window_bounds = array<i64: 1, 16, 2>}]} {
    %c0 = arith.constant 0 : index
    %c0_0 = arith.constant 0 : index
    %c0_1 = arith.constant 0 : index
    %0 = vector.load %arg1[%c0, %c0_0, %c0_1] : memref<1x8x256xbf16, #tpu.memory_space<vmem>>, vector<1x8x256xbf16>
    %1 = vector.shape_cast %0 : vector<1x8x256xbf16> to vector<8x256xbf16>
    %c0_2 = arith.constant 0 : index
    %c0_3 = arith.constant 0 : index
    %c0_4 = arith.constant 0 : index
    %2 = vector.load %arg2[%c0_2, %c0_3, %c0_4] : memref<1x16x8xbf16, #tpu.memory_space<vmem>>, vector<1x16x8xbf16>
    %3 = vector.shape_cast %2 : vector<1x16x8xbf16> to vector<16x8xbf16>
    %cst = arith.constant dense<0.000000e+00> : vector<16x256xf32>
    %4 = tpu.matmul %3, %1, %cst {dimension_numbers = #tpu.dot_dimension_numbers<[1], [0], [0], [1], [0, 0, 1, 1], [], []>} : vector<16x8xbf16>, vector<8x256xbf16>, vector<16x256xf32> -> vector<16x256xf32>
    %5 = arith.truncf %4 : vector<16x256xf32> to vector<16x256xbf16>
    %c0_5 = arith.constant 0 : index
    %c0_6 = arith.constant 0 : index
    %c0_7 = arith.constant 0 : index
    %6 = vector.load %arg3[%c0_5, %c0_6, %c0_7] : memref<1x16x256xbf16, #tpu.memory_space<vmem>>, vector<1x16x256xbf16>
    %7 = vector.shape_cast %6 : vector<1x16x256xbf16> to vector<16x256xbf16>
    %8 = vector.shape_cast %5 : vector<16x256xbf16> to vector<1x16x256xbf16>
    tpu.vector_store %arg3[%c0_5, %c0_6, %c0_7], %8 {strides = array<i32>} : memref<1x16x256xbf16, #tpu.memory_space<vmem>>, vector<1x16x256xbf16>,
    %cst_8 = arith.constant dense<0.000000e+00> : vector<16xf32>
    %9 = vector.multi_reduction <add>, %4, %cst_8 [1] : vector<16x256xf32> to vector<16xf32>
    %10 = vector.shape_cast %9 : vector<16xf32> to vector<16x1xf32>
    %cst_9 = arith.constant 3.906250e-03 : f32
    %11 = vector.broadcast %cst_9 : f32 to vector<16x1xf32>
    %12 = arith.mulf %10, %11 : vector<16x1xf32>
    %13 = vector.broadcast %12 : vector<16x1xf32> to vector<16x256xf32>
    %14 = arith.subf %4, %13 : vector<16x256xf32>
    %15 = arith.mulf %14, %14 : vector<16x256xf32>
    %cst_10 = arith.constant dense<0.000000e+00> : vector<16xf32>
    %16 = vector.multi_reduction <add>, %15, %cst_10 [1] : vector<16x256xf32> to vector<16xf32>
    %17 = vector.shape_cast %16 : vector<16xf32> to vector<16x1xf32>
    %18 = tpu.concatenate %10, %17 in 1 : vector<16x1xf32>, vector<16x1xf32> -> vector<16x2xf32>
    %c0_11 = arith.constant 0 : index
    %c0_12 = arith.constant 0 : index
    %c0_13 = arith.constant 0 : index
    %19 = vector.load %arg4[%c0_11, %c0_12, %c0_13] : memref<1x16x2xf32, #tpu.memory_space<vmem>>, vector<1x16x2xf32>
    %20 = vector.shape_cast %19 : vector<1x16x2xf32> to vector<16x2xf32>
    %21 = vector.shape_cast %18 : vector<16x2xf32> to vector<1x16x2xf32>
    tpu.vector_store %arg4[%c0_11, %c0_12, %c0_13], %21 {strides = array<i32>} : memref<1x16x2xf32, #tpu.memory_space<vmem>>, vector<1x16x2xf32>,
    return
  }
  func.func @transform_0(%arg0: i32) -> (i32, i32, i32) {
    %c0_i32 = arith.constant 0 : i32
    %c0_i32_0 = arith.constant 0 : i32
    %c0_i32_1 = arith.constant 0 : i32
    return %arg0, %c0_i32, %c0_i32_0 : i32, i32, i32
  }
  func.func @transform_1(%arg0: i32) -> (i32, i32, i32) {
    %c0_i32 = arith.constant 0 : i32
    %c0_i32_0 = arith.constant 0 : i32
    %c0_i32_1 = arith.constant 0 : i32
    %c0_i32_2 = arith.constant 0 : i32
    return %c0_i32, %c0_i32_0, %c0_i32_1 : i32, i32, i32
  }
  func.func @transform_2(%arg0: i32) -> (i32, i32, i32) {
    %c0_i32 = arith.constant 0 : i32
    %c0_i32_0 = arith.constant 0 : i32
    %c0_i32_1 = arith.constant 0 : i32
    return %arg0, %c0_i32, %c0_i32_0 : i32, i32, i32
  }
  func.func @transform_3(%arg0: i32) -> (i32, i32, i32) {
    %c0_i32 = arith.constant 0 : i32
    %c0_i32_0 = arith.constant 0 : i32
    %c0_i32_1 = arith.constant 0 : i32
    return %arg0, %c0_i32, %c0_i32_0 : i32, i32, i32
  }
}

module attributes {stable_mosaic.version = 11 : i64} {
  func.func @_conv_stats_kernel(%arg0: i32, %arg1: memref<1x8x290xbf16, #tpu.memory_space<vmem>>, %arg2: memref<8x1xf32, #tpu.memory_space<vmem>>, %arg3: memref<8x1xf32, #tpu.memory_space<vmem>>, %arg4: memref<9x8x8xbf16, #tpu.memory_space<vmem>>, %arg5: memref<1x8x256xbf16, #tpu.memory_space<vmem>>, %arg6: memref<1x8x2xf32, #tpu.memory_space<vmem>>) attributes {dimension_semantics = [#tpu.dimension_semantics<parallel>], iteration_bounds = array<i64: 2>, scalar_prefetch = 0 : i64, scratch_operands = 0 : i64, tpu.core_type = #tpu.core_type<tc>, window_params = [{transform_indices = @transform_0, window_bounds = array<i64: 1, 8, 290>}, {pipeline_mode = #tpu.pipeline_mode<synchronous>, transform_indices = @transform_1, window_bounds = array<i64: 8, 1>}, {pipeline_mode = #tpu.pipeline_mode<synchronous>, transform_indices = @transform_2, window_bounds = array<i64: 8, 1>}, {pipeline_mode = #tpu.pipeline_mode<synchronous>, transform_indices = @transform_3, window_bounds = array<i64: 9, 8, 8>}, {transform_indices = @transform_4, window_bounds = array<i64: 1, 8, 256>}, {transform_indices = @transform_5, window_bounds = array<i64: 1, 8, 2>}]} {
    %0 = tpu.iota {dimensions = array<i32: 1>} : vector<1x288xi32>
    %c16_i32 = arith.constant 16 : i32
    %c0_i32 = arith.constant 0 : i32
    %1 = arith.cmpi eq, %c16_i32, %c0_i32 : i32
    %c1_i32 = arith.constant 1 : i32
    %2 = arith.select %1, %c1_i32, %c16_i32 : i32
    %3 = vector.broadcast %2 : i32 to vector<1x288xi32>
    %4 = arith.remsi %0, %3 : vector<1x288xi32>
    %c0_i32_0 = arith.constant 0 : i32
    %5 = vector.broadcast %c0_i32_0 : i32 to vector<1x288xi32>
    %6 = arith.cmpi ne, %4, %5 : vector<1x288xi32>
    %c0_i32_1 = arith.constant 0 : i32
    %7 = vector.broadcast %c0_i32_1 : i32 to vector<1x288xi32>
    %8 = arith.cmpi slt, %4, %7 : vector<1x288xi32>
    %c0_i32_2 = arith.constant 0 : i32
    %9 = arith.cmpi slt, %2, %c0_i32_2 : i32
    %10 = vector.broadcast %9 : i1 to vector<1x288xi1>
    %11 = vector.broadcast %10 : vector<1x288xi1> to vector<1x288xi1>
    %12 = arith.xori %8, %11 : vector<1x288xi1>
    %13 = arith.andi %12, %6 : vector<1x288xi1>
    %14 = vector.broadcast %2 : i32 to vector<1x288xi32>
    %15 = arith.addi %4, %14 : vector<1x288xi32>
    %16 = arith.select %13, %15, %4 : vector<1x288xi1>, vector<1x288xi32>
    %c0 = arith.constant 0 : index
    %c0_3 = arith.constant 0 : index
    %c0_4 = arith.constant 0 : index
    %17 = vector.load %arg1[%c0, %c0_3, %c0_4] : memref<1x8x290xbf16, #tpu.memory_space<vmem>>, vector<1x8x290xbf16>
    %18 = vector.shape_cast %17 : vector<1x8x290xbf16> to vector<8x290xbf16>
    %19 = arith.extf %18 : vector<8x290xbf16> to vector<8x290xf32>
    %c0_5 = arith.constant 0 : index
    %c0_6 = arith.constant 0 : index
    %20 = vector.load %arg2[%c0_5, %c0_6] : memref<8x1xf32, #tpu.memory_space<vmem>>, vector<8x1xf32>
    %21 = vector.broadcast %20 : vector<8x1xf32> to vector<8x290xf32>
    %22 = arith.mulf %19, %21 : vector<8x290xf32>
    %c0_7 = arith.constant 0 : index
    %c0_8 = arith.constant 0 : index
    %23 = vector.load %arg3[%c0_7, %c0_8] : memref<8x1xf32, #tpu.memory_space<vmem>>, vector<8x1xf32>
    %24 = vector.broadcast %23 : vector<8x1xf32> to vector<8x290xf32>
    %25 = arith.addf %22, %24 : vector<8x290xf32>
    %cst = arith.constant 0.000000e+00 : f32
    %26 = vector.broadcast %cst : f32 to vector<8x290xf32>
    %27 = arith.subf %26, %25 : vector<8x290xf32>
    %28 = math.exp %27 : vector<8x290xf32>
    %cst_9 = arith.constant 1.000000e+00 : f32
    %29 = vector.broadcast %cst_9 : f32 to vector<8x290xf32>
    %30 = arith.addf %29, %28 : vector<8x290xf32>
    %31 = tpu.reciprocal %30 {approx = true} : vector<8x290xf32> -> vector<8x290xf32>
    %32 = arith.mulf %25, %31 : vector<8x290xf32>
    %33 = tpu.iota {dimensions = array<i32: 1>} : vector<1x290xi32>
    %c17_i32 = arith.constant 17 : i32
    %34 = vector.broadcast %c17_i32 : i32 to vector<1x290xi32>
    %35 = arith.cmpi sge, %33, %34 : vector<1x290xi32>
    %c273_i32 = arith.constant 273 : i32
    %36 = vector.broadcast %c273_i32 : i32 to vector<1x290xi32>
    %37 = arith.cmpi slt, %33, %36 : vector<1x290xi32>
    %38 = arith.andi %35, %37 : vector<1x290xi1>
    %cst_10 = arith.constant 0.000000e+00 : f32
    %39 = vector.shape_cast %38 : vector<1x290xi1> to vector<1x290xi1>
    %40 = vector.broadcast %39 : vector<1x290xi1> to vector<8x290xi1>
    %41 = vector.broadcast %cst_10 : f32 to vector<8x290xf32>
    %42 = arith.select %40, %32, %41 : vector<8x290xi1>, vector<8x290xf32>
    %43 = arith.truncf %42 : vector<8x290xf32> to vector<8x290xbf16>
    %44 = vector.extract_strided_slice %43 {offsets = [0, 0], sizes = [8, 288], strides = [1, 1]} : vector<8x290xbf16> to vector<8x288xbf16>
    %c-1_i32 = arith.constant -1 : i32
    %45 = vector.broadcast %c-1_i32 : i32 to vector<1x288xi32>
    %46 = arith.addi %16, %45 : vector<1x288xi32>
    %c0_i32_11 = arith.constant 0 : i32
    %47 = vector.broadcast %c0_i32_11 : i32 to vector<1x288xi32>
    %48 = arith.cmpi sge, %46, %47 : vector<1x288xi32>
    %c16_i32_12 = arith.constant 16 : i32
    %49 = vector.broadcast %c16_i32_12 : i32 to vector<1x288xi32>
    %50 = arith.cmpi slt, %46, %49 : vector<1x288xi32>
    %51 = arith.andi %48, %50 : vector<1x288xi1>
    %cst_13 = arith.constant 0.000000e+00 : bf16
    %52 = vector.broadcast %cst_13 : bf16 to vector<8x288xbf16>
    %53 = vector.shape_cast %51 : vector<1x288xi1> to vector<1x288xi1>
    %54 = vector.broadcast %53 : vector<1x288xi1> to vector<8x288xi1>
    %55 = arith.select %54, %44, %52 : vector<8x288xi1>, vector<8x288xbf16>
    %56 = vector.extract_strided_slice %55 {offsets = [0, 0], sizes = [8, 256], strides = [1, 1]} : vector<8x288xbf16> to vector<8x256xbf16>
    %c0_14 = arith.constant 0 : index
    %c0_15 = arith.constant 0 : index
    %c0_16 = arith.constant 0 : index
    %57 = vector.load %arg4[%c0_14, %c0_15, %c0_16] : memref<9x8x8xbf16, #tpu.memory_space<vmem>>, vector<1x8x8xbf16>
    %58 = vector.shape_cast %57 : vector<1x8x8xbf16> to vector<8x8xbf16>
    %cst_17 = arith.constant dense<0.000000e+00> : vector<8x256xf32>
    %59 = tpu.matmul %58, %56, %cst_17 {dimension_numbers = #tpu.dot_dimension_numbers<[1], [0], [0], [1], [0, 0, 1, 1], [], []>} : vector<8x8xbf16>, vector<8x256xbf16>, vector<8x256xf32> -> vector<8x256xf32>
    %60 = vector.extract_strided_slice %55 {offsets = [0, 16], sizes = [8, 256], strides = [1, 1]} : vector<8x288xbf16> to vector<8x256xbf16>
    %c3 = arith.constant 3 : index
    %c0_18 = arith.constant 0 : index
    %c0_19 = arith.constant 0 : index
    %61 = vector.load %arg4[%c3, %c0_18, %c0_19] : memref<9x8x8xbf16, #tpu.memory_space<vmem>>, vector<1x8x8xbf16>
    %62 = vector.shape_cast %61 : vector<1x8x8xbf16> to vector<8x8xbf16>
    %cst_20 = arith.constant dense<0.000000e+00> : vector<8x256xf32>
    %63 = tpu.matmul %62, %60, %cst_20 {dimension_numbers = #tpu.dot_dimension_numbers<[1], [0], [0], [1], [0, 0, 1, 1], [], []>} : vector<8x8xbf16>, vector<8x256xbf16>, vector<8x256xf32> -> vector<8x256xf32>
    %64 = arith.addf %59, %63 : vector<8x256xf32>
    %65 = vector.extract_strided_slice %55 {offsets = [0, 32], sizes = [8, 256], strides = [1, 1]} : vector<8x288xbf16> to vector<8x256xbf16>
    %c6 = arith.constant 6 : index
    %c0_21 = arith.constant 0 : index
    %c0_22 = arith.constant 0 : index
    %66 = vector.load %arg4[%c6, %c0_21, %c0_22] : memref<9x8x8xbf16, #tpu.memory_space<vmem>>, vector<1x8x8xbf16>
    %67 = vector.shape_cast %66 : vector<1x8x8xbf16> to vector<8x8xbf16>
    %cst_23 = arith.constant dense<0.000000e+00> : vector<8x256xf32>
    %68 = tpu.matmul %67, %65, %cst_23 {dimension_numbers = #tpu.dot_dimension_numbers<[1], [0], [0], [1], [0, 0, 1, 1], [], []>} : vector<8x8xbf16>, vector<8x256xbf16>, vector<8x256xf32> -> vector<8x256xf32>
    %69 = arith.addf %64, %68 : vector<8x256xf32>
    %70 = vector.extract_strided_slice %43 {offsets = [0, 1], sizes = [8, 288], strides = [1, 1]} : vector<8x290xbf16> to vector<8x288xbf16>
    %71 = vector.extract_strided_slice %70 {offsets = [0, 0], sizes = [8, 256], strides = [1, 1]} : vector<8x288xbf16> to vector<8x256xbf16>
    %c1 = arith.constant 1 : index
    %c0_24 = arith.constant 0 : index
    %c0_25 = arith.constant 0 : index
    %72 = vector.load %arg4[%c1, %c0_24, %c0_25] : memref<9x8x8xbf16, #tpu.memory_space<vmem>>, vector<1x8x8xbf16>
    %73 = vector.shape_cast %72 : vector<1x8x8xbf16> to vector<8x8xbf16>
    %cst_26 = arith.constant dense<0.000000e+00> : vector<8x256xf32>
    %74 = tpu.matmul %73, %71, %cst_26 {dimension_numbers = #tpu.dot_dimension_numbers<[1], [0], [0], [1], [0, 0, 1, 1], [], []>} : vector<8x8xbf16>, vector<8x256xbf16>, vector<8x256xf32> -> vector<8x256xf32>
    %75 = arith.addf %69, %74 : vector<8x256xf32>
    %76 = vector.extract_strided_slice %70 {offsets = [0, 16], sizes = [8, 256], strides = [1, 1]} : vector<8x288xbf16> to vector<8x256xbf16>
    %c4 = arith.constant 4 : index
    %c0_27 = arith.constant 0 : index
    %c0_28 = arith.constant 0 : index
    %77 = vector.load %arg4[%c4, %c0_27, %c0_28] : memref<9x8x8xbf16, #tpu.memory_space<vmem>>, vector<1x8x8xbf16>
    %78 = vector.shape_cast %77 : vector<1x8x8xbf16> to vector<8x8xbf16>
    %cst_29 = arith.constant dense<0.000000e+00> : vector<8x256xf32>
    %79 = tpu.matmul %78, %76, %cst_29 {dimension_numbers = #tpu.dot_dimension_numbers<[1], [0], [0], [1], [0, 0, 1, 1], [], []>} : vector<8x8xbf16>, vector<8x256xbf16>, vector<8x256xf32> -> vector<8x256xf32>
    %80 = arith.addf %75, %79 : vector<8x256xf32>
    %81 = vector.extract_strided_slice %70 {offsets = [0, 32], sizes = [8, 256], strides = [1, 1]} : vector<8x288xbf16> to vector<8x256xbf16>
    %c7 = arith.constant 7 : index
    %c0_30 = arith.constant 0 : index
    %c0_31 = arith.constant 0 : index
    %82 = vector.load %arg4[%c7, %c0_30, %c0_31] : memref<9x8x8xbf16, #tpu.memory_space<vmem>>, vector<1x8x8xbf16>
    %83 = vector.shape_cast %82 : vector<1x8x8xbf16> to vector<8x8xbf16>
    %cst_32 = arith.constant dense<0.000000e+00> : vector<8x256xf32>
    %84 = tpu.matmul %83, %81, %cst_32 {dimension_numbers = #tpu.dot_dimension_numbers<[1], [0], [0], [1], [0, 0, 1, 1], [], []>} : vector<8x8xbf16>, vector<8x256xbf16>, vector<8x256xf32> -> vector<8x256xf32>
    %85 = arith.addf %80, %84 : vector<8x256xf32>
    %86 = vector.extract_strided_slice %43 {offsets = [0, 2], sizes = [8, 288], strides = [1, 1]} : vector<8x290xbf16> to vector<8x288xbf16>
    %c1_i32_33 = arith.constant 1 : i32
    %87 = vector.broadcast %c1_i32_33 : i32 to vector<1x288xi32>
    %88 = arith.addi %16, %87 : vector<1x288xi32>
    %c0_i32_34 = arith.constant 0 : i32
    %89 = vector.broadcast %c0_i32_34 : i32 to vector<1x288xi32>
    %90 = arith.cmpi sge, %88, %89 : vector<1x288xi32>
    %c16_i32_35 = arith.constant 16 : i32
    %91 = vector.broadcast %c16_i32_35 : i32 to vector<1x288xi32>
    %92 = arith.cmpi slt, %88, %91 : vector<1x288xi32>
    %93 = arith.andi %90, %92 : vector<1x288xi1>
    %cst_36 = arith.constant 0.000000e+00 : bf16
    %94 = vector.broadcast %cst_36 : bf16 to vector<8x288xbf16>
    %95 = vector.shape_cast %93 : vector<1x288xi1> to vector<1x288xi1>
    %96 = vector.broadcast %95 : vector<1x288xi1> to vector<8x288xi1>
    %97 = arith.select %96, %86, %94 : vector<8x288xi1>, vector<8x288xbf16>
    %98 = vector.extract_strided_slice %97 {offsets = [0, 0], sizes = [8, 256], strides = [1, 1]} : vector<8x288xbf16> to vector<8x256xbf16>
    %c2 = arith.constant 2 : index
    %c0_37 = arith.constant 0 : index
    %c0_38 = arith.constant 0 : index
    %99 = vector.load %arg4[%c2, %c0_37, %c0_38] : memref<9x8x8xbf16, #tpu.memory_space<vmem>>, vector<1x8x8xbf16>
    %100 = vector.shape_cast %99 : vector<1x8x8xbf16> to vector<8x8xbf16>
    %cst_39 = arith.constant dense<0.000000e+00> : vector<8x256xf32>
    %101 = tpu.matmul %100, %98, %cst_39 {dimension_numbers = #tpu.dot_dimension_numbers<[1], [0], [0], [1], [0, 0, 1, 1], [], []>} : vector<8x8xbf16>, vector<8x256xbf16>, vector<8x256xf32> -> vector<8x256xf32>
    %102 = arith.addf %85, %101 : vector<8x256xf32>
    %103 = vector.extract_strided_slice %97 {offsets = [0, 16], sizes = [8, 256], strides = [1, 1]} : vector<8x288xbf16> to vector<8x256xbf16>
    %c5 = arith.constant 5 : index
    %c0_40 = arith.constant 0 : index
    %c0_41 = arith.constant 0 : index
    %104 = vector.load %arg4[%c5, %c0_40, %c0_41] : memref<9x8x8xbf16, #tpu.memory_space<vmem>>, vector<1x8x8xbf16>
    %105 = vector.shape_cast %104 : vector<1x8x8xbf16> to vector<8x8xbf16>
    %cst_42 = arith.constant dense<0.000000e+00> : vector<8x256xf32>
    %106 = tpu.matmul %105, %103, %cst_42 {dimension_numbers = #tpu.dot_dimension_numbers<[1], [0], [0], [1], [0, 0, 1, 1], [], []>} : vector<8x8xbf16>, vector<8x256xbf16>, vector<8x256xf32> -> vector<8x256xf32>
    %107 = arith.addf %102, %106 : vector<8x256xf32>
    %108 = vector.extract_strided_slice %97 {offsets = [0, 32], sizes = [8, 256], strides = [1, 1]} : vector<8x288xbf16> to vector<8x256xbf16>
    %c8 = arith.constant 8 : index
    %c0_43 = arith.constant 0 : index
    %c0_44 = arith.constant 0 : index
    %109 = vector.load %arg4[%c8, %c0_43, %c0_44] : memref<9x8x8xbf16, #tpu.memory_space<vmem>>, vector<1x8x8xbf16>
    %110 = vector.shape_cast %109 : vector<1x8x8xbf16> to vector<8x8xbf16>
    %cst_45 = arith.constant dense<0.000000e+00> : vector<8x256xf32>
    %111 = tpu.matmul %110, %108, %cst_45 {dimension_numbers = #tpu.dot_dimension_numbers<[1], [0], [0], [1], [0, 0, 1, 1], [], []>} : vector<8x8xbf16>, vector<8x256xbf16>, vector<8x256xf32> -> vector<8x256xf32>
    %112 = arith.addf %107, %111 : vector<8x256xf32>
    %113 = arith.truncf %112 : vector<8x256xf32> to vector<8x256xbf16>
    %c0_46 = arith.constant 0 : index
    %c0_47 = arith.constant 0 : index
    %c0_48 = arith.constant 0 : index
    %114 = vector.load %arg5[%c0_46, %c0_47, %c0_48] : memref<1x8x256xbf16, #tpu.memory_space<vmem>>, vector<1x8x256xbf16>
    %115 = vector.shape_cast %114 : vector<1x8x256xbf16> to vector<8x256xbf16>
    %116 = vector.shape_cast %113 : vector<8x256xbf16> to vector<1x8x256xbf16>
    tpu.vector_store %arg5[%c0_46, %c0_47, %c0_48], %116 {strides = array<i32>} : memref<1x8x256xbf16, #tpu.memory_space<vmem>>, vector<1x8x256xbf16>,
    %cst_49 = arith.constant dense<0.000000e+00> : vector<8xf32>
    %117 = vector.multi_reduction <add>, %112, %cst_49 [1] : vector<8x256xf32> to vector<8xf32>
    %118 = vector.shape_cast %117 : vector<8xf32> to vector<8x1xf32>
    %cst_50 = arith.constant 3.906250e-03 : f32
    %119 = vector.broadcast %cst_50 : f32 to vector<8x1xf32>
    %120 = arith.mulf %118, %119 : vector<8x1xf32>
    %121 = vector.broadcast %120 : vector<8x1xf32> to vector<8x256xf32>
    %122 = arith.subf %112, %121 : vector<8x256xf32>
    %123 = arith.mulf %122, %122 : vector<8x256xf32>
    %cst_51 = arith.constant dense<0.000000e+00> : vector<8xf32>
    %124 = vector.multi_reduction <add>, %123, %cst_51 [1] : vector<8x256xf32> to vector<8xf32>
    %125 = vector.shape_cast %124 : vector<8xf32> to vector<8x1xf32>
    %126 = tpu.concatenate %118, %125 in 1 : vector<8x1xf32>, vector<8x1xf32> -> vector<8x2xf32>
    %c0_52 = arith.constant 0 : index
    %c0_53 = arith.constant 0 : index
    %c0_54 = arith.constant 0 : index
    %127 = vector.load %arg6[%c0_52, %c0_53, %c0_54] : memref<1x8x2xf32, #tpu.memory_space<vmem>>, vector<1x8x2xf32>
    %128 = vector.shape_cast %127 : vector<1x8x2xf32> to vector<8x2xf32>
    %129 = vector.shape_cast %126 : vector<8x2xf32> to vector<1x8x2xf32>
    tpu.vector_store %arg6[%c0_52, %c0_53, %c0_54], %129 {strides = array<i32>} : memref<1x8x2xf32, #tpu.memory_space<vmem>>, vector<1x8x2xf32>,
    return
  }
  func.func @transform_0(%arg0: i32) -> (i32, i32, i32) {
    %c0_i32 = arith.constant 0 : i32
    %c0_i32_0 = arith.constant 0 : i32
    %c0_i32_1 = arith.constant 0 : i32
    return %arg0, %c0_i32, %c0_i32_0 : i32, i32, i32
  }
  func.func @transform_1(%arg0: i32) -> (i32, i32) {
    %c0_i32 = arith.constant 0 : i32
    %c0_i32_0 = arith.constant 0 : i32
    %c0_i32_1 = arith.constant 0 : i32
    return %c0_i32, %c0_i32_0 : i32, i32
  }
  func.func @transform_2(%arg0: i32) -> (i32, i32) {
    %c0_i32 = arith.constant 0 : i32
    %c0_i32_0 = arith.constant 0 : i32
    %c0_i32_1 = arith.constant 0 : i32
    return %c0_i32, %c0_i32_0 : i32, i32
  }
  func.func @transform_3(%arg0: i32) -> (i32, i32, i32) {
    %c0_i32 = arith.constant 0 : i32
    %c0_i32_0 = arith.constant 0 : i32
    %c0_i32_1 = arith.constant 0 : i32
    %c0_i32_2 = arith.constant 0 : i32
    return %c0_i32, %c0_i32_0, %c0_i32_1 : i32, i32, i32
  }
  func.func @transform_4(%arg0: i32) -> (i32, i32, i32) {
    %c0_i32 = arith.constant 0 : i32
    %c0_i32_0 = arith.constant 0 : i32
    %c0_i32_1 = arith.constant 0 : i32
    return %arg0, %c0_i32, %c0_i32_0 : i32, i32, i32
  }
  func.func @transform_5(%arg0: i32) -> (i32, i32, i32) {
    %c0_i32 = arith.constant 0 : i32
    %c0_i32_0 = arith.constant 0 : i32
    %c0_i32_1 = arith.constant 0 : i32
    return %arg0, %c0_i32, %c0_i32_0 : i32, i32, i32
  }
}

module attributes {stable_mosaic.version = 11 : i64} {
  func.func @_bn_silu_add_kernel(%arg0: i32, %arg1: memref<1x8x256xbf16, #tpu.memory_space<vmem>>, %arg2: memref<8x1xf32, #tpu.memory_space<vmem>>, %arg3: memref<8x1xf32, #tpu.memory_space<vmem>>, %arg4: memref<1x8x256xbf16, #tpu.memory_space<vmem>>, %arg5: memref<8x1xf32, #tpu.memory_space<vmem>>, %arg6: memref<8x1xf32, #tpu.memory_space<vmem>>, %arg7: memref<1x8x256xbf16, #tpu.memory_space<vmem>>) attributes {dimension_semantics = [#tpu.dimension_semantics<parallel>], iteration_bounds = array<i64: 2>, scalar_prefetch = 0 : i64, scratch_operands = 0 : i64, tpu.core_type = #tpu.core_type<tc>, window_params = [{transform_indices = @transform_0, window_bounds = array<i64: 1, 8, 256>}, {pipeline_mode = #tpu.pipeline_mode<synchronous>, transform_indices = @transform_1, window_bounds = array<i64: 8, 1>}, {pipeline_mode = #tpu.pipeline_mode<synchronous>, transform_indices = @transform_2, window_bounds = array<i64: 8, 1>}, {transform_indices = @transform_3, window_bounds = array<i64: 1, 8, 256>}, {pipeline_mode = #tpu.pipeline_mode<synchronous>, transform_indices = @transform_4, window_bounds = array<i64: 8, 1>}, {pipeline_mode = #tpu.pipeline_mode<synchronous>, transform_indices = @transform_5, window_bounds = array<i64: 8, 1>}, {transform_indices = @transform_6, window_bounds = array<i64: 1, 8, 256>}]} {
    %c0 = arith.constant 0 : index
    %c0_0 = arith.constant 0 : index
    %c0_1 = arith.constant 0 : index
    %0 = vector.load %arg1[%c0, %c0_0, %c0_1] : memref<1x8x256xbf16, #tpu.memory_space<vmem>>, vector<1x8x256xbf16>
    %1 = vector.shape_cast %0 : vector<1x8x256xbf16> to vector<8x256xbf16>
    %2 = arith.extf %1 : vector<8x256xbf16> to vector<8x256xf32>
    %c0_2 = arith.constant 0 : index
    %c0_3 = arith.constant 0 : index
    %3 = vector.load %arg2[%c0_2, %c0_3] : memref<8x1xf32, #tpu.memory_space<vmem>>, vector<8x1xf32>
    %4 = vector.broadcast %3 : vector<8x1xf32> to vector<8x256xf32>
    %5 = arith.mulf %2, %4 : vector<8x256xf32>
    %c0_4 = arith.constant 0 : index
    %c0_5 = arith.constant 0 : index
    %6 = vector.load %arg3[%c0_4, %c0_5] : memref<8x1xf32, #tpu.memory_space<vmem>>, vector<8x1xf32>
    %7 = vector.broadcast %6 : vector<8x1xf32> to vector<8x256xf32>
    %8 = arith.addf %5, %7 : vector<8x256xf32>
    %cst = arith.constant 0.000000e+00 : f32
    %9 = vector.broadcast %cst : f32 to vector<8x256xf32>
    %10 = arith.subf %9, %8 : vector<8x256xf32>
    %11 = math.exp %10 : vector<8x256xf32>
    %cst_6 = arith.constant 1.000000e+00 : f32
    %12 = vector.broadcast %cst_6 : f32 to vector<8x256xf32>
    %13 = arith.addf %12, %11 : vector<8x256xf32>
    %14 = tpu.reciprocal %13 {approx = true} : vector<8x256xf32> -> vector<8x256xf32>
    %15 = arith.mulf %8, %14 : vector<8x256xf32>
    %c0_7 = arith.constant 0 : index
    %c0_8 = arith.constant 0 : index
    %c0_9 = arith.constant 0 : index
    %16 = vector.load %arg4[%c0_7, %c0_8, %c0_9] : memref<1x8x256xbf16, #tpu.memory_space<vmem>>, vector<1x8x256xbf16>
    %17 = vector.shape_cast %16 : vector<1x8x256xbf16> to vector<8x256xbf16>
    %18 = arith.extf %17 : vector<8x256xbf16> to vector<8x256xf32>
    %c0_10 = arith.constant 0 : index
    %c0_11 = arith.constant 0 : index
    %19 = vector.load %arg5[%c0_10, %c0_11] : memref<8x1xf32, #tpu.memory_space<vmem>>, vector<8x1xf32>
    %20 = vector.broadcast %19 : vector<8x1xf32> to vector<8x256xf32>
    %21 = arith.mulf %18, %20 : vector<8x256xf32>
    %c0_12 = arith.constant 0 : index
    %c0_13 = arith.constant 0 : index
    %22 = vector.load %arg6[%c0_12, %c0_13] : memref<8x1xf32, #tpu.memory_space<vmem>>, vector<8x1xf32>
    %23 = vector.broadcast %22 : vector<8x1xf32> to vector<8x256xf32>
    %24 = arith.addf %21, %23 : vector<8x256xf32>
    %cst_14 = arith.constant 0.000000e+00 : f32
    %25 = vector.broadcast %cst_14 : f32 to vector<8x256xf32>
    %26 = arith.subf %25, %24 : vector<8x256xf32>
    %27 = math.exp %26 : vector<8x256xf32>
    %cst_15 = arith.constant 1.000000e+00 : f32
    %28 = vector.broadcast %cst_15 : f32 to vector<8x256xf32>
    %29 = arith.addf %28, %27 : vector<8x256xf32>
    %30 = tpu.reciprocal %29 {approx = true} : vector<8x256xf32> -> vector<8x256xf32>
    %31 = arith.mulf %24, %30 : vector<8x256xf32>
    %32 = arith.addf %15, %31 : vector<8x256xf32>
    %33 = arith.truncf %32 : vector<8x256xf32> to vector<8x256xbf16>
    %c0_16 = arith.constant 0 : index
    %c0_17 = arith.constant 0 : index
    %c0_18 = arith.constant 0 : index
    %34 = vector.load %arg7[%c0_16, %c0_17, %c0_18] : memref<1x8x256xbf16, #tpu.memory_space<vmem>>, vector<1x8x256xbf16>
    %35 = vector.shape_cast %34 : vector<1x8x256xbf16> to vector<8x256xbf16>
    %36 = vector.shape_cast %33 : vector<8x256xbf16> to vector<1x8x256xbf16>
    tpu.vector_store %arg7[%c0_16, %c0_17, %c0_18], %36 {strides = array<i32>} : memref<1x8x256xbf16, #tpu.memory_space<vmem>>, vector<1x8x256xbf16>,
    return
  }
  func.func @transform_0(%arg0: i32) -> (i32, i32, i32) {
    %c0_i32 = arith.constant 0 : i32
    %c0_i32_0 = arith.constant 0 : i32
    %c0_i32_1 = arith.constant 0 : i32
    return %arg0, %c0_i32, %c0_i32_0 : i32, i32, i32
  }
  func.func @transform_1(%arg0: i32) -> (i32, i32) {
    %c0_i32 = arith.constant 0 : i32
    %c0_i32_0 = arith.constant 0 : i32
    %c0_i32_1 = arith.constant 0 : i32
    return %c0_i32, %c0_i32_0 : i32, i32
  }
  func.func @transform_2(%arg0: i32) -> (i32, i32) {
    %c0_i32 = arith.constant 0 : i32
    %c0_i32_0 = arith.constant 0 : i32
    %c0_i32_1 = arith.constant 0 : i32
    return %c0_i32, %c0_i32_0 : i32, i32
  }
  func.func @transform_3(%arg0: i32) -> (i32, i32, i32) {
    %c0_i32 = arith.constant 0 : i32
    %c0_i32_0 = arith.constant 0 : i32
    %c0_i32_1 = arith.constant 0 : i32
    return %arg0, %c0_i32, %c0_i32_0 : i32, i32, i32
  }
  func.func @transform_4(%arg0: i32) -> (i32, i32) {
    %c0_i32 = arith.constant 0 : i32
    %c0_i32_0 = arith.constant 0 : i32
    %c0_i32_1 = arith.constant 0 : i32
    return %c0_i32, %c0_i32_0 : i32, i32
  }
  func.func @transform_5(%arg0: i32) -> (i32, i32) {
    %c0_i32 = arith.constant 0 : i32
    %c0_i32_0 = arith.constant 0 : i32
    %c0_i32_1 = arith.constant 0 : i32
    return %c0_i32, %c0_i32_0 : i32, i32
  }
  func.func @transform_6(%arg0: i32) -> (i32, i32, i32) {
    %c0_i32 = arith.constant 0 : i32
    %c0_i32_0 = arith.constant 0 : i32
    %c0_i32_1 = arith.constant 0 : i32
    return %arg0, %c0_i32, %c0_i32_0 : i32, i32, i32
  }
}

module attributes {stable_mosaic.version = 11 : i64} {
  func.func @_conv_stats_kernel(%arg0: i32, %arg1: memref<1x8x256xbf16, #tpu.memory_space<vmem>>, %arg2: memref<1x16x8xbf16, #tpu.memory_space<vmem>>, %arg3: memref<1x8x256xbf16, #tpu.memory_space<vmem>>, %arg4: memref<8x1xf32, #tpu.memory_space<vmem>>, %arg5: memref<8x1xf32, #tpu.memory_space<vmem>>, %arg6: memref<1x16x8xbf16, #tpu.memory_space<vmem>>, %arg7: memref<1x16x256xbf16, #tpu.memory_space<vmem>>, %arg8: memref<1x16x2xf32, #tpu.memory_space<vmem>>) attributes {dimension_semantics = [#tpu.dimension_semantics<parallel>], iteration_bounds = array<i64: 2>, scalar_prefetch = 0 : i64, scratch_operands = 0 : i64, tpu.core_type = #tpu.core_type<tc>, window_params = [{transform_indices = @transform_0, window_bounds = array<i64: 1, 8, 256>}, {pipeline_mode = #tpu.pipeline_mode<synchronous>, transform_indices = @transform_1, window_bounds = array<i64: 1, 16, 8>}, {transform_indices = @transform_2, window_bounds = array<i64: 1, 8, 256>}, {pipeline_mode = #tpu.pipeline_mode<synchronous>, transform_indices = @transform_3, window_bounds = array<i64: 8, 1>}, {pipeline_mode = #tpu.pipeline_mode<synchronous>, transform_indices = @transform_4, window_bounds = array<i64: 8, 1>}, {pipeline_mode = #tpu.pipeline_mode<synchronous>, transform_indices = @transform_5, window_bounds = array<i64: 1, 16, 8>}, {transform_indices = @transform_6, window_bounds = array<i64: 1, 16, 256>}, {transform_indices = @transform_7, window_bounds = array<i64: 1, 16, 2>}]} {
    %c0 = arith.constant 0 : index
    %c0_0 = arith.constant 0 : index
    %c0_1 = arith.constant 0 : index
    %0 = vector.load %arg1[%c0, %c0_0, %c0_1] : memref<1x8x256xbf16, #tpu.memory_space<vmem>>, vector<1x8x256xbf16>
    %1 = vector.shape_cast %0 : vector<1x8x256xbf16> to vector<8x256xbf16>
    %c0_2 = arith.constant 0 : index
    %c0_3 = arith.constant 0 : index
    %c0_4 = arith.constant 0 : index
    %2 = vector.load %arg2[%c0_2, %c0_3, %c0_4] : memref<1x16x8xbf16, #tpu.memory_space<vmem>>, vector<1x16x8xbf16>
    %3 = vector.shape_cast %2 : vector<1x16x8xbf16> to vector<16x8xbf16>
    %cst = arith.constant dense<0.000000e+00> : vector<16x256xf32>
    %4 = tpu.matmul %3, %1, %cst {dimension_numbers = #tpu.dot_dimension_numbers<[1], [0], [0], [1], [0, 0, 1, 1], [], []>} : vector<16x8xbf16>, vector<8x256xbf16>, vector<16x256xf32> -> vector<16x256xf32>
    %c0_5 = arith.constant 0 : index
    %c0_6 = arith.constant 0 : index
    %c0_7 = arith.constant 0 : index
    %5 = vector.load %arg3[%c0_5, %c0_6, %c0_7] : memref<1x8x256xbf16, #tpu.memory_space<vmem>>, vector<1x8x256xbf16>
    %6 = vector.shape_cast %5 : vector<1x8x256xbf16> to vector<8x256xbf16>
    %7 = arith.extf %6 : vector<8x256xbf16> to vector<8x256xf32>
    %c0_8 = arith.constant 0 : index
    %c0_9 = arith.constant 0 : index
    %8 = vector.load %arg4[%c0_8, %c0_9] : memref<8x1xf32, #tpu.memory_space<vmem>>, vector<8x1xf32>
    %9 = vector.broadcast %8 : vector<8x1xf32> to vector<8x256xf32>
    %10 = arith.mulf %7, %9 : vector<8x256xf32>
    %c0_10 = arith.constant 0 : index
    %c0_11 = arith.constant 0 : index
    %11 = vector.load %arg5[%c0_10, %c0_11] : memref<8x1xf32, #tpu.memory_space<vmem>>, vector<8x1xf32>
    %12 = vector.broadcast %11 : vector<8x1xf32> to vector<8x256xf32>
    %13 = arith.addf %10, %12 : vector<8x256xf32>
    %cst_12 = arith.constant 0.000000e+00 : f32
    %14 = vector.broadcast %cst_12 : f32 to vector<8x256xf32>
    %15 = arith.subf %14, %13 : vector<8x256xf32>
    %16 = math.exp %15 : vector<8x256xf32>
    %cst_13 = arith.constant 1.000000e+00 : f32
    %17 = vector.broadcast %cst_13 : f32 to vector<8x256xf32>
    %18 = arith.addf %17, %16 : vector<8x256xf32>
    %19 = tpu.reciprocal %18 {approx = true} : vector<8x256xf32> -> vector<8x256xf32>
    %20 = arith.mulf %13, %19 : vector<8x256xf32>
    %21 = arith.truncf %20 : vector<8x256xf32> to vector<8x256xbf16>
    %c0_14 = arith.constant 0 : index
    %c0_15 = arith.constant 0 : index
    %c0_16 = arith.constant 0 : index
    %22 = vector.load %arg6[%c0_14, %c0_15, %c0_16] : memref<1x16x8xbf16, #tpu.memory_space<vmem>>, vector<1x16x8xbf16>
    %23 = vector.shape_cast %22 : vector<1x16x8xbf16> to vector<16x8xbf16>
    %cst_17 = arith.constant dense<0.000000e+00> : vector<16x256xf32>
    %24 = tpu.matmul %23, %21, %cst_17 {dimension_numbers = #tpu.dot_dimension_numbers<[1], [0], [0], [1], [0, 0, 1, 1], [], []>} : vector<16x8xbf16>, vector<8x256xbf16>, vector<16x256xf32> -> vector<16x256xf32>
    %25 = arith.addf %4, %24 : vector<16x256xf32>
    %26 = arith.truncf %25 : vector<16x256xf32> to vector<16x256xbf16>
    %c0_18 = arith.constant 0 : index
    %c0_19 = arith.constant 0 : index
    %c0_20 = arith.constant 0 : index
    %27 = vector.load %arg7[%c0_18, %c0_19, %c0_20] : memref<1x16x256xbf16, #tpu.memory_space<vmem>>, vector<1x16x256xbf16>
    %28 = vector.shape_cast %27 : vector<1x16x256xbf16> to vector<16x256xbf16>
    %29 = vector.shape_cast %26 : vector<16x256xbf16> to vector<1x16x256xbf16>
    tpu.vector_store %arg7[%c0_18, %c0_19, %c0_20], %29 {strides = array<i32>} : memref<1x16x256xbf16, #tpu.memory_space<vmem>>, vector<1x16x256xbf16>,
    %cst_21 = arith.constant dense<0.000000e+00> : vector<16xf32>
    %30 = vector.multi_reduction <add>, %25, %cst_21 [1] : vector<16x256xf32> to vector<16xf32>
    %31 = vector.shape_cast %30 : vector<16xf32> to vector<16x1xf32>
    %cst_22 = arith.constant 3.906250e-03 : f32
    %32 = vector.broadcast %cst_22 : f32 to vector<16x1xf32>
    %33 = arith.mulf %31, %32 : vector<16x1xf32>
    %34 = vector.broadcast %33 : vector<16x1xf32> to vector<16x256xf32>
    %35 = arith.subf %25, %34 : vector<16x256xf32>
    %36 = arith.mulf %35, %35 : vector<16x256xf32>
    %cst_23 = arith.constant dense<0.000000e+00> : vector<16xf32>
    %37 = vector.multi_reduction <add>, %36, %cst_23 [1] : vector<16x256xf32> to vector<16xf32>
    %38 = vector.shape_cast %37 : vector<16xf32> to vector<16x1xf32>
    %39 = tpu.concatenate %31, %38 in 1 : vector<16x1xf32>, vector<16x1xf32> -> vector<16x2xf32>
    %c0_24 = arith.constant 0 : index
    %c0_25 = arith.constant 0 : index
    %c0_26 = arith.constant 0 : index
    %40 = vector.load %arg8[%c0_24, %c0_25, %c0_26] : memref<1x16x2xf32, #tpu.memory_space<vmem>>, vector<1x16x2xf32>
    %41 = vector.shape_cast %40 : vector<1x16x2xf32> to vector<16x2xf32>
    %42 = vector.shape_cast %39 : vector<16x2xf32> to vector<1x16x2xf32>
    tpu.vector_store %arg8[%c0_24, %c0_25, %c0_26], %42 {strides = array<i32>} : memref<1x16x2xf32, #tpu.memory_space<vmem>>, vector<1x16x2xf32>,
    return
  }
  func.func @transform_0(%arg0: i32) -> (i32, i32, i32) {
    %c0_i32 = arith.constant 0 : i32
    %c0_i32_0 = arith.constant 0 : i32
    %c0_i32_1 = arith.constant 0 : i32
    return %arg0, %c0_i32, %c0_i32_0 : i32, i32, i32
  }
  func.func @transform_1(%arg0: i32) -> (i32, i32, i32) {
    %c0_i32 = arith.constant 0 : i32
    %c0_i32_0 = arith.constant 0 : i32
    %c0_i32_1 = arith.constant 0 : i32
    %c0_i32_2 = arith.constant 0 : i32
    return %c0_i32, %c0_i32_0, %c0_i32_1 : i32, i32, i32
  }
  func.func @transform_2(%arg0: i32) -> (i32, i32, i32) {
    %c1_i32 = arith.constant 1 : i32
    %c0_i32 = arith.constant 0 : i32
    %c0_i32_0 = arith.constant 0 : i32
    return %arg0, %c1_i32, %c0_i32 : i32, i32, i32
  }
  func.func @transform_3(%arg0: i32) -> (i32, i32) {
    %c0_i32 = arith.constant 0 : i32
    %c0_i32_0 = arith.constant 0 : i32
    %c0_i32_1 = arith.constant 0 : i32
    return %c0_i32, %c0_i32_0 : i32, i32
  }
  func.func @transform_4(%arg0: i32) -> (i32, i32) {
    %c0_i32 = arith.constant 0 : i32
    %c0_i32_0 = arith.constant 0 : i32
    %c0_i32_1 = arith.constant 0 : i32
    return %c0_i32, %c0_i32_0 : i32, i32
  }
  func.func @transform_5(%arg0: i32) -> (i32, i32, i32) {
    %c0_i32 = arith.constant 0 : i32
    %c0_i32_0 = arith.constant 0 : i32
    %c0_i32_1 = arith.constant 0 : i32
    %c0_i32_2 = arith.constant 0 : i32
    return %c0_i32, %c0_i32_0, %c0_i32_1 : i32, i32, i32
  }
  func.func @transform_6(%arg0: i32) -> (i32, i32, i32) {
    %c0_i32 = arith.constant 0 : i32
    %c0_i32_0 = arith.constant 0 : i32
    %c0_i32_1 = arith.constant 0 : i32
    return %arg0, %c0_i32, %c0_i32_0 : i32, i32, i32
  }
  func.func @transform_7(%arg0: i32) -> (i32, i32, i32) {
    %c0_i32 = arith.constant 0 : i32
    %c0_i32_0 = arith.constant 0 : i32
    %c0_i32_1 = arith.constant 0 : i32
    return %arg0, %c0_i32, %c0_i32_0 : i32, i32, i32
  }
}

module attributes {stable_mosaic.version = 11 : i64} {
  func.func @_bn_silu_kernel(%arg0: i32, %arg1: memref<1x16x256xbf16, #tpu.memory_space<vmem>>, %arg2: memref<16x1xf32, #tpu.memory_space<vmem>>, %arg3: memref<16x1xf32, #tpu.memory_space<vmem>>, %arg4: memref<1x16x256xf32, #tpu.memory_space<vmem>>) attributes {dimension_semantics = [#tpu.dimension_semantics<parallel>], iteration_bounds = array<i64: 2>, scalar_prefetch = 0 : i64, scratch_operands = 0 : i64, tpu.core_type = #tpu.core_type<tc>, window_params = [{transform_indices = @transform_0, window_bounds = array<i64: 1, 16, 256>}, {pipeline_mode = #tpu.pipeline_mode<synchronous>, transform_indices = @transform_1, window_bounds = array<i64: 16, 1>}, {pipeline_mode = #tpu.pipeline_mode<synchronous>, transform_indices = @transform_2, window_bounds = array<i64: 16, 1>}, {transform_indices = @transform_3, window_bounds = array<i64: 1, 16, 256>}]} {
    %c0 = arith.constant 0 : index
    %c0_0 = arith.constant 0 : index
    %c0_1 = arith.constant 0 : index
    %0 = vector.load %arg1[%c0, %c0_0, %c0_1] : memref<1x16x256xbf16, #tpu.memory_space<vmem>>, vector<1x16x256xbf16>
    %1 = vector.shape_cast %0 : vector<1x16x256xbf16> to vector<16x256xbf16>
    %2 = arith.extf %1 : vector<16x256xbf16> to vector<16x256xf32>
    %c0_2 = arith.constant 0 : index
    %c0_3 = arith.constant 0 : index
    %3 = vector.load %arg2[%c0_2, %c0_3] : memref<16x1xf32, #tpu.memory_space<vmem>>, vector<16x1xf32>
    %4 = vector.broadcast %3 : vector<16x1xf32> to vector<16x256xf32>
    %5 = arith.mulf %2, %4 : vector<16x256xf32>
    %c0_4 = arith.constant 0 : index
    %c0_5 = arith.constant 0 : index
    %6 = vector.load %arg3[%c0_4, %c0_5] : memref<16x1xf32, #tpu.memory_space<vmem>>, vector<16x1xf32>
    %7 = vector.broadcast %6 : vector<16x1xf32> to vector<16x256xf32>
    %8 = arith.addf %5, %7 : vector<16x256xf32>
    %cst = arith.constant 0.000000e+00 : f32
    %9 = vector.broadcast %cst : f32 to vector<16x256xf32>
    %10 = arith.subf %9, %8 : vector<16x256xf32>
    %11 = math.exp %10 : vector<16x256xf32>
    %cst_6 = arith.constant 1.000000e+00 : f32
    %12 = vector.broadcast %cst_6 : f32 to vector<16x256xf32>
    %13 = arith.addf %12, %11 : vector<16x256xf32>
    %14 = tpu.reciprocal %13 {approx = true} : vector<16x256xf32> -> vector<16x256xf32>
    %15 = arith.mulf %8, %14 : vector<16x256xf32>
    %c0_7 = arith.constant 0 : index
    %c0_8 = arith.constant 0 : index
    %c0_9 = arith.constant 0 : index
    %16 = vector.load %arg4[%c0_7, %c0_8, %c0_9] : memref<1x16x256xf32, #tpu.memory_space<vmem>>, vector<1x16x256xf32>
    %17 = vector.shape_cast %16 : vector<1x16x256xf32> to vector<16x256xf32>
    %18 = vector.shape_cast %15 : vector<16x256xf32> to vector<1x16x256xf32>
    tpu.vector_store %arg4[%c0_7, %c0_8, %c0_9], %18 {strides = array<i32>} : memref<1x16x256xf32, #tpu.memory_space<vmem>>, vector<1x16x256xf32>,
    return
  }
  func.func @transform_0(%arg0: i32) -> (i32, i32, i32) {
    %c0_i32 = arith.constant 0 : i32
    %c0_i32_0 = arith.constant 0 : i32
    %c0_i32_1 = arith.constant 0 : i32
    return %arg0, %c0_i32, %c0_i32_0 : i32, i32, i32
  }
  func.func @transform_1(%arg0: i32) -> (i32, i32) {
    %c0_i32 = arith.constant 0 : i32
    %c0_i32_0 = arith.constant 0 : i32
    %c0_i32_1 = arith.constant 0 : i32
    return %c0_i32, %c0_i32_0 : i32, i32
  }
  func.func @transform_2(%arg0: i32) -> (i32, i32) {
    %c0_i32 = arith.constant 0 : i32
    %c0_i32_0 = arith.constant 0 : i32
    %c0_i32_1 = arith.constant 0 : i32
    return %c0_i32, %c0_i32_0 : i32, i32
  }
  func.func @transform_3(%arg0: i32) -> (i32, i32, i32) {
    %c0_i32 = arith.constant 0 : i32
    %c0_i32_0 = arith.constant 0 : i32
    %c0_i32_1 = arith.constant 0 : i32
    return %arg0, %c0_i32, %c0_i32_0 : i32, i32, i32
  }
}

</mosaic_0001>

<llo_original>
// kernel: c3_block.6
$region0: #{c3_block.6}
  #allocation0 [shape = 'u32[]', space=smem, size = 0x4, offset = 0x4, fixed_abs, tag = 'smem constant byte address 0x4 - core index']
  #allocation1 [shape = 'u32[144,128]{1,0:T(1,128)}', space=vmem, size = 0x12000, scoped, tag = 'internal scratch']
  %s0 = inlined_call_operand.vmem [shape: bf16[2,8,256], index: 0, kind: input, shape index: {}]
  %s1 = inlined_call_operand.vmem [shape: bf16[1,16,8], index: 1, kind: input, shape index: {}]
  %s2 = inlined_call_operand.vmem [shape: bf16[2,16,256], index: 2, kind: output, shape index: {0}]
  %s3 = inlined_call_operand.vmem [shape: f32[2,16,2], index: 3, kind: output, shape index: {1}]
  %4 = xla_tuple %s2, %s3
  %s5 = sld [smem:[#allocation0]]
  $region49: #{c3_block.6} parent=0
    _
  %s7 = ssub.s32 1, %s5
  %s8 = scalar_select 0, %s7, %s5
  loop: start=0, step=1, limit=4
  $region2: #{c3_block.6} parent=0 // loop_pre_header
    _
  $region3: #{c3_block.6} parent=0 // loop_header
    %s10 = sphi 0, %s14
    %p11 = scmp.ge.s32.totalorder %s10, 4
    %s20 = sphi 0, %s22
    %s23 = sphi 0, %s20
    %s24 = sphi 0, %s23
    %s40 = sphi 0, %s24
    %s44 = sphi 0, %s44
    %s46 = sphi 0, %s44
    %s47 = sphi 0, %s46
    %s61 = sphi 0, %s47
    %s67 = sphi 0, %s69
    %s70 = sphi 0, %s67
    %s71 = sphi 0, %s70
    %s87 = sphi 0, %s71
    %s93 = sphi 0, %s95
    %s96 = sphi 0, %s93
    %s97 = sphi 0, %s96
    %s113 = sphi 0, %s97
  $region4: #{c3_block.6} parent=0 // loop_header_branch
    %13 = sbr.rel (%p11) target = $region8
  $region5: #{c3_block.6} parent=0 // loop_body
    %s15 = ssub.s32 %s10, 1
    %s16 = ssub.s32 %s10, 2
    %s17 = sadd.s32 %s10, 1
    %s18 = ssub.s32 %s10, %s17
    %p19 = scmp.eq.s32.totalorder %s18, 0
    %s21 = sadd.s32 %s20, 1
    %s22 = scalar_select %p19, %s20, %s21
    %p25 = pneg %p19
    %p26 = scmp.eq.s32.totalorder %s10, 1
    %p27 = por %p25, %p26
    %p28 = scmp.ne.s32.totalorder %s20, %s23
    %p29 = scmp.eq.s32.totalorder %s10, 0
    %p30 = por %p28, %p29
    %p31 = scmp.ne.s32.totalorder %s20, %s23
    %p32 = scmp.eq.s32.totalorder %s15, 1
    %p33 = por %p31, %p32
    %p34 = scmp.ne.s32.totalorder %s23, %s24
    %p35 = scmp.eq.s32.totalorder %s15, 0
    %p36 = por %p34, %p35
    %p37 = scmp.ne.s32.totalorder %s23, %s24
    %p38 = scmp.eq.s32.totalorder %s16, 1
    %p39 = por %p37, %p38
    %p41 = scmp.ne.s32.totalorder %s24, %s40
    %p42 = scmp.eq.s32.totalorder %s16, 0
    %p43 = por %p41, %p42
    %s45 = sadd.s32 %s44, 1
    %p48 = scmp.eq.s32.totalorder %s10, 1
    %p49 = scmp.ne.s32.totalorder %s44, %s46
    %p50 = scmp.eq.s32.totalorder %s10, 0
    %p51 = por %p49, %p50
    %p52 = scmp.ne.s32.totalorder %s44, %s46
    %p53 = scmp.eq.s32.totalorder %s15, 1
    %p54 = por %p52, %p53
    %p55 = scmp.ne.s32.totalorder %s46, %s47
    %p56 = scmp.eq.s32.totalorder %s15, 0
    %p57 = por %p55, %p56
    %p58 = scmp.ne.s32.totalorder %s46, %s47
    %p59 = scmp.eq.s32.totalorder %s16, 1
    %p60 = por %p58, %p59
    %p62 = scmp.ne.s32.totalorder %s47, %s61
    %p63 = scmp.eq.s32.totalorder %s16, 0
    %p64 = por %p62, %p63
    %s65 = ssub.s32 %s10, %s17
    %p66 = scmp.eq.s32.totalorder %s65, 0
    %s68 = sadd.s32 %s67, 1
    %s69 = scalar_select %p66, %s67, %s68
    %p72 = pneg %p66
    %p73 = scmp.eq.s32.totalorder %s10, 1
    %p74 = por %p72, %p73
    %p75 = scmp.ne.s32.totalorder %s67, %s70
    %p76 = scmp.eq.s32.totalorder %s10, 0
    %p77 = por %p75, %p76
    %p78 = scmp.ne.s32.totalorder %s67, %s70
    %p79 = scmp.eq.s32.totalorder %s15, 1
    %p80 = por %p78, %p79
    %p81 = scmp.ne.s32.totalorder %s70, %s71
    %p82 = scmp.eq.s32.totalorder %s15, 0
    %p83 = por %p81, %p82
    %p84 = scmp.ne.s32.totalorder %s70, %s71
    %p85 = scmp.eq.s32.totalorder %s16, 1
    %p86 = por %p84, %p85
    %p88 = scmp.ne.s32.totalorder %s71, %s87
    %p89 = scmp.eq.s32.totalorder %s16, 0
    %p90 = por %p88, %p89
    %s91 = ssub.s32 %s10, %s17
    %p92 = scmp.eq.s32.totalorder %s91, 0
    %s94 = sadd.s32 %s93, 1
    %s95 = scalar_select %p92, %s93, %s94
    %p98 = pneg %p92
    %p99 = scmp.eq.s32.totalorder %s10, 1
    %p100 = por %p98, %p99
    %p101 = scmp.ne.s32.totalorder %s93, %s96
    %p102 = scmp.eq.s32.totalorder %s10, 0
    %p103 = por %p101, %p102
    %p104 = scmp.ne.s32.totalorder %s93, %s96
    %p105 = scmp.eq.s32.totalorder %s15, 1
    %p106 = por %p104, %p105
    %p107 = scmp.ne.s32.totalorder %s96, %s97
    %p108 = scmp.eq.s32.totalorder %s15, 0
    %p109 = por %p107, %p108
    %p110 = scmp.ne.s32.totalorder %s96, %s97
    %p111 = scmp.eq.s32.totalorder %s16, 1
    %p112 = por %p110, %p111
    %p114 = scmp.ne.s32.totalorder %s97, %s113
    %p115 = scmp.eq.s32.totalorder %s16, 0
    %p116 = por %p114, %p115
    %p117 = scmp.le.s32.totalorder 1, %s10
    %p118 = scmp.lt.s32.totalorder %s10, 3
    %p119 = pnand %p117, %p118
    %p120 = pneg %p119
    // Predicated region
    $region9: #{c3_block.6} parent=5 // pred_check
      _
    $region10: #{c3_block.6} parent=5 // pred_check_branch
      %122 = sbr.rel (%p119) target = $region12
    $region11: #{c3_block.6} parent=5 // pred_region
      %s123 = ssub.s32 %s10, 1
      // Predicated region
      $region13: #{c3_block.6} parent=11 // pred_check
        %p124 = pneg %p57
      $region14: #{c3_block.6} parent=11 // pred_check_branch
        %126 = sbr.rel (%p124) target = $region16
      $region15: #{c3_block.6} parent=11 // pred_region
        _
      $region16: #{c3_block.6} parent=11 // pred_fallthru
        _
    $region12: #{c3_block.6} parent=5 // pred_fallthru
      _
    %p127 = scmp.lt.s32.totalorder %s10, 2
    // Predicated region
    $region17: #{c3_block.6} parent=5 // pred_check
      %p128 = pneg %p127
    $region18: #{c3_block.6} parent=5 // pred_check_branch
      %130 = sbr.rel (%p128) target = $region20
    $region19: #{c3_block.6} parent=5 // pred_region
      // Predicated region
      $region21: #{c3_block.6} parent=19 // pred_check
        %p131 = pneg %p30
      $region22: #{c3_block.6} parent=19 // pred_check_branch
        %133 = sbr.rel (%p131) target = $region24
      $region23: #{c3_block.6} parent=19 // pred_region
        %p134 = scmp.lt.s32.totalorder %s10, 1
        %s135 = scalar_select %p134, %s10, 1
        %s136 = smul.addr %s135, 2
        %s137 = smul.addr %s136, 4
        %s138 = scalar_lea.vmem %s0, %s137
      $region24: #{c3_block.6} parent=19 // pred_fallthru
        _
    $region20: #{c3_block.6} parent=5 // pred_fallthru
      _
    %p139 = scmp.le.s32.totalorder 1, %s10
    %p140 = scmp.lt.s32.totalorder %s10, 3
    %p141 = pnand %p139, %p140
    %p142 = pneg %p141
    // Predicated region
    $region25: #{c3_block.6} parent=5 // pred_check
      _
    $region26: #{c3_block.6} parent=5 // pred_check_branch
      %144 = sbr.rel (%p141) target = $region28
    $region27: #{c3_block.6} parent=5 // pred_region
      %s145 = ssub.s32 %s10, 1
      %p146 = scmp.lt.s32.totalorder %s15, 1
      %s147 = scalar_select %p146, %s15, 1
      %s148 = smul.addr %s147, 2
      %s149 = smul.addr %s148, 4
      %s150 = scalar_lea.vmem %s0, %s149
      %p151 = pneg %p36
      %p152 = pneg %p33
      %p153 = pneg %p57
      %p154 = pneg %p54
      %p155 = pneg %p83
      %p156 = pneg %p80
      %p157 = scmp.lt.s32.totalorder %s15, 1
      %s158 = scalar_select %p157, %s15, 1
      %s159 = smul.addr %s158, 4
      %s160 = smul.addr %s159, 4
      %s161 = scalar_lea.vmem %s2, %s160
      %p162 = pneg %p109
      %p163 = pneg %p106
      %p164 = scmp.lt.s32.totalorder %s15, 1
      %s165 = scalar_select %p164, %s15, 1
      %s166 = smul.addr %s165, 2
      %s167 = smul.addr %s166, 8
      %s168 = scalar_lea.vmem %s3, %s167
      %p169 = scmp.lt.s32.totalorder %s15, 1
      %s170 = scalar_select %p169, %s15, 1
      %s171 = smul.addr %s170, 2
      %s172 = smul.addr %s171, 4
      %s173 = scalar_lea.vmem %s0, %s172
      %p174 = scmp.lt.s32.totalorder %s15, 1
      %s175 = scalar_select %p174, %s15, 1
      %s176 = smul.addr %s175, 4
      %s177 = smul.addr %s176, 4
      %s178 = scalar_lea.vmem %s2, %s177
      %p179 = scmp.lt.s32.totalorder %s15, 1
      %s180 = scalar_select %p179, %s15, 1
      %s181 = smul.addr %s180, 2
      %s182 = smul.addr %s181, 8
      %s183 = scalar_lea.vmem %s3, %s182
      %v185 = vld [vmem:[%s173] sm:$0xff]
      %v186 = vld [vmem:[%s1] sm:$0xf]
      %v187 = vld [vmem:[%s1 + $0x4] sm:$0xf]
      %v190 = vunpack.c.l.b16 %v186
      %v191 = vunpack.c.l.b16 %v187
      %v192 = vpack.c.b16 %v191, %v190
      %v194 = vunpack.c.l.b16 %v185
      %v195 = vunpack.c.h.b16 %v185
      %v196 = vpack.c.b16 %v194, %v194
      %v197 = vpack.c.b16 %v195, %v195
      %vm198 = vcmask 64512
      %v200 = vsel %vm198, %v192, 0
      %vm202 = vcmask 1043456
      %v204 = vsel %vm202, %v196, 0
      %v207 = vsel %vm202, %v197, 0
      %209 = vmatprep.subr.bf16.mxu0 %v207
      %210 = vmatpush1.bf16.msra.mxu0 %v204
      %211 = vmatprep.subr.bf16.mxu0 0
      %212 = vmatpush1.bf16.msra.mxu0 0
      %213 = vmatprep.subr.bf16.mxu0 0
      %214 = vmatpush1.bf16.msra.mxu0 0
      %215 = vmatprep.subr.bf16.mxu0 0
      %216 = vmatpush1.bf16.msra.mxu0 0
      %217 = vmatprep.subr.bf16.mxu0 0
      %218 = vmatpush1.bf16.msra.mxu0 0
      %219 = vmatprep.subr.bf16.mxu0 0
      %220 = vmatpush1.bf16.msra.mxu0 0
      %221 = vmatprep.subr.bf16.mxu0 0
      %222 = vmatpush1.bf16.msra.mxu0 0
      %223 = vmatprep.subr.bf16.mxu0 0
      %224 = vmatpush1.bf16.msra.mxu0 0
      %225 = vmatprep.subr.bf16.mxu0 0
      %226 = vmatpush1.bf16.msra.mxu0 0
      %227 = vmatprep.subr.bf16.mxu0 0
      %228 = vmatpush1.bf16.msra.mxu0 0
      %229 = vmatprep.subr.bf16.mxu0 0
      %230 = vmatpush1.bf16.msra.mxu0 0
      %231 = vmatprep.subr.bf16.mxu0 0
      %232 = vmatpush1.bf16.msra.mxu0 0
      %233 = vmatprep.subr.bf16.mxu0 0
      %234 = vmatpush1.bf16.msra.mxu0 0
      %235 = vmatprep.subr.bf16.mxu0 0
      %236 = vmatpush1.bf16.msra.mxu0 0
      %237 = vmatprep.subr.bf16.mxu0 0
      %238 = vmatpush1.bf16.msra.mxu0 0
      %239 = vmatprep.subr.bf16.mxu0 0
      %240 = vmatpush1.bf16.msra.mxu0 0
      %241 = vmatprep.mubr.bf16.mxu0 0
      %242 = vmatmul.mubr.bf16.gmra.mrb[0].mxu0 %v200
      %v243 = vpop.f32.mrb[0].mxu0
      %v244 = vadd.f32 0.0, %v243
      %v245 = vpop.f32.mrb[0].mxu0
      %v246 = vadd.f32 0.0, %v245
      %v247 = vpop.f32.mrb[0].mxu0
      %v248 = vadd.f32 0.0, %v247
      %v249 = vpop.f32.mrb[0].mxu0
      %v250 = vadd.f32 0.0, %v249
      %251 = vdwg.mxu0
      %v252 = vpack.c.bf16 %v248, %v244
      %v253 = vpack.c.bf16 %v250, %v246
      %v256 = vunpack.c.l.b16 %v252
      %v257 = vunpack.c.l.b16 %v253
      %v258 = vunpack.c.h.b16 %v252
      %v259 = vunpack.c.h.b16 %v253
      %v260 = vpack.c.b16 %v257, %v256
      %v261 = vpack.c.b16 %v259, %v258
      %264 = vst [vmem:[%s178] sm:$0xff] %v260
      %265 = vst [vmem:[%s178 + $0x8] sm:$0xff] %v261
      %v266 = vadd.f32 %v244, %v246
      %267 = vadd.xlane.f32.xlu0 %v266
      %v268 = vpop.xlane.xlu0 %267
      %v269 = vadd.f32 %v248, %v250
      %270 = vadd.xlane.f32.xlu0 %v269
      %v271 = vpop.xlane.xlu0 %270
      %v272 = vmul.f32 %v268, 0.00390625
      %v273 = vmul.f32 %v271, 0.00390625
      %v274 = vsub.f32 %v244, %v272
      %v275 = vsub.f32 %v246, %v272
      %v276 = vsub.f32 %v248, %v273
      %v277 = vsub.f32 %v250, %v273
      %v278 = vmul.f32 %v274, %v274
      %v279 = vmul.f32 %v275, %v275
      %v280 = vmul.f32 %v276, %v276
      %v281 = vmul.f32 %v277, %v277
      %v282 = vadd.f32 %v278, %v279
      %283 = vadd.xlane.f32.xlu0 %v282
      %v284 = vpop.xlane.xlu0 %283
      %v285 = vadd.f32 %v280, %v281
      %286 = vadd.xlane.f32.xlu0 %v285
      %v287 = vpop.xlane.xlu0 %286
      %vm288 = vcmask 7168
      %v289 = vsel %vm288, %v268, %v284
      %v290 = vsel %vm288, %v271, %v287
      %vm291 = vcmask 15360
      %292 = vst.msk [vmem:[%s183] sm:$0xff] %vm291, %v289
      %293 = vst.msk [vmem:[%s183 + $0x8] sm:$0xff] %vm291, %v290
      %p294 = scmp.lt.s32.totalorder %s15, 1
      %s295 = scalar_select %p294, %s15, 1
      %s296 = smul.addr %s295, 4
      %s297 = smul.addr %s296, 4
      %s298 = scalar_lea.vmem %s2, %s297
      %p299 = scmp.lt.s32.totalorder %s15, 1
      %s300 = scalar_select %p299, %s15, 1
      %s301 = smul.addr %s300, 2
      %s302 = smul.addr %s301, 8
      %s303 = scalar_lea.vmem %s3, %s302
      // Predicated region
      $region29: #{c3_block.6} parent=27 // pred_check
        %p304 = pneg %p80
      $region30: #{c3_block.6} parent=27 // pred_check_branch
        %306 = sbr.rel (%p304) target = $region32
      $region31: #{c3_block.6} parent=27 // pred_region
        _
      $region32: #{c3_block.6} parent=27 // pred_fallthru
        _
      // Predicated region
      $region33: #{c3_block.6} parent=27 // pred_check
        %p307 = pneg %p106
      $region34: #{c3_block.6} parent=27 // pred_check_branch
        %309 = sbr.rel (%p307) target = $region36
      $region35: #{c3_block.6} parent=27 // pred_region
        _
      $region36: #{c3_block.6} parent=27 // pred_fallthru
        _
    $region28: #{c3_block.6} parent=5 // pred_fallthru
      _
    %p310 = scmp.le.s32.totalorder 2, %s10
    // Predicated region
    $region37: #{c3_block.6} parent=5 // pred_check
      %p311 = pneg %p310
    $region38: #{c3_block.6} parent=5 // pred_check_branch
      %313 = sbr.rel (%p311) target = $region40
    $region39: #{c3_block.6} parent=5 // pred_region
      %s314 = ssub.s32 %s10, 2
      // Predicated region
      $region41: #{c3_block.6} parent=39 // pred_check
        %p315 = pneg %p86
      $region42: #{c3_block.6} parent=39 // pred_check_branch
        %317 = sbr.rel (%p315) target = $region44
      $region43: #{c3_block.6} parent=39 // pred_region
        %p318 = scmp.lt.s32.totalorder %s16, 1
        %s319 = scalar_select %p318, %s16, 1
        %s320 = smul.addr %s319, 4
        %s321 = smul.addr %s320, 4
        %s322 = scalar_lea.vmem %s2, %s321
      $region44: #{c3_block.6} parent=39 // pred_fallthru
        _
      // Predicated region
      $region45: #{c3_block.6} parent=39 // pred_check
        %p323 = pneg %p112
      $region46: #{c3_block.6} parent=39 // pred_check_branch
        %325 = sbr.rel (%p323) target = $region48
      $region47: #{c3_block.6} parent=39 // pred_region
        %p326 = scmp.lt.s32.totalorder %s16, 1
        %s327 = scalar_select %p326, %s16, 1
        %s328 = smul.addr %s327, 2
        %s329 = smul.addr %s328, 8
        %s330 = scalar_lea.vmem %s3, %s329
      $region48: #{c3_block.6} parent=39 // pred_fallthru
        _
    $region40: #{c3_block.6} parent=5 // pred_fallthru
      _
  $region6: #{c3_block.6} parent=0 // loop_footer
    %s14 = sadd.s32 1, %s10
  $region7: #{c3_block.6} parent=0 // loop_footer_branch
    %9 = sbr.rel target = $region3
  $region8: #{c3_block.6} parent=0 // loop_exit
    _

// kernel: c3_block.9
$region0: #{c3_block.9}
  #allocation0 [shape = 'u32[]', space=smem, size = 0x4, offset = 0x4, fixed_abs, tag = 'smem constant byte address 0x4 - core index']
  #allocation1 [shape = 'u32[144,128]{1,0:T(1,128)}', space=vmem, size = 0x12000, scoped, tag = 'internal scratch']
  %s0 = inlined_call_operand.vmem [shape: bf16[2,8,256], index: 0, kind: input, shape index: {}]
  %s1 = inlined_call_operand.vmem [shape: f32[8,1], index: 1, kind: input, shape index: {}]
  %s2 = inlined_call_operand.vmem [shape: f32[8,1], index: 2, kind: input, shape index: {}]
  %s3 = inlined_call_operand.vmem [shape: bf16[2,8,256], index: 3, kind: input, shape index: {}]
  %s4 = inlined_call_operand.vmem [shape: f32[8,1], index: 4, kind: input, shape index: {}]
  %s5 = inlined_call_operand.vmem [shape: f32[8,1], index: 5, kind: input, shape index: {}]
  %s6 = inlined_call_operand.vmem [shape: bf16[2,8,256], index: 6, kind: output, shape index: {}]
  %s7 = sld [smem:[#allocation0]]
  $region57: #{c3_block.9} parent=0
    _
  %s9 = ssub.s32 1, %s7
  %s10 = scalar_select 0, %s9, %s7
  loop: start=0, step=1, limit=4
  $region2: #{c3_block.9} parent=0 // loop_pre_header
    _
  $region3: #{c3_block.9} parent=0 // loop_header
    %s12 = sphi 0, %s16
    %p13 = scmp.ge.s32.totalorder %s12, 4
    %s22 = sphi 0, %s24
    %s25 = sphi 0, %s22
    %s26 = sphi 0, %s25
    %s42 = sphi 0, %s26
    %s46 = sphi 0, %s46
    %s48 = sphi 0, %s46
    %s49 = sphi 0, %s48
    %s63 = sphi 0, %s49
    %s67 = sphi 0, %s67
    %s69 = sphi 0, %s67
    %s70 = sphi 0, %s69
    %s84 = sphi 0, %s70
    %s90 = sphi 0, %s92
    %s93 = sphi 0, %s90
    %s94 = sphi 0, %s93
    %s110 = sphi 0, %s94
    %s114 = sphi 0, %s114
    %s116 = sphi 0, %s114
    %s117 = sphi 0, %s116
    %s131 = sphi 0, %s117
    %s135 = sphi 0, %s135
    %s137 = sphi 0, %s135
    %s138 = sphi 0, %s137
    %s152 = sphi 0, %s138
    %s158 = sphi 0, %s160
    %s161 = sphi 0, %s158
    %s162 = sphi 0, %s161
    %s178 = sphi 0, %s162
  $region4: #{c3_block.9} parent=0 // loop_header_branch
    %15 = sbr.rel (%p13) target = $region8
  $region5: #{c3_block.9} parent=0 // loop_body
    %s17 = ssub.s32 %s12, 1
    %s18 = ssub.s32 %s12, 2
    %s19 = sadd.s32 %s12, 1
    %s20 = ssub.s32 %s12, %s19
    %p21 = scmp.eq.s32.totalorder %s20, 0
    %s23 = sadd.s32 %s22, 1
    %s24 = scalar_select %p21, %s22, %s23
    %p27 = pneg %p21
    %p28 = scmp.eq.s32.totalorder %s12, 1
    %p29 = por %p27, %p28
    %p30 = scmp.ne.s32.totalorder %s22, %s25
    %p31 = scmp.eq.s32.totalorder %s12, 0
    %p32 = por %p30, %p31
    %p33 = scmp.ne.s32.totalorder %s22, %s25
    %p34 = scmp.eq.s32.totalorder %s17, 1
    %p35 = por %p33, %p34
    %p36 = scmp.ne.s32.totalorder %s25, %s26
    %p37 = scmp.eq.s32.totalorder %s17, 0
    %p38 = por %p36, %p37
    %p39 = scmp.ne.s32.totalorder %s25, %s26
    %p40 = scmp.eq.s32.totalorder %s18, 1
    %p41 = por %p39, %p40
    %p43 = scmp.ne.s32.totalorder %s26, %s42
    %p44 = scmp.eq.s32.totalorder %s18, 0
    %p45 = por %p43, %p44
    %s47 = sadd.s32 %s46, 1
    %p50 = scmp.eq.s32.totalorder %s12, 1
    %p51 = scmp.ne.s32.totalorder %s46, %s48
    %p52 = scmp.eq.s32.totalorder %s12, 0
    %p53 = por %p51, %p52
    %p54 = scmp.ne.s32.totalorder %s46, %s48
    %p55 = scmp.eq.s32.totalorder %s17, 1
    %p56 = por %p54, %p55
    %p57 = scmp.ne.s32.totalorder %s48, %s49
    %p58 = scmp.eq.s32.totalorder %s17, 0
    %p59 = por %p57, %p58
    %p60 = scmp.ne.s32.totalorder %s48, %s49
    %p61 = scmp.eq.s32.totalorder %s18, 1
    %p62 = por %p60, %p61
    %p64 = scmp.ne.s32.totalorder %s49, %s63
    %p65 = scmp.eq.s32.totalorder %s18, 0
    %p66 = por %p64, %p65
    %s68 = sadd.s32 %s67, 1
    %p71 = scmp.eq.s32.totalorder %s12, 1
    %p72 = scmp.ne.s32.totalorder %s67, %s69
    %p73 = scmp.eq.s32.totalorder %s12, 0
    %p74 = por %p72, %p73
    %p75 = scmp.ne.s32.totalorder %s67, %s69
    %p76 = scmp.eq.s32.totalorder %s17, 1
    %p77 = por %p75, %p76
    %p78 = scmp.ne.s32.totalorder %s69, %s70
    %p79 = scmp.eq.s32.totalorder %s17, 0
    %p80 = por %p78, %p79
    %p81 = scmp.ne.s32.totalorder %s69, %s70
    %p82 = scmp.eq.s32.totalorder %s18, 1
    %p83 = por %p81, %p82
    %p85 = scmp.ne.s32.totalorder %s70, %s84
    %p86 = scmp.eq.s32.totalorder %s18, 0
    %p87 = por %p85, %p86
    %s88 = ssub.s32 %s12, %s19
    %p89 = scmp.eq.s32.totalorder %s88, 0
    %s91 = sadd.s32 %s90, 1
    %s92 = scalar_select %p89, %s90, %s91
    %p95 = pneg %p89
    %p96 = scmp.eq.s32.totalorder %s12, 1
    %p97 = por %p95, %p96
    %p98 = scmp.ne.s32.totalorder %s90, %s93
    %p99 = scmp.eq.s32.totalorder %s12, 0
    %p100 = por %p98, %p99
    %p101 = scmp.ne.s32.totalorder %s90, %s93
    %p102 = scmp.eq.s32.totalorder %s17, 1
    %p103 = por %p101, %p102
    %p104 = scmp.ne.s32.totalorder %s93, %s94
    %p105 = scmp.eq.s32.totalorder %s17, 0
    %p106 = por %p104, %p105
    %p107 = scmp.ne.s32.totalorder %s93, %s94
    %p108 = scmp.eq.s32.totalorder %s18, 1
    %p109 = por %p107, %p108
    %p111 = scmp.ne.s32.totalorder %s94, %s110
    %p112 = scmp.eq.s32.totalorder %s18, 0
    %p113 = por %p111, %p112
    %s115 = sadd.s32 %s114, 1
    %p118 = scmp.eq.s32.totalorder %s12, 1
    %p119 = scmp.ne.s32.totalorder %s114, %s116
    %p120 = scmp.eq.s32.totalorder %s12, 0
    %p121 = por %p119, %p120
    %p122 = scmp.ne.s32.totalorder %s114, %s116
    %p123 = scmp.eq.s32.totalorder %s17, 1
    %p124 = por %p122, %p123
    %p125 = scmp.ne.s32.totalorder %s116, %s117
    %p126 = scmp.eq.s32.totalorder %s17, 0
    %p127 = por %p125, %p126
    %p128 = scmp.ne.s32.totalorder %s116, %s117
    %p129 = scmp.eq.s32.totalorder %s18, 1
    %p130 = por %p128, %p129
    %p132 = scmp.ne.s32.totalorder %s117, %s131
    %p133 = scmp.eq.s32.totalorder %s18, 0
    %p134 = por %p132, %p133
    %s136 = sadd.s32 %s135, 1
    %p139 = scmp.eq.s32.totalorder %s12, 1
    %p140 = scmp.ne.s32.totalorder %s135, %s137
    %p141 = scmp.eq.s32.totalorder %s12, 0
    %p142 = por %p140, %p141
    %p143 = scmp.ne.s32.totalorder %s135, %s137
    %p144 = scmp.eq.s32.totalorder %s17, 1
    %p145 = por %p143, %p144
    %p146 = scmp.ne.s32.totalorder %s137, %s138
    %p147 = scmp.eq.s32.totalorder %s17, 0
    %p148 = por %p146, %p147
    %p149 = scmp.ne.s32.totalorder %s137, %s138
    %p150 = scmp.eq.s32.totalorder %s18, 1
    %p151 = por %p149, %p150
    %p153 = scmp.ne.s32.totalorder %s138, %s152
    %p154 = scmp.eq.s32.totalorder %s18, 0
    %p155 = por %p153, %p154
    %s156 = ssub.s32 %s12, %s19
    %p157 = scmp.eq.s32.totalorder %s156, 0
    %s159 = sadd.s32 %s158, 1
    %s160 = scalar_select %p157, %s158, %s159
    %p163 = pneg %p157
    %p164 = scmp.eq.s32.totalorder %s12, 1
    %p165 = por %p163, %p164
    %p166 = scmp.ne.s32.totalorder %s158, %s161
    %p167 = scmp.eq.s32.totalorder %s12, 0
    %p168 = por %p166, %p167
    %p169 = scmp.ne.s32.totalorder %s158, %s161
    %p170 = scmp.eq.s32.totalorder %s17, 1
    %p171 = por %p169, %p170
    %p172 = scmp.ne.s32.totalorder %s161, %s162
    %p173 = scmp.eq.s32.totalorder %s17, 0
    %p174 = por %p172, %p173
    %p175 = scmp.ne.s32.totalorder %s161, %s162
    %p176 = scmp.eq.s32.totalorder %s18, 1
    %p177 = por %p175, %p176
    %p179 = scmp.ne.s32.totalorder %s162, %s178
    %p180 = scmp.eq.s32.totalorder %s18, 0
    %p181 = por %p179, %p180
    %p182 = scmp.le.s32.totalorder 1, %s12
    %p183 = scmp.lt.s32.totalorder %s12, 3
    %p184 = pnand %p182, %p183
    %p185 = pneg %p184
    // Predicated region
    $region9: #{c3_block.9} parent=5 // pred_check
      _
    $region10: #{c3_block.9} parent=5 // pred_check_branch
      %187 = sbr.rel (%p184) target = $region12
    $region11: #{c3_block.9} parent=5 // pred_region
      %s188 = ssub.s32 %s12, 1
      // Predicated region
      $region13: #{c3_block.9} parent=11 // pred_check
        %p189 = pneg %p59
      $region14: #{c3_block.9} parent=11 // pred_check_branch
        %191 = sbr.rel (%p189) target = $region16
      $region15: #{c3_block.9} parent=11 // pred_region
        _
      $region16: #{c3_block.9} parent=11 // pred_fallthru
        _
      // Predicated region
      $region17: #{c3_block.9} parent=11 // pred_check
        %p192 = pneg %p80
      $region18: #{c3_block.9} parent=11 // pred_check_branch
        %194 = sbr.rel (%p192) target = $region20
      $region19: #{c3_block.9} parent=11 // pred_region
        _
      $region20: #{c3_block.9} parent=11 // pred_fallthru
        _
      // Predicated region
      $region21: #{c3_block.9} parent=11 // pred_check
        %p195 = pneg %p127
      $region22: #{c3_block.9} parent=11 // pred_check_branch
        %197 = sbr.rel (%p195) target = $region24
      $region23: #{c3_block.9} parent=11 // pred_region
        _
      $region24: #{c3_block.9} parent=11 // pred_fallthru
        _
      // Predicated region
      $region25: #{c3_block.9} parent=11 // pred_check
        %p198 = pneg %p148
      $region26: #{c3_block.9} parent=11 // pred_check_branch
        %200 = sbr.rel (%p198) target = $region28
      $region27: #{c3_block.9} parent=11 // pred_region
        _
      $region28: #{c3_block.9} parent=11 // pred_fallthru
        _
    $region12: #{c3_block.9} parent=5 // pred_fallthru
      _
    %p201 = scmp.lt.s32.totalorder %s12, 2
    // Predicated region
    $region29: #{c3_block.9} parent=5 // pred_check
      %p202 = pneg %p201
    $region30: #{c3_block.9} parent=5 // pred_check_branch
      %204 = sbr.rel (%p202) target = $region32
    $region31: #{c3_block.9} parent=5 // pred_region
      // Predicated region
      $region33: #{c3_block.9} parent=31 // pred_check
        %p205 = pneg %p32
      $region34: #{c3_block.9} parent=31 // pred_check_branch
        %207 = sbr.rel (%p205) target = $region36
      $region35: #{c3_block.9} parent=31 // pred_region
        %p208 = scmp.lt.s32.totalorder %s12, 1
        %s209 = scalar_select %p208, %s12, 1
        %s210 = smul.addr %s209, 2
        %s211 = smul.addr %s210, 4
        %s212 = scalar_lea.vmem %s0, %s211
      $region36: #{c3_block.9} parent=31 // pred_fallthru
        _
      // Predicated region
      $region37: #{c3_block.9} parent=31 // pred_check
        %p213 = pneg %p100
      $region38: #{c3_block.9} parent=31 // pred_check_branch
        %215 = sbr.rel (%p213) target = $region40
      $region39: #{c3_block.9} parent=31 // pred_region
        %p216 = scmp.lt.s32.totalorder %s12, 1
        %s217 = scalar_select %p216, %s12, 1
        %s218 = smul.addr %s217, 2
        %s219 = smul.addr %s218, 4
        %s220 = scalar_lea.vmem %s3, %s219
      $region40: #{c3_block.9} parent=31 // pred_fallthru
        _
    $region32: #{c3_block.9} parent=5 // pred_fallthru
      _
    %p221 = scmp.le.s32.totalorder 1, %s12
    %p222 = scmp.lt.s32.totalorder %s12, 3
    %p223 = pnand %p221, %p222
    %p224 = pneg %p223
    // Predicated region
    $region41: #{c3_block.9} parent=5 // pred_check
      _
    $region42: #{c3_block.9} parent=5 // pred_check_branch
      %226 = sbr.rel (%p223) target = $region44
    $region43: #{c3_block.9} parent=5 // pred_region
      %s227 = ssub.s32 %s12, 1
      %p228 = scmp.lt.s32.totalorder %s17, 1
      %s229 = scalar_select %p228, %s17, 1
      %s230 = smul.addr %s229, 2
      %s231 = smul.addr %s230, 4
      %s232 = scalar_lea.vmem %s0, %s231
      %p233 = pneg %p38
      %p234 = pneg %p35
      %p235 = pneg %p59
      %p236 = pneg %p56
      %p237 = pneg %p80
      %p238 = pneg %p77
      %p239 = scmp.lt.s32.totalorder %s17, 1
      %s240 = scalar_select %p239, %s17, 1
      %s241 = smul.addr %s240, 2
      %s242 = smul.addr %s241, 4
      %s243 = scalar_lea.vmem %s3, %s242
      %p244 = pneg %p106
      %p245 = pneg %p103
      %p246 = pneg %p127
      %p247 = pneg %p124
      %p248 = pneg %p148
      %p249 = pneg %p145
      %p250 = pneg %p174
      %p251 = pneg %p171
      %p252 = scmp.lt.s32.totalorder %s17, 1
      %s253 = scalar_select %p252, %s17, 1
      %s254 = smul.addr %s253, 2
      %s255 = smul.addr %s254, 4
      %s256 = scalar_lea.vmem %s6, %s255
      %p257 = scmp.lt.s32.totalorder %s17, 1
      %s258 = scalar_select %p257, %s17, 1
      %s259 = smul.addr %s258, 2
      %s260 = smul.addr %s259, 4
      %s261 = scalar_lea.vmem %s0, %s260
      %p262 = scmp.lt.s32.totalorder %s17, 1
      %s263 = scalar_select %p262, %s17, 1
      %s264 = smul.addr %s263, 2
      %s265 = smul.addr %s264, 4
      %s266 = scalar_lea.vmem %s3, %s265
      %p267 = scmp.lt.s32.totalorder %s17, 1
      %s268 = scalar_select %p267, %s17, 1
      %s269 = smul.addr %s268, 2
      %s270 = smul.addr %s269, 4
      %s271 = scalar_lea.vmem %s6, %s270
      %v272 = vld [vmem:[%s261] sm:$0xff]
      %v273 = vunpack.c.l.bf16 %v272
      %v274 = vunpack.c.h.bf16 %v272
      %v275 = vld [vmem:[%s1] sm:$0xff]
      %277 = vset.pattern.permute.xlu0 0
      %278 = vperm.xlu0 %277, %v275
      %v279 = vpop.permute.xlu0 %278
      %v281 = vmul.f32 %v273, %v279
      %v282 = vmul.f32 %v274, %v279
      %v283 = vld [vmem:[%s2] sm:$0xff]
      %285 = vset.pattern.permute.xlu0 0
      %286 = vperm.xlu0 %285, %v283
      %v287 = vpop.permute.xlu0 %286
      %v289 = vadd.f32 %v281, %v287
      %v290 = vadd.f32 %v282, %v287
      %v291 = vsub.f32 0.0, %v289
      %v292 = vsub.f32 0.0, %v290
      %v293 = vmul.f32 %v291, 1.442695
      %v294 = vpow.pop %v293
      %v295 = vmul.f32 %v292, 1.442695
      %v296 = vpow.pop %v295
      %v297 = vadd.f32 %v294, 1.0
      %v298 = vadd.f32 %v296, 1.0
      %v299 = vrcp.pop %v297
      %v300 = vrcp.pop %v298
      %v301 = vmul.f32 %v289, %v299
      %v302 = vmul.f32 %v290, %v300
      %v303 = vld [vmem:[%s266] sm:$0xff]
      %v304 = vunpack.c.l.bf16 %v303
      %v305 = vunpack.c.h.bf16 %v303
      %v306 = vld [vmem:[%s4] sm:$0xff]
      %308 = vset.pattern.permute.xlu0 0
      %309 = vperm.xlu0 %308, %v306
      %v310 = vpop.permute.xlu0 %309
      %v312 = vmul.f32 %v304, %v310
      %v313 = vmul.f32 %v305, %v310
      %v314 = vld [vmem:[%s5] sm:$0xff]
      %316 = vset.pattern.permute.xlu0 0
      %317 = vperm.xlu0 %316, %v314
      %v318 = vpop.permute.xlu0 %317
      %v320 = vadd.f32 %v312, %v318
      %v321 = vadd.f32 %v313, %v318
      %v322 = vsub.f32 0.0, %v320
      %v323 = vsub.f32 0.0, %v321
      %v324 = vmul.f32 %v322, 1.442695
      %v325 = vpow.pop %v324
      %v326 = vmul.f32 %v323, 1.442695
      %v327 = vpow.pop %v326
      %v328 = vadd.f32 %v325, 1.0
      %v329 = vadd.f32 %v327, 1.0
      %v330 = vrcp.pop %v328
      %v331 = vrcp.pop %v329
      %v332 = vmul.f32 %v320, %v330
      %v333 = vmul.f32 %v321, %v331
      %v334 = vadd.f32 %v301, %v332
      %v335 = vadd.f32 %v302, %v333
      %v336 = vpack.c.bf16 %v334, %v334
      %v337 = vpack.c.bf16 %v335, %v335
      %v340 = vunpack.c.l.b16 %v336
      %v341 = vunpack.c.l.b16 %v337
      %v342 = vpack.c.b16 %v341, %v340
      %344 = vst [vmem:[%s271] sm:$0xff] %v342
      %p345 = scmp.lt.s32.totalorder %s17, 1
      %s346 = scalar_select %p345, %s17, 1
      %s347 = smul.addr %s346, 2
      %s348 = smul.addr %s347, 4
      %s349 = scalar_lea.vmem %s6, %s348
      // Predicated region
      $region45: #{c3_block.9} parent=43 // pred_check
        %p350 = pneg %p171
      $region46: #{c3_block.9} parent=43 // pred_check_branch
        %352 = sbr.rel (%p350) target = $region48
      $region47: #{c3_block.9} parent=43 // pred_region
        _
      $region48: #{c3_block.9} parent=43 // pred_fallthru
        _
    $region44: #{c3_block.9} parent=5 // pred_fallthru
      _
    %p353 = scmp.le.s32.totalorder 2, %s12
    // Predicated region
    $region49: #{c3_block.9} parent=5 // pred_check
      %p354 = pneg %p353
    $region50: #{c3_block.9} parent=5 // pred_check_branch
      %356 = sbr.rel (%p354) target = $region52
    $region51: #{c3_block.9} parent=5 // pred_region
      %s357 = ssub.s32 %s12, 2
      // Predicated region
      $region53: #{c3_block.9} parent=51 // pred_check
        %p358 = pneg %p177
      $region54: #{c3_block.9} parent=51 // pred_check_branch
        %360 = sbr.rel (%p358) target = $region56
      $region55: #{c3_block.9} parent=51 // pred_region
        %p361 = scmp.lt.s32.totalorder %s18, 1
        %s362 = scalar_select %p361, %s18, 1
        %s363 = smul.addr %s362, 2
        %s364 = smul.addr %s363, 4
        %s365 = scalar_lea.vmem %s6, %s364
      $region56: #{c3_block.9} parent=51 // pred_fallthru
        _
    $region52: #{c3_block.9} parent=5 // pred_fallthru
      _
  $region6: #{c3_block.9} parent=0 // loop_footer
    %s16 = sadd.s32 1, %s12
  $region7: #{c3_block.9} parent=0 // loop_footer_branch
    %11 = sbr.rel target = $region3
  $region8: #{c3_block.9} parent=0 // loop_exit
    _

// kernel: c3_block.10
$region0: #{c3_block.10}
  #allocation0 [shape = 'u32[]', space=smem, size = 0x4, offset = 0x4, fixed_abs, tag = 'smem constant byte address 0x4 - core index']
  #allocation1 [shape = 'u32[144,128]{1,0:T(1,128)}', space=vmem, size = 0x12000, scoped, tag = 'internal scratch']
  %s0 = inlined_call_operand.vmem [shape: bf16[2,8,256], index: 0, kind: input, shape index: {}]
  %s1 = inlined_call_operand.vmem [shape: bf16[1,16,8], index: 1, kind: input, shape index: {}]
  %s2 = inlined_call_operand.vmem [shape: bf16[2,16,256], index: 2, kind: input, shape index: {}]
  %s3 = inlined_call_operand.vmem [shape: f32[8,1], index: 3, kind: input, shape index: {}]
  %s4 = inlined_call_operand.vmem [shape: f32[8,1], index: 4, kind: input, shape index: {}]
  %s5 = inlined_call_operand.vmem [shape: bf16[1,16,8], index: 5, kind: input, shape index: {}]
  %s6 = inlined_call_operand.vmem [shape: bf16[2,16,256], index: 6, kind: output, shape index: {0}]
  %s7 = inlined_call_operand.vmem [shape: f32[2,16,2], index: 7, kind: output, shape index: {1}]
  %8 = xla_tuple %s6, %s7
  %s9 = sld [smem:[#allocation0]]
  $region65: #{c3_block.10} parent=0
    _
  %s11 = ssub.s32 1, %s9
  %s12 = scalar_select 0, %s11, %s9
  loop: start=0, step=1, limit=4
  $region2: #{c3_block.10} parent=0 // loop_pre_header
    _
  $region3: #{c3_block.10} parent=0 // loop_header
    %s14 = sphi 0, %s18
    %p15 = scmp.ge.s32.totalorder %s14, 4
    %s24 = sphi 0, %s26
    %s27 = sphi 0, %s24
    %s28 = sphi 0, %s27
    %s44 = sphi 0, %s28
    %s48 = sphi 0, %s48
    %s50 = sphi 0, %s48
    %s51 = sphi 0, %s50
    %s65 = sphi 0, %s51
    %s71 = sphi 0, %s73
    %s74 = sphi 0, %s71
    %s75 = sphi 0, %s74
    %s91 = sphi 0, %s75
    %s95 = sphi 0, %s95
    %s97 = sphi 0, %s95
    %s98 = sphi 0, %s97
    %s112 = sphi 0, %s98
    %s116 = sphi 0, %s116
    %s118 = sphi 0, %s116
    %s119 = sphi 0, %s118
    %s133 = sphi 0, %s119
    %s137 = sphi 0, %s137
    %s139 = sphi 0, %s137
    %s140 = sphi 0, %s139
    %s154 = sphi 0, %s140
    %s160 = sphi 0, %s162
    %s163 = sphi 0, %s160
    %s164 = sphi 0, %s163
    %s180 = sphi 0, %s164
    %s186 = sphi 0, %s188
    %s189 = sphi 0, %s186
    %s190 = sphi 0, %s189
    %s206 = sphi 0, %s190
  $region4: #{c3_block.10} parent=0 // loop_header_branch
    %17 = sbr.rel (%p15) target = $region8
  $region5: #{c3_block.10} parent=0 // loop_body
    %s19 = ssub.s32 %s14, 1
    %s20 = ssub.s32 %s14, 2
    %s21 = sadd.s32 %s14, 1
    %s22 = ssub.s32 %s14, %s21
    %p23 = scmp.eq.s32.totalorder %s22, 0
    %s25 = sadd.s32 %s24, 1
    %s26 = scalar_select %p23, %s24, %s25
    %p29 = pneg %p23
    %p30 = scmp.eq.s32.totalorder %s14, 1
    %p31 = por %p29, %p30
    %p32 = scmp.ne.s32.totalorder %s24, %s27
    %p33 = scmp.eq.s32.totalorder %s14, 0
    %p34 = por %p32, %p33
    %p35 = scmp.ne.s32.totalorder %s24, %s27
    %p36 = scmp.eq.s32.totalorder %s19, 1
    %p37 = por %p35, %p36
    %p38 = scmp.ne.s32.totalorder %s27, %s28
    %p39 = scmp.eq.s32.totalorder %s19, 0
    %p40 = por %p38, %p39
    %p41 = scmp.ne.s32.totalorder %s27, %s28
    %p42 = scmp.eq.s32.totalorder %s20, 1
    %p43 = por %p41, %p42
    %p45 = scmp.ne.s32.totalorder %s28, %s44
    %p46 = scmp.eq.s32.totalorder %s20, 0
    %p47 = por %p45, %p46
    %s49 = sadd.s32 %s48, 1
    %p52 = scmp.eq.s32.totalorder %s14, 1
    %p53 = scmp.ne.s32.totalorder %s48, %s50
    %p54 = scmp.eq.s32.totalorder %s14, 0
    %p55 = por %p53, %p54
    %p56 = scmp.ne.s32.totalorder %s48, %s50
    %p57 = scmp.eq.s32.totalorder %s19, 1
    %p58 = por %p56, %p57
    %p59 = scmp.ne.s32.totalorder %s50, %s51
    %p60 = scmp.eq.s32.totalorder %s19, 0
    %p61 = por %p59, %p60
    %p62 = scmp.ne.s32.totalorder %s50, %s51
    %p63 = scmp.eq.s32.totalorder %s20, 1
    %p64 = por %p62, %p63
    %p66 = scmp.ne.s32.totalorder %s51, %s65
    %p67 = scmp.eq.s32.totalorder %s20, 0
    %p68 = por %p66, %p67
    %s69 = ssub.s32 %s14, %s21
    %p70 = scmp.eq.s32.totalorder %s69, 0
    %s72 = sadd.s32 %s71, 1
    %s73 = scalar_select %p70, %s71, %s72
    %p76 = pneg %p70
    %p77 = scmp.eq.s32.totalorder %s14, 1
    %p78 = por %p76, %p77
    %p79 = scmp.ne.s32.totalorder %s71, %s74
    %p80 = scmp.eq.s32.totalorder %s14, 0
    %p81 = por %p79, %p80
    %p82 = scmp.ne.s32.totalorder %s71, %s74
    %p83 = scmp.eq.s32.totalorder %s19, 1
    %p84 = por %p82, %p83
    %p85 = scmp.ne.s32.totalorder %s74, %s75
    %p86 = scmp.eq.s32.totalorder %s19, 0
    %p87 = por %p85, %p86
    %p88 = scmp.ne.s32.totalorder %s74, %s75
    %p89 = scmp.eq.s32.totalorder %s20, 1
    %p90 = por %p88, %p89
    %p92 = scmp.ne.s32.totalorder %s75, %s91
    %p93 = scmp.eq.s32.totalorder %s20, 0
    %p94 = por %p92, %p93
    %s96 = sadd.s32 %s95, 1
    %p99 = scmp.eq.s32.totalorder %s14, 1
    %p100 = scmp.ne.s32.totalorder %s95, %s97
    %p101 = scmp.eq.s32.totalorder %s14, 0
    %p102 = por %p100, %p101
    %p103 = scmp.ne.s32.totalorder %s95, %s97
    %p104 = scmp.eq.s32.totalorder %s19, 1
    %p105 = por %p103, %p104
    %p106 = scmp.ne.s32.totalorder %s97, %s98
    %p107 = scmp.eq.s32.totalorder %s19, 0
    %p108 = por %p106, %p107
    %p109 = scmp.ne.s32.totalorder %s97, %s98
    %p110 = scmp.eq.s32.totalorder %s20, 1
    %p111 = por %p109, %p110
    %p113 = scmp.ne.s32.totalorder %s98, %s112
    %p114 = scmp.eq.s32.totalorder %s20, 0
    %p115 = por %p113, %p114
    %s117 = sadd.s32 %s116, 1
    %p120 = scmp.eq.s32.totalorder %s14, 1
    %p121 = scmp.ne.s32.totalorder %s116, %s118
    %p122 = scmp.eq.s32.totalorder %s14, 0
    %p123 = por %p121, %p122
    %p124 = scmp.ne.s32.totalorder %s116, %s118
    %p125 = scmp.eq.s32.totalorder %s19, 1
    %p126 = por %p124, %p125
    %p127 = scmp.ne.s32.totalorder %s118, %s119
    %p128 = scmp.eq.s32.totalorder %s19, 0
    %p129 = por %p127, %p128
    %p130 = scmp.ne.s32.totalorder %s118, %s119
    %p131 = scmp.eq.s32.totalorder %s20, 1
    %p132 = por %p130, %p131
    %p134 = scmp.ne.s32.totalorder %s119, %s133
    %p135 = scmp.eq.s32.totalorder %s20, 0
    %p136 = por %p134, %p135
    %s138 = sadd.s32 %s137, 1
    %p141 = scmp.eq.s32.totalorder %s14, 1
    %p142 = scmp.ne.s32.totalorder %s137, %s139
    %p143 = scmp.eq.s32.totalorder %s14, 0
    %p144 = por %p142, %p143
    %p145 = scmp.ne.s32.totalorder %s137, %s139
    %p146 = scmp.eq.s32.totalorder %s19, 1
    %p147 = por %p145, %p146
    %p148 = scmp.ne.s32.totalorder %s139, %s140
    %p149 = scmp.eq.s32.totalorder %s19, 0
    %p150 = por %p148, %p149
    %p151 = scmp.ne.s32.totalorder %s139, %s140
    %p152 = scmp.eq.s32.totalorder %s20, 1
    %p153 = por %p151, %p152
    %p155 = scmp.ne.s32.totalorder %s140, %s154
    %p156 = scmp.eq.s32.totalorder %s20, 0
    %p157 = por %p155, %p156
    %s158 = ssub.s32 %s14, %s21
    %p159 = scmp.eq.s32.totalorder %s158, 0
    %s161 = sadd.s32 %s160, 1
    %s162 = scalar_select %p159, %s160, %s161
    %p165 = pneg %p159
    %p166 = scmp.eq.s32.totalorder %s14, 1
    %p167 = por %p165, %p166
    %p168 = scmp.ne.s32.totalorder %s160, %s163
    %p169 = scmp.eq.s32.totalorder %s14, 0
    %p170 = por %p168, %p169
    %p171 = scmp.ne.s32.totalorder %s160, %s163
    %p172 = scmp.eq.s32.totalorder %s19, 1
    %p173 = por %p171, %p172
    %p174 = scmp.ne.s32.totalorder %s163, %s164
    %p175 = scmp.eq.s32.totalorder %s19, 0
    %p176 = por %p174, %p175
    %p177 = scmp.ne.s32.totalorder %s163, %s164
    %p178 = scmp.eq.s32.totalorder %s20, 1
    %p179 = por %p177, %p178
    %p181 = scmp.ne.s32.totalorder %s164, %s180
    %p182 = scmp.eq.s32.totalorder %s20, 0
    %p183 = por %p181, %p182
    %s184 = ssub.s32 %s14, %s21
    %p185 = scmp.eq.s32.totalorder %s184, 0
    %s187 = sadd.s32 %s186, 1
    %s188 = scalar_select %p185, %s186, %s187
    %p191 = pneg %p185
    %p192 = scmp.eq.s32.totalorder %s14, 1
    %p193 = por %p191, %p192
    %p194 = scmp.ne.s32.totalorder %s186, %s189
    %p195 = scmp.eq.s32.totalorder %s14, 0
    %p196 = por %p194, %p195
    %p197 = scmp.ne.s32.totalorder %s186, %s189
    %p198 = scmp.eq.s32.totalorder %s19, 1
    %p199 = por %p197, %p198
    %p200 = scmp.ne.s32.totalorder %s189, %s190
    %p201 = scmp.eq.s32.totalorder %s19, 0
    %p202 = por %p200, %p201
    %p203 = scmp.ne.s32.totalorder %s189, %s190
    %p204 = scmp.eq.s32.totalorder %s20, 1
    %p205 = por %p203, %p204
    %p207 = scmp.ne.s32.totalorder %s190, %s206
    %p208 = scmp.eq.s32.totalorder %s20, 0
    %p209 = por %p207, %p208
    %p210 = scmp.le.s32.totalorder 1, %s14
    %p211 = scmp.lt.s32.totalorder %s14, 3
    %p212 = pnand %p210, %p211
    %p213 = pneg %p212
    // Predicated region
    $region9: #{c3_block.10} parent=5 // pred_check
      _
    $region10: #{c3_block.10} parent=5 // pred_check_branch
      %215 = sbr.rel (%p212) target = $region12
    $region11: #{c3_block.10} parent=5 // pred_region
      %s216 = ssub.s32 %s14, 1
      // Predicated region
      $region13: #{c3_block.10} parent=11 // pred_check
        %p217 = pneg %p61
      $region14: #{c3_block.10} parent=11 // pred_check_branch
        %219 = sbr.rel (%p217) target = $region16
      $region15: #{c3_block.10} parent=11 // pred_region
        _
      $region16: #{c3_block.10} parent=11 // pred_fallthru
        _
      // Predicated region
      $region17: #{c3_block.10} parent=11 // pred_check
        %p220 = pneg %p108
      $region18: #{c3_block.10} parent=11 // pred_check_branch
        %222 = sbr.rel (%p220) target = $region20
      $region19: #{c3_block.10} parent=11 // pred_region
        _
      $region20: #{c3_block.10} parent=11 // pred_fallthru
        _
      // Predicated region
      $region21: #{c3_block.10} parent=11 // pred_check
        %p223 = pneg %p129
      $region22: #{c3_block.10} parent=11 // pred_check_branch
        %225 = sbr.rel (%p223) target = $region24
      $region23: #{c3_block.10} parent=11 // pred_region
        _
      $region24: #{c3_block.10} parent=11 // pred_fallthru
        _
      // Predicated region
      $region25: #{c3_block.10} parent=11 // pred_check
        %p226 = pneg %p150
      $region26: #{c3_block.10} parent=11 // pred_check_branch
        %228 = sbr.rel (%p226) target = $region28
      $region27: #{c3_block.10} parent=11 // pred_region
        _
      $region28: #{c3_block.10} parent=11 // pred_fallthru
        _
    $region12: #{c3_block.10} parent=5 // pred_fallthru
      _
    %p229 = scmp.lt.s32.totalorder %s14, 2
    // Predicated region
    $region29: #{c3_block.10} parent=5 // pred_check
      %p230 = pneg %p229
    $region30: #{c3_block.10} parent=5 // pred_check_branch
      %232 = sbr.rel (%p230) target = $region32
    $region31: #{c3_block.10} parent=5 // pred_region
      // Predicated region
      $region33: #{c3_block.10} parent=31 // pred_check
        %p233 = pneg %p34
      $region34: #{c3_block.10} parent=31 // pred_check_branch
        %235 = sbr.rel (%p233) target = $region36
      $region35: #{c3_block.10} parent=31 // pred_region
        %p236 = scmp.lt.s32.totalorder %s14, 1
        %s237 = scalar_select %p236, %s14, 1
        %s238 = smul.addr %s237, 2
        %s239 = smul.addr %s238, 4
        %s240 = scalar_lea.vmem %s0, %s239
      $region36: #{c3_block.10} parent=31 // pred_fallthru
        _
      // Predicated region
      $region37: #{c3_block.10} parent=31 // pred_check
        %p241 = pneg %p81
      $region38: #{c3_block.10} parent=31 // pred_check_branch
        %243 = sbr.rel (%p241) target = $region40
      $region39: #{c3_block.10} parent=31 // pred_region
        %p244 = scmp.lt.s32.totalorder %s14, 1
        %s245 = scalar_select %p244, %s14, 1
        %s246 = smul.addr %s245, 4
        %s247 = sadd.s32 2, %s246
        %s248 = smul.addr %s247, 4
        %s249 = scalar_lea.vmem %s2, %s248
      $region40: #{c3_block.10} parent=31 // pred_fallthru
        _
    $region32: #{c3_block.10} parent=5 // pred_fallthru
      _
    %p250 = scmp.le.s32.totalorder 1, %s14
    %p251 = scmp.lt.s32.totalorder %s14, 3
    %p252 = pnand %p250, %p251
    %p253 = pneg %p252
    // Predicated region
    $region41: #{c3_block.10} parent=5 // pred_check
      _
    $region42: #{c3_block.10} parent=5 // pred_check_branch
      %255 = sbr.rel (%p252) target = $region44
    $region43: #{c3_block.10} parent=5 // pred_region
      %s256 = ssub.s32 %s14, 1
      %p257 = scmp.lt.s32.totalorder %s19, 1
      %s258 = scalar_select %p257, %s19, 1
      %s259 = smul.addr %s258, 2
      %s260 = smul.addr %s259, 4
      %s261 = scalar_lea.vmem %s0, %s260
      %p262 = pneg %p40
      %p263 = pneg %p37
      %p264 = pneg %p61
      %p265 = pneg %p58
      %p266 = scmp.lt.s32.totalorder %s19, 1
      %s267 = scalar_select %p266, %s19, 1
      %s268 = smul.addr %s267, 4
      %s269 = sadd.s32 2, %s268
      %s270 = smul.addr %s269, 4
      %s271 = scalar_lea.vmem %s2, %s270
      %p272 = pneg %p87
      %p273 = pneg %p84
      %p274 = pneg %p108
      %p275 = pneg %p105
      %p276 = pneg %p129
      %p277 = pneg %p126
      %p278 = pneg %p150
      %p279 = pneg %p147
      %p280 = pneg %p176
      %p281 = pneg %p173
      %p282 = scmp.lt.s32.totalorder %s19, 1
      %s283 = scalar_select %p282, %s19, 1
      %s284 = smul.addr %s283, 4
      %s285 = smul.addr %s284, 4
      %s286 = scalar_lea.vmem %s6, %s285
      %p287 = pneg %p202
      %p288 = pneg %p199
      %p289 = scmp.lt.s32.totalorder %s19, 1
      %s290 = scalar_select %p289, %s19, 1
      %s291 = smul.addr %s290, 2
      %s292 = smul.addr %s291, 8
      %s293 = scalar_lea.vmem %s7, %s292
      %p294 = scmp.lt.s32.totalorder %s19, 1
      %s295 = scalar_select %p294, %s19, 1
      %s296 = smul.addr %s295, 2
      %s297 = smul.addr %s296, 4
      %s298 = scalar_lea.vmem %s0, %s297
      %p299 = scmp.lt.s32.totalorder %s19, 1
      %s300 = scalar_select %p299, %s19, 1
      %s301 = smul.addr %s300, 4
      %s302 = sadd.s32 2, %s301
      %s303 = smul.addr %s302, 4
      %s304 = scalar_lea.vmem %s2, %s303
      %p305 = scmp.lt.s32.totalorder %s19, 1
      %s306 = scalar_select %p305, %s19, 1
      %s307 = smul.addr %s306, 4
      %s308 = smul.addr %s307, 4
      %s309 = scalar_lea.vmem %s6, %s308
      %p310 = scmp.lt.s32.totalorder %s19, 1
      %s311 = scalar_select %p310, %s19, 1
      %s312 = smul.addr %s311, 2
      %s313 = smul.addr %s312, 8
      %s314 = scalar_lea.vmem %s7, %s313
      %v316 = vld [vmem:[%s298] sm:$0xff]
      %v317 = vld [vmem:[%s1] sm:$0xf]
      %v318 = vld [vmem:[%s1 + $0x4] sm:$0xf]
      %v319 = vld [vmem:[%s304] sm:$0xff]
      %v320 = vunpack.c.l.bf16 %v319
      %v321 = vunpack.c.h.bf16 %v319
      %v322 = vld [vmem:[%s3] sm:$0xff]
      %324 = vset.pattern.permute.xlu0 0
      %325 = vperm.xlu0 %324, %v322
      %v326 = vpop.permute.xlu0 %325
      %v328 = vmul.f32 %v320, %v326
      %v329 = vmul.f32 %v321, %v326
      %v330 = vld [vmem:[%s4] sm:$0xff]
      %332 = vset.pattern.permute.xlu0 0
      %333 = vperm.xlu0 %332, %v330
      %v334 = vpop.permute.xlu0 %333
      %v336 = vadd.f32 %v328, %v334
      %v337 = vadd.f32 %v329, %v334
      %v338 = vsub.f32 0.0, %v336
      %v339 = vsub.f32 0.0, %v337
      %v340 = vmul.f32 %v338, 1.442695
      %v341 = vpow.pop %v340
      %v342 = vmul.f32 %v339, 1.442695
      %v343 = vpow.pop %v342
      %v344 = vadd.f32 %v341, 1.0
      %v345 = vadd.f32 %v343, 1.0
      %v346 = vrcp.pop %v344
      %v347 = vrcp.pop %v345
      %v348 = vmul.f32 %v336, %v346
      %v349 = vmul.f32 %v337, %v347
      %v350 = vpack.c.bf16 %v348, %v348
      %v351 = vpack.c.bf16 %v349, %v349
      %v352 = vld [vmem:[%s5] sm:$0xf]
      %v353 = vld [vmem:[%s5 + $0x4] sm:$0xf]
      %v356 = vunpack.c.l.b16 %v352
      %v357 = vunpack.c.l.b16 %v353
      %v358 = vpack.c.b16 %v357, %v356
      %vm359 = vcmask 64512
      %v361 = vsel %vm359, %v358, 0
      %vm363 = vcmask 1043456
      %v365 = vsel %vm363, %v350, 0
      %v368 = vsel %vm363, %v351, 0
      %370 = vmatprep.subr.bf16.mxu0 %v368
      %371 = vmatpush1.bf16.msra.mxu0 %v365
      %372 = vmatprep.subr.bf16.mxu0 0
      %373 = vmatpush1.bf16.msra.mxu0 0
      %374 = vmatprep.subr.bf16.mxu0 0
      %375 = vmatpush1.bf16.msra.mxu0 0
      %376 = vmatprep.subr.bf16.mxu0 0
      %377 = vmatpush1.bf16.msra.mxu0 0
      %378 = vmatprep.subr.bf16.mxu0 0
      %379 = vmatpush1.bf16.msra.mxu0 0
      %380 = vmatprep.subr.bf16.mxu0 0
      %381 = vmatpush1.bf16.msra.mxu0 0
      %382 = vmatprep.subr.bf16.mxu0 0
      %383 = vmatpush1.bf16.msra.mxu0 0
      %384 = vmatprep.subr.bf16.mxu0 0
      %385 = vmatpush1.bf16.msra.mxu0 0
      %386 = vmatprep.subr.bf16.mxu0 0
      %387 = vmatpush1.bf16.msra.mxu0 0
      %388 = vmatprep.subr.bf16.mxu0 0
      %389 = vmatpush1.bf16.msra.mxu0 0
      %390 = vmatprep.subr.bf16.mxu0 0
      %391 = vmatpush1.bf16.msra.mxu0 0
      %392 = vmatprep.subr.bf16.mxu0 0
      %393 = vmatpush1.bf16.msra.mxu0 0
      %394 = vmatprep.subr.bf16.mxu0 0
      %395 = vmatpush1.bf16.msra.mxu0 0
      %396 = vmatprep.subr.bf16.mxu0 0
      %397 = vmatpush1.bf16.msra.mxu0 0
      %398 = vmatprep.subr.bf16.mxu0 0
      %399 = vmatpush1.bf16.msra.mxu0 0
      %400 = vmatprep.subr.bf16.mxu0 0
      %401 = vmatpush1.bf16.msra.mxu0 0
      %402 = vmatprep.mubr.bf16.mxu0 0
      %403 = vmatmul.mubr.bf16.gmra.mrb[0].mxu0 %v361
      %v404 = vpop.f32.mrb[0].mxu0
      %v405 = vadd.f32 0.0, %v404
      %v406 = vpop.f32.mrb[0].mxu0
      %v407 = vadd.f32 0.0, %v406
      %v408 = vpop.f32.mrb[0].mxu0
      %v409 = vadd.f32 0.0, %v408
      %v410 = vpop.f32.mrb[0].mxu0
      %v411 = vadd.f32 0.0, %v410
      %412 = vdwg.mxu0
      %v415 = vunpack.c.l.b16 %v317
      %v416 = vunpack.c.l.b16 %v318
      %v417 = vpack.c.b16 %v416, %v415
      %v419 = vunpack.c.l.b16 %v316
      %v420 = vunpack.c.h.b16 %v316
      %v421 = vpack.c.b16 %v419, %v419
      %v422 = vpack.c.b16 %v420, %v420
      %v424 = vsel %vm359, %v417, 0
      %v427 = vsel %vm363, %v421, 0
      %v430 = vsel %vm363, %v422, 0
      %432 = vmatprep.subr.bf16.mxu0 %v430
      %433 = vmatpush1.bf16.msra.mxu0 %v427
      %434 = vmatprep.subr.bf16.mxu0 0
      %435 = vmatpush1.bf16.msra.mxu0 0
      %436 = vmatprep.subr.bf16.mxu0 0
      %437 = vmatpush1.bf16.msra.mxu0 0
      %438 = vmatprep.subr.bf16.mxu0 0
      %439 = vmatpush1.bf16.msra.mxu0 0
      %440 = vmatprep.subr.bf16.mxu0 0
      %441 = vmatpush1.bf16.msra.mxu0 0
      %442 = vmatprep.subr.bf16.mxu0 0
      %443 = vmatpush1.bf16.msra.mxu0 0
      %444 = vmatprep.subr.bf16.mxu0 0
      %445 = vmatpush1.bf16.msra.mxu0 0
      %446 = vmatprep.subr.bf16.mxu0 0
      %447 = vmatpush1.bf16.msra.mxu0 0
      %448 = vmatprep.subr.bf16.mxu0 0
      %449 = vmatpush1.bf16.msra.mxu0 0
      %450 = vmatprep.subr.bf16.mxu0 0
      %451 = vmatpush1.bf16.msra.mxu0 0
      %452 = vmatprep.subr.bf16.mxu0 0
      %453 = vmatpush1.bf16.msra.mxu0 0
      %454 = vmatprep.subr.bf16.mxu0 0
      %455 = vmatpush1.bf16.msra.mxu0 0
      %456 = vmatprep.subr.bf16.mxu0 0
      %457 = vmatpush1.bf16.msra.mxu0 0
      %458 = vmatprep.subr.bf16.mxu0 0
      %459 = vmatpush1.bf16.msra.mxu0 0
      %460 = vmatprep.subr.bf16.mxu0 0
      %461 = vmatpush1.bf16.msra.mxu0 0
      %462 = vmatprep.subr.bf16.mxu0 0
      %463 = vmatpush1.bf16.msra.mxu0 0
      %464 = vmatprep.mubr.bf16.mxu0 0
      %465 = vmatmul.mubr.bf16.gmra.mrb[0].mxu0 %v424
      %v466 = vpop.f32.mrb[0].mxu0
      %v467 = vadd.f32 %v405, %v466
      %v468 = vpop.f32.mrb[0].mxu0
      %v469 = vadd.f32 %v407, %v468
      %v470 = vpop.f32.mrb[0].mxu0
      %v471 = vadd.f32 %v409, %v470
      %v472 = vpop.f32.mrb[0].mxu0
      %v473 = vadd.f32 %v411, %v472
      %474 = vdwg.mxu0
      %v475 = vpack.c.bf16 %v471, %v467
      %v476 = vpack.c.bf16 %v473, %v469
      %v479 = vunpack.c.l.b16 %v475
      %v480 = vunpack.c.l.b16 %v476
      %v481 = vunpack.c.h.b16 %v475
      %v482 = vunpack.c.h.b16 %v476
      %v483 = vpack.c.b16 %v480, %v479
      %v484 = vpack.c.b16 %v482, %v481
      %487 = vst [vmem:[%s309] sm:$0xff] %v483
      %488 = vst [vmem:[%s309 + $0x8] sm:$0xff] %v484
      %v489 = vadd.f32 %v467, %v469
      %490 = vadd.xlane.f32.xlu0 %v489
      %v491 = vpop.xlane.xlu0 %490
      %v492 = vadd.f32 %v471, %v473
      %493 = vadd.xlane.f32.xlu0 %v492
      %v494 = vpop.xlane.xlu0 %493
      %v495 = vmul.f32 %v491, 0.00390625
      %v496 = vmul.f32 %v494, 0.00390625
      %v497 = vsub.f32 %v467, %v495
      %v498 = vsub.f32 %v469, %v495
      %v499 = vsub.f32 %v471, %v496
      %v500 = vsub.f32 %v473, %v496
      %v501 = vmul.f32 %v497, %v497
      %v502 = vmul.f32 %v498, %v498
      %v503 = vmul.f32 %v499, %v499
      %v504 = vmul.f32 %v500, %v500
      %v505 = vadd.f32 %v501, %v502
      %506 = vadd.xlane.f32.xlu0 %v505
      %v507 = vpop.xlane.xlu0 %506
      %v508 = vadd.f32 %v503, %v504
      %509 = vadd.xlane.f32.xlu0 %v508
      %v510 = vpop.xlane.xlu0 %509
      %vm511 = vcmask 7168
      %v512 = vsel %vm511, %v491, %v507
      %v513 = vsel %vm511, %v494, %v510
      %vm514 = vcmask 15360
      %515 = vst.msk [vmem:[%s314] sm:$0xff] %vm514, %v512
      %516 = vst.msk [vmem:[%s314 + $0x8] sm:$0xff] %vm514, %v513
      %p517 = scmp.lt.s32.totalorder %s19, 1
      %s518 = scalar_select %p517, %s19, 1
      %s519 = smul.addr %s518, 4
      %s520 = smul.addr %s519, 4
      %s521 = scalar_lea.vmem %s6, %s520
      %p522 = scmp.lt.s32.totalorder %s19, 1
      %s523 = scalar_select %p522, %s19, 1
      %s524 = smul.addr %s523, 2
      %s525 = smul.addr %s524, 8
      %s526 = scalar_lea.vmem %s7, %s525
      // Predicated region
      $region45: #{c3_block.10} parent=43 // pred_check
        %p527 = pneg %p173
      $region46: #{c3_block.10} parent=43 // pred_check_branch
        %529 = sbr.rel (%p527) target = $region48
      $region47: #{c3_block.10} parent=43 // pred_region
        _
      $region48: #{c3_block.10} parent=43 // pred_fallthru
        _
      // Predicated region
      $region49: #{c3_block.10} parent=43 // pred_check
        %p530 = pneg %p199
      $region50: #{c3_block.10} parent=43 // pred_check_branch
        %532 = sbr.rel (%p530) target = $region52
      $region51: #{c3_block.10} parent=43 // pred_region
        _
      $region52: #{c3_block.10} parent=43 // pred_fallthru
        _
    $region44: #{c3_block.10} parent=5 // pred_fallthru
      _
    %p533 = scmp.le.s32.totalorder 2, %s14
    // Predicated region
    $region53: #{c3_block.10} parent=5 // pred_check
      %p534 = pneg %p533
    $region54: #{c3_block.10} parent=5 // pred_check_branch
      %536 = sbr.rel (%p534) target = $region56
    $region55: #{c3_block.10} parent=5 // pred_region
      %s537 = ssub.s32 %s14, 2
      // Predicated region
      $region57: #{c3_block.10} parent=55 // pred_check
        %p538 = pneg %p179
      $region58: #{c3_block.10} parent=55 // pred_check_branch
        %540 = sbr.rel (%p538) target = $region60
      $region59: #{c3_block.10} parent=55 // pred_region
        %p541 = scmp.lt.s32.totalorder %s20, 1
        %s542 = scalar_select %p541, %s20, 1
        %s543 = smul.addr %s542, 4
        %s544 = smul.addr %s543, 4
        %s545 = scalar_lea.vmem %s6, %s544
      $region60: #{c3_block.10} parent=55 // pred_fallthru
        _
      // Predicated region
      $region61: #{c3_block.10} parent=55 // pred_check
        %p546 = pneg %p205
      $region62: #{c3_block.10} parent=55 // pred_check_branch
        %548 = sbr.rel (%p546) target = $region64
      $region63: #{c3_block.10} parent=55 // pred_region
        %p549 = scmp.lt.s32.totalorder %s20, 1
        %s550 = scalar_select %p549, %s20, 1
        %s551 = smul.addr %s550, 2
        %s552 = smul.addr %s551, 8
        %s553 = scalar_lea.vmem %s7, %s552
      $region64: #{c3_block.10} parent=55 // pred_fallthru
        _
    $region56: #{c3_block.10} parent=5 // pred_fallthru
      _
  $region6: #{c3_block.10} parent=0 // loop_footer
    %s18 = sadd.s32 1, %s14
  $region7: #{c3_block.10} parent=0 // loop_footer_branch
    %13 = sbr.rel target = $region3
  $region8: #{c3_block.10} parent=0 // loop_exit
    _

// kernel: c3_block.7
$region0: #{c3_block.7}
  #allocation0 [shape = 'u32[]', space=smem, size = 0x4, offset = 0x4, fixed_abs, tag = 'smem constant byte address 0x4 - core index']
  #allocation1 [shape = 'u32[144,128]{1,0:T(1,128)}', space=vmem, size = 0x12000, scoped, tag = 'internal scratch']
  %s0 = inlined_call_operand.vmem [shape: bf16[2,8,290], index: 0, kind: input, shape index: {}]
  %s1 = inlined_call_operand.vmem [shape: f32[8,1], index: 1, kind: input, shape index: {}]
  %s2 = inlined_call_operand.vmem [shape: f32[8,1], index: 2, kind: input, shape index: {}]
  %s3 = inlined_call_operand.vmem [shape: bf16[9,8,8], index: 3, kind: input, shape index: {}]
  %s4 = inlined_call_operand.vmem [shape: bf16[2,8,256], index: 4, kind: output, shape index: {0}]
  %s5 = inlined_call_operand.vmem [shape: f32[2,8,2], index: 5, kind: output, shape index: {1}]
  %6 = xla_tuple %s4, %s5
  %s7 = sld [smem:[#allocation0]]
  $region57: #{c3_block.7} parent=0
    _
  %s9 = ssub.s32 1, %s7
  %s10 = scalar_select 0, %s9, %s7
  loop: start=0, step=1, limit=4
  $region2: #{c3_block.7} parent=0 // loop_pre_header
    _
  $region3: #{c3_block.7} parent=0 // loop_header
    %s12 = sphi 0, %s16
    %p13 = scmp.ge.s32.totalorder %s12, 4
    %s22 = sphi 0, %s24
    %s25 = sphi 0, %s22
    %s26 = sphi 0, %s25
    %s42 = sphi 0, %s26
    %s46 = sphi 0, %s46
    %s48 = sphi 0, %s46
    %s49 = sphi 0, %s48
    %s63 = sphi 0, %s49
    %s67 = sphi 0, %s67
    %s69 = sphi 0, %s67
    %s70 = sphi 0, %s69
    %s84 = sphi 0, %s70
    %s88 = sphi 0, %s88
    %s90 = sphi 0, %s88
    %s91 = sphi 0, %s90
    %s105 = sphi 0, %s91
    %s111 = sphi 0, %s113
    %s114 = sphi 0, %s111
    %s115 = sphi 0, %s114
    %s131 = sphi 0, %s115
    %s137 = sphi 0, %s139
    %s140 = sphi 0, %s137
    %s141 = sphi 0, %s140
    %s157 = sphi 0, %s141
  $region4: #{c3_block.7} parent=0 // loop_header_branch
    %15 = sbr.rel (%p13) target = $region8
  $region5: #{c3_block.7} parent=0 // loop_body
    %s17 = ssub.s32 %s12, 1
    %s18 = ssub.s32 %s12, 2
    %s19 = sadd.s32 %s12, 1
    %s20 = ssub.s32 %s12, %s19
    %p21 = scmp.eq.s32.totalorder %s20, 0
    %s23 = sadd.s32 %s22, 1
    %s24 = scalar_select %p21, %s22, %s23
    %p27 = pneg %p21
    %p28 = scmp.eq.s32.totalorder %s12, 1
    %p29 = por %p27, %p28
    %p30 = scmp.ne.s32.totalorder %s22, %s25
    %p31 = scmp.eq.s32.totalorder %s12, 0
    %p32 = por %p30, %p31
    %p33 = scmp.ne.s32.totalorder %s22, %s25
    %p34 = scmp.eq.s32.totalorder %s17, 1
    %p35 = por %p33, %p34
    %p36 = scmp.ne.s32.totalorder %s25, %s26
    %p37 = scmp.eq.s32.totalorder %s17, 0
    %p38 = por %p36, %p37
    %p39 = scmp.ne.s32.totalorder %s25, %s26
    %p40 = scmp.eq.s32.totalorder %s18, 1
    %p41 = por %p39, %p40
    %p43 = scmp.ne.s32.totalorder %s26, %s42
    %p44 = scmp.eq.s32.totalorder %s18, 0
    %p45 = por %p43, %p44
    %s47 = sadd.s32 %s46, 1
    %p50 = scmp.eq.s32.totalorder %s12, 1
    %p51 = scmp.ne.s32.totalorder %s46, %s48
    %p52 = scmp.eq.s32.totalorder %s12, 0
    %p53 = por %p51, %p52
    %p54 = scmp.ne.s32.totalorder %s46, %s48
    %p55 = scmp.eq.s32.totalorder %s17, 1
    %p56 = por %p54, %p55
    %p57 = scmp.ne.s32.totalorder %s48, %s49
    %p58 = scmp.eq.s32.totalorder %s17, 0
    %p59 = por %p57, %p58
    %p60 = scmp.ne.s32.totalorder %s48, %s49
    %p61 = scmp.eq.s32.totalorder %s18, 1
    %p62 = por %p60, %p61
    %p64 = scmp.ne.s32.totalorder %s49, %s63
    %p65 = scmp.eq.s32.totalorder %s18, 0
    %p66 = por %p64, %p65
    %s68 = sadd.s32 %s67, 1
    %p71 = scmp.eq.s32.totalorder %s12, 1
    %p72 = scmp.ne.s32.totalorder %s67, %s69
    %p73 = scmp.eq.s32.totalorder %s12, 0
    %p74 = por %p72, %p73
    %p75 = scmp.ne.s32.totalorder %s67, %s69
    %p76 = scmp.eq.s32.totalorder %s17, 1
    %p77 = por %p75, %p76
    %p78 = scmp.ne.s32.totalorder %s69, %s70
    %p79 = scmp.eq.s32.totalorder %s17, 0
    %p80 = por %p78, %p79
    %p81 = scmp.ne.s32.totalorder %s69, %s70
    %p82 = scmp.eq.s32.totalorder %s18, 1
    %p83 = por %p81, %p82
    %p85 = scmp.ne.s32.totalorder %s70, %s84
    %p86 = scmp.eq.s32.totalorder %s18, 0
    %p87 = por %p85, %p86
    %s89 = sadd.s32 %s88, 1
    %p92 = scmp.eq.s32.totalorder %s12, 1
    %p93 = scmp.ne.s32.totalorder %s88, %s90
    %p94 = scmp.eq.s32.totalorder %s12, 0
    %p95 = por %p93, %p94
    %p96 = scmp.ne.s32.totalorder %s88, %s90
    %p97 = scmp.eq.s32.totalorder %s17, 1
    %p98 = por %p96, %p97
    %p99 = scmp.ne.s32.totalorder %s90, %s91
    %p100 = scmp.eq.s32.totalorder %s17, 0
    %p101 = por %p99, %p100
    %p102 = scmp.ne.s32.totalorder %s90, %s91
    %p103 = scmp.eq.s32.totalorder %s18, 1
    %p104 = por %p102, %p103
    %p106 = scmp.ne.s32.totalorder %s91, %s105
    %p107 = scmp.eq.s32.totalorder %s18, 0
    %p108 = por %p106, %p107
    %s109 = ssub.s32 %s12, %s19
    %p110 = scmp.eq.s32.totalorder %s109, 0
    %s112 = sadd.s32 %s111, 1
    %s113 = scalar_select %p110, %s111, %s112
    %p116 = pneg %p110
    %p117 = scmp.eq.s32.totalorder %s12, 1
    %p118 = por %p116, %p117
    %p119 = scmp.ne.s32.totalorder %s111, %s114
    %p120 = scmp.eq.s32.totalorder %s12, 0
    %p121 = por %p119, %p120
    %p122 = scmp.ne.s32.totalorder %s111, %s114
    %p123 = scmp.eq.s32.totalorder %s17, 1
    %p124 = por %p122, %p123
    %p125 = scmp.ne.s32.totalorder %s114, %s115
    %p126 = scmp.eq.s32.totalorder %s17, 0
    %p127 = por %p125, %p126
    %p128 = scmp.ne.s32.totalorder %s114, %s115
    %p129 = scmp.eq.s32.totalorder %s18, 1
    %p130 = por %p128, %p129
    %p132 = scmp.ne.s32.totalorder %s115, %s131
    %p133 = scmp.eq.s32.totalorder %s18, 0
    %p134 = por %p132, %p133
    %s135 = ssub.s32 %s12, %s19
    %p136 = scmp.eq.s32.totalorder %s135, 0
    %s138 = sadd.s32 %s137, 1
    %s139 = scalar_select %p136, %s137, %s138
    %p142 = pneg %p136
    %p143 = scmp.eq.s32.totalorder %s12, 1
    %p144 = por %p142, %p143
    %p145 = scmp.ne.s32.totalorder %s137, %s140
    %p146 = scmp.eq.s32.totalorder %s12, 0
    %p147 = por %p145, %p146
    %p148 = scmp.ne.s32.totalorder %s137, %s140
    %p149 = scmp.eq.s32.totalorder %s17, 1
    %p150 = por %p148, %p149
    %p151 = scmp.ne.s32.totalorder %s140, %s141
    %p152 = scmp.eq.s32.totalorder %s17, 0
    %p153 = por %p151, %p152
    %p154 = scmp.ne.s32.totalorder %s140, %s141
    %p155 = scmp.eq.s32.totalorder %s18, 1
    %p156 = por %p154, %p155
    %p158 = scmp.ne.s32.totalorder %s141, %s157
    %p159 = scmp.eq.s32.totalorder %s18, 0
    %p160 = por %p158, %p159
    %p161 = scmp.le.s32.totalorder 1, %s12
    %p162 = scmp.lt.s32.totalorder %s12, 3
    %p163 = pnand %p161, %p162
    %p164 = pneg %p163
    // Predicated region
    $region9: #{c3_block.7} parent=5 // pred_check
      _
    $region10: #{c3_block.7} parent=5 // pred_check_branch
      %166 = sbr.rel (%p163) target = $region12
    $region11: #{c3_block.7} parent=5 // pred_region
      %s167 = ssub.s32 %s12, 1
      // Predicated region
      $region13: #{c3_block.7} parent=11 // pred_check
        %p168 = pneg %p59
      $region14: #{c3_block.7} parent=11 // pred_check_branch
        %170 = sbr.rel (%p168) target = $region16
      $region15: #{c3_block.7} parent=11 // pred_region
        _
      $region16: #{c3_block.7} parent=11 // pred_fallthru
        _
      // Predicated region
      $region17: #{c3_block.7} parent=11 // pred_check
        %p171 = pneg %p80
      $region18: #{c3_block.7} parent=11 // pred_check_branch
        %173 = sbr.rel (%p171) target = $region20
      $region19: #{c3_block.7} parent=11 // pred_region
        _
      $region20: #{c3_block.7} parent=11 // pred_fallthru
        _
      // Predicated region
      $region21: #{c3_block.7} parent=11 // pred_check
        %p174 = pneg %p101
      $region22: #{c3_block.7} parent=11 // pred_check_branch
        %176 = sbr.rel (%p174) target = $region24
      $region23: #{c3_block.7} parent=11 // pred_region
        _
      $region24: #{c3_block.7} parent=11 // pred_fallthru
        _
    $region12: #{c3_block.7} parent=5 // pred_fallthru
      _
    %p177 = scmp.lt.s32.totalorder %s12, 2
    // Predicated region
    $region25: #{c3_block.7} parent=5 // pred_check
      %p178 = pneg %p177
    $region26: #{c3_block.7} parent=5 // pred_check_branch
      %180 = sbr.rel (%p178) target = $region28
    $region27: #{c3_block.7} parent=5 // pred_region
      // Predicated region
      $region29: #{c3_block.7} parent=27 // pred_check
        %p181 = pneg %p32
      $region30: #{c3_block.7} parent=27 // pred_check_branch
        %183 = sbr.rel (%p181) target = $region32
      $region31: #{c3_block.7} parent=27 // pred_region
        %p184 = scmp.lt.s32.totalorder %s12, 1
        %s185 = scalar_select %p184, %s12, 1
        %s186 = smul.addr %s185, 3
        %s187 = smul.addr %s186, 4
        %s188 = scalar_lea.vmem %s0, %s187
      $region32: #{c3_block.7} parent=27 // pred_fallthru
        _
    $region28: #{c3_block.7} parent=5 // pred_fallthru
      _
    %p189 = scmp.le.s32.totalorder 1, %s12
    %p190 = scmp.lt.s32.totalorder %s12, 3
    %p191 = pnand %p189, %p190
    %p192 = pneg %p191
    // Predicated region
    $region33: #{c3_block.7} parent=5 // pred_check
      _
    $region34: #{c3_block.7} parent=5 // pred_check_branch
      %194 = sbr.rel (%p191) target = $region36
    $region35: #{c3_block.7} parent=5 // pred_region
      %s195 = ssub.s32 %s12, 1
      %p196 = scmp.lt.s32.totalorder %s17, 1
      %s197 = scalar_select %p196, %s17, 1
      %s198 = smul.addr %s197, 3
      %s199 = smul.addr %s198, 4
      %s200 = scalar_lea.vmem %s0, %s199
      %p201 = pneg %p38
      %p202 = pneg %p35
      %p203 = pneg %p59
      %p204 = pneg %p56
      %p205 = pneg %p80
      %p206 = pneg %p77
      %p207 = pneg %p101
      %p208 = pneg %p98
      %p209 = pneg %p127
      %p210 = pneg %p124
      %p211 = scmp.lt.s32.totalorder %s17, 1
      %s212 = scalar_select %p211, %s17, 1
      %s213 = smul.addr %s212, 2
      %s214 = smul.addr %s213, 4
      %s215 = scalar_lea.vmem %s4, %s214
      %p216 = pneg %p153
      %p217 = pneg %p150
      %p218 = scmp.lt.s32.totalorder %s17, 1
      %s219 = scalar_select %p218, %s17, 1
      %s220 = smul.addr %s219, 8
      %s221 = scalar_lea.vmem %s5, %s220
      %p222 = scmp.lt.s32.totalorder %s17, 1
      %s223 = scalar_select %p222, %s17, 1
      %s224 = smul.addr %s223, 3
      %s225 = smul.addr %s224, 4
      %s226 = scalar_lea.vmem %s0, %s225
      %p227 = scmp.lt.s32.totalorder %s17, 1
      %s228 = scalar_select %p227, %s17, 1
      %s229 = smul.addr %s228, 2
      %s230 = smul.addr %s229, 4
      %s231 = scalar_lea.vmem %s4, %s230
      %p232 = scmp.lt.s32.totalorder %s17, 1
      %s233 = scalar_select %p232, %s17, 1
      %s234 = smul.addr %s233, 8
      %s235 = scalar_lea.vmem %s5, %s234
      %v239 = vlaneseq
      %v240 = vand.u32 %v239, 127
      %v241 = vadd.s32 %v240, 128
      %v242 = vadd.s32 %v240, 256
      %vm243 = vcmp.lt.s32.totalorder %v240, 0
      %v244 = vsub.s32 0, %v240
      %v245 = vsel %vm243, %v244, %v240
      %v246 = vshrl.u32 %v245, 4
      %v247 = vand.u32 %v245, 15
      %v248 = vsub.s32 0, %v247
      %v249 = vsel %vm243, %v248, %v247
      %vm250 = vcmp.lt.s32.totalorder %v241, 0
      %v251 = vsub.s32 0, %v241
      %v252 = vsel %vm250, %v251, %v241
      %v253 = vshrl.u32 %v252, 4
      %v254 = vand.u32 %v252, 15
      %v255 = vsub.s32 0, %v254
      %v256 = vsel %vm250, %v255, %v254
      %vm257 = vcmp.lt.s32.totalorder %v242, 0
      %v258 = vsub.s32 0, %v242
      %v259 = vsel %vm257, %v258, %v242
      %v260 = vshrl.u32 %v259, 4
      %v261 = vand.u32 %v259, 15
      %v262 = vsub.s32 0, %v261
      %v263 = vsel %vm257, %v262, %v261
      %vm264 = vcmp.ne.s32.totalorder %v249, 0
      %vm265 = vcmp.ne.s32.totalorder %v256, 0
      %vm266 = vcmp.ne.s32.totalorder %v263, 0
      %vm267 = vcmp.lt.s32.totalorder %v249, 0
      %vm268 = vcmp.lt.s32.totalorder %v256, 0
      %vm269 = vcmp.lt.s32.totalorder %v263, 0
      %vm270 = vmand %vm267, %vm264
      %vm271 = vmand %vm268, %vm265
      %vm272 = vmand %vm269, %vm266
      %v273 = vadd.s32 %v249, 16
      %v274 = vadd.s32 %v256, 16
      %v275 = vadd.s32 %v263, 16
      %v276 = vsel %vm270, %v273, %v249
      %v277 = vsel %vm271, %v274, %v256
      %v278 = vsel %vm272, %v275, %v263
      %v279 = vld [vmem:[%s226] sm:$0xff]
      %v280 = vld [vmem:[%s226 + $0x8] sm:$0xf]
      %v281 = vunpack.c.l.bf16 %v279
      %v282 = vunpack.c.h.bf16 %v279
      %v283 = vunpack.c.l.bf16 %v280
      %v284 = vld [vmem:[%s1] sm:$0xff]
      %286 = vset.pattern.permute.xlu0 0
      %287 = vperm.xlu0 %286, %v284
      %v288 = vpop.permute.xlu0 %287
      %v290 = vmul.f32 %v281, %v288
      %v291 = vmul.f32 %v282, %v288
      %v292 = vmul.f32 %v283, %v288
      %v293 = vld [vmem:[%s2] sm:$0xff]
      %295 = vset.pattern.permute.xlu0 0
      %296 = vperm.xlu0 %295, %v293
      %v297 = vpop.permute.xlu0 %296
      %v299 = vadd.f32 %v290, %v297
      %v300 = vadd.f32 %v291, %v297
      %v301 = vadd.f32 %v292, %v297
      %v302 = vsub.f32 0.0, %v299
      %v303 = vsub.f32 0.0, %v300
      %v304 = vsub.f32 0.0, %v301
      %v305 = vmul.f32 %v302, 1.442695
      %v306 = vpow.pop %v305
      %v307 = vmul.f32 %v303, 1.442695
      %v308 = vpow.pop %v307
      %v309 = vmul.f32 %v304, 1.442695
      %v310 = vpow.pop %v309
      %v311 = vadd.f32 %v306, 1.0
      %v312 = vadd.f32 %v308, 1.0
      %v313 = vadd.f32 %v310, 1.0
      %v314 = vrcp.pop %v311
      %v315 = vrcp.pop %v312
      %v316 = vrcp.pop %v313
      %v317 = vmul.f32 %v299, %v314
      %v318 = vmul.f32 %v300, %v315
      %v319 = vmul.f32 %v301, %v316
      %vm320 = vcmp.ge.s32.totalorder %v240, 17
      %vm321 = vcmp.ge.s32.totalorder %v241, 17
      %vm322 = vcmp.ge.s32.totalorder %v242, 17
      %vm323 = vcmp.lt.s32.totalorder %v240, 273
      %vm324 = vcmp.lt.s32.totalorder %v241, 273
      %vm325 = vcmp.lt.s32.totalorder %v242, 273
      %vm326 = vmand %vm320, %vm323
      %vm327 = vmand %vm321, %vm324
      %vm328 = vmand %vm322, %vm325
      %v329 = vsel %vm326, 1, 0
      %v330 = vsel %vm327, 1, 0
      %v331 = vsel %vm328, 1, 0
      %vm332 = vcmp.eq.s32.totalorder %v329, 1
      %vm333 = vcmp.eq.s32.totalorder %v330, 1
      %vm334 = vcmp.eq.s32.totalorder %v331, 1
      %v335 = vsel %vm332, %v317, 0.0
      %v336 = vsel %vm333, %v318, 0.0
      %v337 = vsel %vm334, %v319, 0.0
      %v338 = vpack.c.bf16 %v335, %v335
      %v339 = vpack.c.bf16 %v336, %v336
      %v340 = vpack.c.bf16 %v337, %v337
      %v341 = vadd.s32 %v276, 4294967295
      %v342 = vadd.s32 %v277, 4294967295
      %v343 = vadd.s32 %v278, 4294967295
      %vm344 = vcmp.ge.s32.totalorder %v341, 0
      %vm345 = vcmp.ge.s32.totalorder %v342, 0
      %vm346 = vcmp.ge.s32.totalorder %v343, 0
      %vm347 = vcmp.lt.s32.totalorder %v341, 16
      %vm348 = vcmp.lt.s32.totalorder %v342, 16
      %vm349 = vcmp.lt.s32.totalorder %v343, 16
      %vm350 = vmand %vm344, %vm347
      %vm351 = vmand %vm345, %vm348
      %vm352 = vmand %vm346, %vm349
      %v353 = vsel %vm350, 1, 0
      %v354 = vsel %vm351, 1, 0
      %v355 = vsel %vm352, 1, 0
      %vm356 = vcmp.eq.s32.totalorder %v353, 1
      %vm357 = vcmp.eq.s32.totalorder %v354, 1
      %vm358 = vcmp.eq.s32.totalorder %v355, 1
      %vm359 = vmpackc.low %vm357, %vm356
      %vm360 = vmpackc.low %vm358, %vm358
      %v361 = vsel %vm359, 65537, 0
      %v362 = vsel %vm360, 65537, 0
      %v363 = vlaneseq
      %v364 = vshrl.u32 %v363, 7
      %v365 = vsub.s32 0, %v364
      %v366 = vrot.slane %v361, %v365
      %v367 = vlaneseq
      %v368 = vshrl.u32 %v367, 7
      %v369 = vsub.s32 4, %v368
      %v370 = vrot.slane %v361, %v369
      %v371 = vlaneseq
      %v372 = vshrl.u32 %v371, 7
      %v373 = vsub.s32 0, %v372
      %v374 = vrot.slane %v362, %v373
      %vm375 = vcmp.ne.s16.totalorder %v366, 0
      %vm376 = vcmp.ne.s16.totalorder %v370, 0
      %vm377 = vcmp.ne.s16.totalorder %v374, 0
      %v378 = vsel %vm375, %v338, 0
      %v379 = vsel %vm376, %v339, 0
      %v380 = vsel %vm377, %v340, 0
      %v381 = vld [vmem:[%s3] sm:$0xf]
      %s382 = scalar_lea.vmem %s3, 12
      %v383 = vld [vmem:[%s382] sm:$0xf]
      %387 = vrot.lane.b32.xlu0 %v378, 112
      %v388 = vpop.permute.xlu0 %387
      %389 = vrot.lane.b32.xlu0 %v379, 112
      %v390 = vpop.permute.xlu0 %389
      %391 = vrot.lane.b32.xlu0 %v380, 112
      %v392 = vpop.permute.xlu0 %391
      %vm393 = vcmask 916480
      %v394 = vsel %vm393, %v388, %v390
      %v395 = vsel %vm393, %v390, %v392
      %vm396 = vcmask 64512
      %v398 = vsel %vm396, %v383, 0
      %vm400 = vcmask 1043456
      %v402 = vsel %vm400, %v394, 0
      %v405 = vsel %vm400, %v395, 0
      %407 = vmatprep.subr.bf16.mxu0 %v405
      %408 = vmatpush1.bf16.msra.mxu0 %v402
      %409 = vmatprep.subr.bf16.mxu0 0
      %410 = vmatpush1.bf16.msra.mxu0 0
      %411 = vmatprep.subr.bf16.mxu0 0
      %412 = vmatpush1.bf16.msra.mxu0 0
      %413 = vmatprep.subr.bf16.mxu0 0
      %414 = vmatpush1.bf16.msra.mxu0 0
      %415 = vmatprep.subr.bf16.mxu0 0
      %416 = vmatpush1.bf16.msra.mxu0 0
      %417 = vmatprep.subr.bf16.mxu0 0
      %418 = vmatpush1.bf16.msra.mxu0 0
      %419 = vmatprep.subr.bf16.mxu0 0
      %420 = vmatpush1.bf16.msra.mxu0 0
      %421 = vmatprep.subr.bf16.mxu0 0
      %422 = vmatpush1.bf16.msra.mxu0 0
      %423 = vmatprep.subr.bf16.mxu0 0
      %424 = vmatpush1.bf16.msra.mxu0 0
      %425 = vmatprep.subr.bf16.mxu0 0
      %426 = vmatpush1.bf16.msra.mxu0 0
      %427 = vmatprep.subr.bf16.mxu0 0
      %428 = vmatpush1.bf16.msra.mxu0 0
      %429 = vmatprep.subr.bf16.mxu0 0
      %430 = vmatpush1.bf16.msra.mxu0 0
      %431 = vmatprep.subr.bf16.mxu0 0
      %432 = vmatpush1.bf16.msra.mxu0 0
      %433 = vmatprep.subr.bf16.mxu0 0
      %434 = vmatpush1.bf16.msra.mxu0 0
      %435 = vmatprep.subr.bf16.mxu0 0
      %436 = vmatpush1.bf16.msra.mxu0 0
      %437 = vmatprep.subr.bf16.mxu0 0
      %438 = vmatpush1.bf16.msra.mxu0 0
      %439 = vmatprep.mubr.bf16.mxu0 0
      %440 = vmatmul.mubr.bf16.gmra.mrb[0].mxu0 %v398
      %v441 = vpop.f32.mrb[0].mxu0
      %v442 = vadd.f32 0.0, %v441
      %v443 = vpop.f32.mrb[0].mxu0
      %v444 = vadd.f32 0.0, %v443
      %v445 = vpop.f32.mrb[0].mxu0
      %v446 = vpop.f32.mrb[0].mxu0
      %447 = vdwg.mxu0
      %v449 = vsel %vm396, %v381, 0
      %v452 = vsel %vm400, %v378, 0
      %v455 = vsel %vm400, %v379, 0
      %457 = vmatprep.subr.bf16.mxu0 %v455
      %458 = vmatpush1.bf16.msra.mxu0 %v452
      %459 = vmatprep.subr.bf16.mxu0 0
      %460 = vmatpush1.bf16.msra.mxu0 0
      %461 = vmatprep.subr.bf16.mxu0 0
      %462 = vmatpush1.bf16.msra.mxu0 0
      %463 = vmatprep.subr.bf16.mxu0 0
      %464 = vmatpush1.bf16.msra.mxu0 0
      %465 = vmatprep.subr.bf16.mxu0 0
      %466 = vmatpush1.bf16.msra.mxu0 0
      %467 = vmatprep.subr.bf16.mxu0 0
      %468 = vmatpush1.bf16.msra.mxu0 0
      %469 = vmatprep.subr.bf16.mxu0 0
      %470 = vmatpush1.bf16.msra.mxu0 0
      %471 = vmatprep.subr.bf16.mxu0 0
      %472 = vmatpush1.bf16.msra.mxu0 0
      %473 = vmatprep.subr.bf16.mxu0 0
      %474 = vmatpush1.bf16.msra.mxu0 0
      %475 = vmatprep.subr.bf16.mxu0 0
      %476 = vmatpush1.bf16.msra.mxu0 0
      %477 = vmatprep.subr.bf16.mxu0 0
      %478 = vmatpush1.bf16.msra.mxu0 0
      %479 = vmatprep.subr.bf16.mxu0 0
      %480 = vmatpush1.bf16.msra.mxu0 0
      %481 = vmatprep.subr.bf16.mxu0 0
      %482 = vmatpush1.bf16.msra.mxu0 0
      %483 = vmatprep.subr.bf16.mxu0 0
      %484 = vmatpush1.bf16.msra.mxu0 0
      %485 = vmatprep.subr.bf16.mxu0 0
      %486 = vmatpush1.bf16.msra.mxu0 0
      %487 = vmatprep.subr.bf16.mxu0 0
      %488 = vmatpush1.bf16.msra.mxu0 0
      %489 = vmatprep.mubr.bf16.mxu0 0
      %490 = vmatmul.mubr.bf16.gmra.mrb[0].mxu0 %v449
      %v491 = vpop.f32.mrb[0].mxu0
      %v492 = vadd.f32 %v442, %v491
      %v493 = vpop.f32.mrb[0].mxu0
      %v494 = vadd.f32 %v444, %v493
      %v495 = vpop.f32.mrb[0].mxu0
      %v496 = vpop.f32.mrb[0].mxu0
      %497 = vdwg.mxu0
      %s498 = scalar_lea.vmem %s3, 24
      %v499 = vld [vmem:[%s498] sm:$0xf]
      %500 = vrot.lane.b32.xlu0 %v378, 96
      %v501 = vpop.permute.xlu0 %500
      %502 = vrot.lane.b32.xlu0 %v379, 96
      %v503 = vpop.permute.xlu0 %502
      %504 = vrot.lane.b32.xlu0 %v380, 96
      %v505 = vpop.permute.xlu0 %504
      %vm506 = vcmask 785408
      %v507 = vsel %vm506, %v501, %v503
      %v508 = vsel %vm506, %v503, %v505
      %v510 = vsel %vm396, %v499, 0
      %v513 = vsel %vm400, %v507, 0
      %v516 = vsel %vm400, %v508, 0
      %518 = vmatprep.subr.bf16.mxu0 %v516
      %519 = vmatpush1.bf16.msra.mxu0 %v513
      %520 = vmatprep.subr.bf16.mxu0 0
      %521 = vmatpush1.bf16.msra.mxu0 0
      %522 = vmatprep.subr.bf16.mxu0 0
      %523 = vmatpush1.bf16.msra.mxu0 0
      %524 = vmatprep.subr.bf16.mxu0 0
      %525 = vmatpush1.bf16.msra.mxu0 0
      %526 = vmatprep.subr.bf16.mxu0 0
      %527 = vmatpush1.bf16.msra.mxu0 0
      %528 = vmatprep.subr.bf16.mxu0 0
      %529 = vmatpush1.bf16.msra.mxu0 0
      %530 = vmatprep.subr.bf16.mxu0 0
      %531 = vmatpush1.bf16.msra.mxu0 0
      %532 = vmatprep.subr.bf16.mxu0 0
      %533 = vmatpush1.bf16.msra.mxu0 0
      %534 = vmatprep.subr.bf16.mxu0 0
      %535 = vmatpush1.bf16.msra.mxu0 0
      %536 = vmatprep.subr.bf16.mxu0 0
      %537 = vmatpush1.bf16.msra.mxu0 0
      %538 = vmatprep.subr.bf16.mxu0 0
      %539 = vmatpush1.bf16.msra.mxu0 0
      %540 = vmatprep.subr.bf16.mxu0 0
      %541 = vmatpush1.bf16.msra.mxu0 0
      %542 = vmatprep.subr.bf16.mxu0 0
      %543 = vmatpush1.bf16.msra.mxu0 0
      %544 = vmatprep.subr.bf16.mxu0 0
      %545 = vmatpush1.bf16.msra.mxu0 0
      %546 = vmatprep.subr.bf16.mxu0 0
      %547 = vmatpush1.bf16.msra.mxu0 0
      %548 = vmatprep.subr.bf16.mxu0 0
      %549 = vmatpush1.bf16.msra.mxu0 0
      %550 = vmatprep.mubr.bf16.mxu0 0
      %551 = vmatmul.mubr.bf16.gmra.mrb[0].mxu0 %v510
      %v552 = vpop.f32.mrb[0].mxu0
      %v553 = vadd.f32 0.0, %v552
      %v554 = vpop.f32.mrb[0].mxu0
      %v555 = vadd.f32 0.0, %v554
      %v556 = vpop.f32.mrb[0].mxu0
      %v557 = vpop.f32.mrb[0].mxu0
      %558 = vdwg.mxu0
      %v559 = vadd.f32 %v492, %v553
      %v560 = vadd.f32 %v494, %v555
      %s561 = scalar_lea.vmem %s3, 4
      %v562 = vld [vmem:[%s561] sm:$0xf]
      %566 = vrot.lane.b32.xlu0 %v338, 127
      %v567 = vpop.permute.xlu0 %566
      %568 = vrot.lane.b32.xlu0 %v339, 127
      %v569 = vpop.permute.xlu0 %568
      %570 = vrot.lane.b32.xlu0 %v340, 127
      %v571 = vpop.permute.xlu0 %570
      %vm572 = vcmask 1039360
      %v573 = vsel %vm572, %v567, %v569
      %v574 = vsel %vm572, %v569, %v571
      %v576 = vsel %vm396, %v562, 0
      %v579 = vsel %vm400, %v573, 0
      %v582 = vsel %vm400, %v574, 0
      %584 = vmatprep.subr.bf16.mxu0 %v582
      %585 = vmatpush1.bf16.msra.mxu0 %v579
      %586 = vmatprep.subr.bf16.mxu0 0
      %587 = vmatpush1.bf16.msra.mxu0 0
      %588 = vmatprep.subr.bf16.mxu0 0
      %589 = vmatpush1.bf16.msra.mxu0 0
      %590 = vmatprep.subr.bf16.mxu0 0
      %591 = vmatpush1.bf16.msra.mxu0 0
      %592 = vmatprep.subr.bf16.mxu0 0
      %593 = vmatpush1.bf16.msra.mxu0 0
      %594 = vmatprep.subr.bf16.mxu0 0
      %595 = vmatpush1.bf16.msra.mxu0 0
      %596 = vmatprep.subr.bf16.mxu0 0
      %597 = vmatpush1.bf16.msra.mxu0 0
      %598 = vmatprep.subr.bf16.mxu0 0
      %599 = vmatpush1.bf16.msra.mxu0 0
      %600 = vmatprep.subr.bf16.mxu0 0
      %601 = vmatpush1.bf16.msra.mxu0 0
      %602 = vmatprep.subr.bf16.mxu0 0
      %603 = vmatpush1.bf16.msra.mxu0 0
      %604 = vmatprep.subr.bf16.mxu0 0
      %605 = vmatpush1.bf16.msra.mxu0 0
      %606 = vmatprep.subr.bf16.mxu0 0
      %607 = vmatpush1.bf16.msra.mxu0 0
      %608 = vmatprep.subr.bf16.mxu0 0
      %609 = vmatpush1.bf16.msra.mxu0 0
      %610 = vmatprep.subr.bf16.mxu0 0
      %611 = vmatpush1.bf16.msra.mxu0 0
      %612 = vmatprep.subr.bf16.mxu0 0
      %613 = vmatpush1.bf16.msra.mxu0 0
      %614 = vmatprep.subr.bf16.mxu0 0
      %615 = vmatpush1.bf16.msra.mxu0 0
      %616 = vmatprep.mubr.bf16.mxu0 0
      %617 = vmatmul.mubr.bf16.gmra.mrb[0].mxu0 %v576
      %v618 = vpop.f32.mrb[0].mxu0
      %v619 = vadd.f32 0.0, %v618
      %v620 = vpop.f32.mrb[0].mxu0
      %v621 = vadd.f32 0.0, %v620
      %v622 = vpop.f32.mrb[0].mxu0
      %v623 = vpop.f32.mrb[0].mxu0
      %624 = vdwg.mxu0
      %v625 = vadd.f32 %v559, %v619
      %v626 = vadd.f32 %v560, %v621
      %s627 = scalar_lea.vmem %s3, 16
      %v628 = vld [vmem:[%s627] sm:$0xf]
      %629 = vrot.lane.b32.xlu0 %v338, 111
      %v630 = vpop.permute.xlu0 %629
      %631 = vrot.lane.b32.xlu0 %v339, 111
      %v632 = vpop.permute.xlu0 %631
      %633 = vrot.lane.b32.xlu0 %v340, 111
      %v634 = vpop.permute.xlu0 %633
      %vm635 = vcmask 908288
      %v636 = vsel %vm635, %v630, %v632
      %v637 = vsel %vm635, %v632, %v634
      %v639 = vsel %vm396, %v628, 0
      %v642 = vsel %vm400, %v636, 0
      %v645 = vsel %vm400, %v637, 0
      %647 = vmatprep.subr.bf16.mxu0 %v645
      %648 = vmatpush1.bf16.msra.mxu0 %v642
      %649 = vmatprep.subr.bf16.mxu0 0
      %650 = vmatpush1.bf16.msra.mxu0 0
      %651 = vmatprep.subr.bf16.mxu0 0
      %652 = vmatpush1.bf16.msra.mxu0 0
      %653 = vmatprep.subr.bf16.mxu0 0
      %654 = vmatpush1.bf16.msra.mxu0 0
      %655 = vmatprep.subr.bf16.mxu0 0
      %656 = vmatpush1.bf16.msra.mxu0 0
      %657 = vmatprep.subr.bf16.mxu0 0
      %658 = vmatpush1.bf16.msra.mxu0 0
      %659 = vmatprep.subr.bf16.mxu0 0
      %660 = vmatpush1.bf16.msra.mxu0 0
      %661 = vmatprep.subr.bf16.mxu0 0
      %662 = vmatpush1.bf16.msra.mxu0 0
      %663 = vmatprep.subr.bf16.mxu0 0
      %664 = vmatpush1.bf16.msra.mxu0 0
      %665 = vmatprep.subr.bf16.mxu0 0
      %666 = vmatpush1.bf16.msra.mxu0 0
      %667 = vmatprep.subr.bf16.mxu0 0
      %668 = vmatpush1.bf16.msra.mxu0 0
      %669 = vmatprep.subr.bf16.mxu0 0
      %670 = vmatpush1.bf16.msra.mxu0 0
      %671 = vmatprep.subr.bf16.mxu0 0
      %672 = vmatpush1.bf16.msra.mxu0 0
      %673 = vmatprep.subr.bf16.mxu0 0
      %674 = vmatpush1.bf16.msra.mxu0 0
      %675 = vmatprep.subr.bf16.mxu0 0
      %676 = vmatpush1.bf16.msra.mxu0 0
      %677 = vmatprep.subr.bf16.mxu0 0
      %678 = vmatpush1.bf16.msra.mxu0 0
      %679 = vmatprep.mubr.bf16.mxu0 0
      %680 = vmatmul.mubr.bf16.gmra.mrb[0].mxu0 %v639
      %v681 = vpop.f32.mrb[0].mxu0
      %v682 = vadd.f32 0.0, %v681
      %v683 = vpop.f32.mrb[0].mxu0
      %v684 = vadd.f32 0.0, %v683
      %v685 = vpop.f32.mrb[0].mxu0
      %v686 = vpop.f32.mrb[0].mxu0
      %687 = vdwg.mxu0
      %v688 = vadd.f32 %v625, %v682
      %v689 = vadd.f32 %v626, %v684
      %s690 = scalar_lea.vmem %s3, 28
      %v691 = vld [vmem:[%s690] sm:$0xf]
      %692 = vrot.lane.b32.xlu0 %v338, 95
      %v693 = vpop.permute.xlu0 %692
      %694 = vrot.lane.b32.xlu0 %v339, 95
      %v695 = vpop.permute.xlu0 %694
      %696 = vrot.lane.b32.xlu0 %v340, 95
      %v697 = vpop.permute.xlu0 %696
      %vm698 = vcmask 777216
      %v699 = vsel %vm698, %v693, %v695
      %v700 = vsel %vm698, %v695, %v697
      %v702 = vsel %vm396, %v691, 0
      %v705 = vsel %vm400, %v699, 0
      %v708 = vsel %vm400, %v700, 0
      %710 = vmatprep.subr.bf16.mxu0 %v708
      %711 = vmatpush1.bf16.msra.mxu0 %v705
      %712 = vmatprep.subr.bf16.mxu0 0
      %713 = vmatpush1.bf16.msra.mxu0 0
      %714 = vmatprep.subr.bf16.mxu0 0
      %715 = vmatpush1.bf16.msra.mxu0 0
      %716 = vmatprep.subr.bf16.mxu0 0
      %717 = vmatpush1.bf16.msra.mxu0 0
      %718 = vmatprep.subr.bf16.mxu0 0
      %719 = vmatpush1.bf16.msra.mxu0 0
      %720 = vmatprep.subr.bf16.mxu0 0
      %721 = vmatpush1.bf16.msra.mxu0 0
      %722 = vmatprep.subr.bf16.mxu0 0
      %723 = vmatpush1.bf16.msra.mxu0 0
      %724 = vmatprep.subr.bf16.mxu0 0
      %725 = vmatpush1.bf16.msra.mxu0 0
      %726 = vmatprep.subr.bf16.mxu0 0
      %727 = vmatpush1.bf16.msra.mxu0 0
      %728 = vmatprep.subr.bf16.mxu0 0
      %729 = vmatpush1.bf16.msra.mxu0 0
      %730 = vmatprep.subr.bf16.mxu0 0
      %731 = vmatpush1.bf16.msra.mxu0 0
      %732 = vmatprep.subr.bf16.mxu0 0
      %733 = vmatpush1.bf16.msra.mxu0 0
      %734 = vmatprep.subr.bf16.mxu0 0
      %735 = vmatpush1.bf16.msra.mxu0 0
      %736 = vmatprep.subr.bf16.mxu0 0
      %737 = vmatpush1.bf16.msra.mxu0 0
      %738 = vmatprep.subr.bf16.mxu0 0
      %739 = vmatpush1.bf16.msra.mxu0 0
      %740 = vmatprep.subr.bf16.mxu0 0
      %741 = vmatpush1.bf16.msra.mxu0 0
      %742 = vmatprep.mubr.bf16.mxu0 0
      %743 = vmatmul.mubr.bf16.gmra.mrb[0].mxu0 %v702
      %v744 = vpop.f32.mrb[0].mxu0
      %v745 = vadd.f32 0.0, %v744
      %v746 = vpop.f32.mrb[0].mxu0
      %v747 = vadd.f32 0.0, %v746
      %v748 = vpop.f32.mrb[0].mxu0
      %v749 = vpop.f32.mrb[0].mxu0
      %750 = vdwg.mxu0
      %v751 = vadd.f32 %v688, %v745
      %v752 = vadd.f32 %v689, %v747
      %v753 = vadd.s32 %v276, 1
      %v754 = vadd.s32 %v277, 1
      %v755 = vadd.s32 %v278, 1
      %vm756 = vcmp.ge.s32.totalorder %v753, 0
      %vm757 = vcmp.ge.s32.totalorder %v754, 0
      %vm758 = vcmp.ge.s32.totalorder %v755, 0
      %vm759 = vcmp.lt.s32.totalorder %v753, 16
      %vm760 = vcmp.lt.s32.totalorder %v754, 16
      %vm761 = vcmp.lt.s32.totalorder %v755, 16
      %vm762 = vmand %vm756, %vm759
      %vm763 = vmand %vm757, %vm760
      %vm764 = vmand %vm758, %vm761
      %v765 = vsel %vm762, 1, 0
      %v766 = vsel %vm763, 1, 0
      %v767 = vsel %vm764, 1, 0
      %vm768 = vcmp.eq.s32.totalorder %v765, 1
      %vm769 = vcmp.eq.s32.totalorder %v766, 1
      %vm770 = vcmp.eq.s32.totalorder %v767, 1
      %vm771 = vmpackc.low %vm769, %vm768
      %vm772 = vmpackc.low %vm770, %vm770
      %v773 = vsel %vm771, 65537, 0
      %v774 = vsel %vm772, 65537, 0
      %v775 = vlaneseq
      %v776 = vshrl.u32 %v775, 7
      %v777 = vsub.s32 0, %v776
      %v778 = vrot.slane %v773, %v777
      %v779 = vlaneseq
      %v780 = vshrl.u32 %v779, 7
      %v781 = vsub.s32 4, %v780
      %v782 = vrot.slane %v773, %v781
      %v783 = vlaneseq
      %v784 = vshrl.u32 %v783, 7
      %v785 = vsub.s32 0, %v784
      %v786 = vrot.slane %v774, %v785
      %787 = vrot.lane.b32.xlu0 %v778, 2
      %v788 = vpop.permute.xlu0 %787
      %789 = vrot.lane.b32.xlu0 %v782, 2
      %v790 = vpop.permute.xlu0 %789
      %791 = vrot.lane.b32.xlu0 %v786, 2
      %v792 = vpop.permute.xlu0 %791
      %vm793 = vcmask 15360
      %v794 = vsel %vm793, %v788, %v790
      %v795 = vsel %vm793, %v790, %v792
      %vm796 = vcmp.ne.s16.totalorder %v788, 0
      %vm797 = vcmp.ne.s16.totalorder %v794, 0
      %vm798 = vcmp.ne.s16.totalorder %v795, 0
      %v799 = vsel %vm796, %v338, 0
      %v800 = vsel %vm797, %v339, 0
      %v801 = vsel %vm798, %v340, 0
      %s802 = scalar_lea.vmem %s3, 8
      %v803 = vld [vmem:[%s802] sm:$0xf]
      %807 = vrot.lane.b32.xlu0 %v799, 126
      %v808 = vpop.permute.xlu0 %807
      %809 = vrot.lane.b32.xlu0 %v800, 126
      %v810 = vpop.permute.xlu0 %809
      %811 = vrot.lane.b32.xlu0 %v801, 126
      %v812 = vpop.permute.xlu0 %811
      %vm813 = vcmask 1031168
      %v814 = vsel %vm813, %v808, %v810
      %v815 = vsel %vm813, %v810, %v812
      %v817 = vsel %vm396, %v803, 0
      %v820 = vsel %vm400, %v814, 0
      %v823 = vsel %vm400, %v815, 0
      %825 = vmatprep.subr.bf16.mxu0 %v823
      %826 = vmatpush1.bf16.msra.mxu0 %v820
      %827 = vmatprep.subr.bf16.mxu0 0
      %828 = vmatpush1.bf16.msra.mxu0 0
      %829 = vmatprep.subr.bf16.mxu0 0
      %830 = vmatpush1.bf16.msra.mxu0 0
      %831 = vmatprep.subr.bf16.mxu0 0
      %832 = vmatpush1.bf16.msra.mxu0 0
      %833 = vmatprep.subr.bf16.mxu0 0
      %834 = vmatpush1.bf16.msra.mxu0 0
      %835 = vmatprep.subr.bf16.mxu0 0
      %836 = vmatpush1.bf16.msra.mxu0 0
      %837 = vmatprep.subr.bf16.mxu0 0
      %838 = vmatpush1.bf16.msra.mxu0 0
      %839 = vmatprep.subr.bf16.mxu0 0
      %840 = vmatpush1.bf16.msra.mxu0 0
      %841 = vmatprep.subr.bf16.mxu0 0
      %842 = vmatpush1.bf16.msra.mxu0 0
      %843 = vmatprep.subr.bf16.mxu0 0
      %844 = vmatpush1.bf16.msra.mxu0 0
      %845 = vmatprep.subr.bf16.mxu0 0
      %846 = vmatpush1.bf16.msra.mxu0 0
      %847 = vmatprep.subr.bf16.mxu0 0
      %848 = vmatpush1.bf16.msra.mxu0 0
      %849 = vmatprep.subr.bf16.mxu0 0
      %850 = vmatpush1.bf16.msra.mxu0 0
      %851 = vmatprep.subr.bf16.mxu0 0
      %852 = vmatpush1.bf16.msra.mxu0 0
      %853 = vmatprep.subr.bf16.mxu0 0
      %854 = vmatpush1.bf16.msra.mxu0 0
      %855 = vmatprep.subr.bf16.mxu0 0
      %856 = vmatpush1.bf16.msra.mxu0 0
      %857 = vmatprep.mubr.bf16.mxu0 0
      %858 = vmatmul.mubr.bf16.gmra.mrb[0].mxu0 %v817
      %v859 = vpop.f32.mrb[0].mxu0
      %v860 = vadd.f32 0.0, %v859
      %v861 = vpop.f32.mrb[0].mxu0
      %v862 = vadd.f32 0.0, %v861
      %v863 = vpop.f32.mrb[0].mxu0
      %v864 = vpop.f32.mrb[0].mxu0
      %865 = vdwg.mxu0
      %v866 = vadd.f32 %v751, %v860
      %v867 = vadd.f32 %v752, %v862
      %s868 = scalar_lea.vmem %s3, 20
      %v869 = vld [vmem:[%s868] sm:$0xf]
      %870 = vrot.lane.b32.xlu0 %v799, 110
      %v871 = vpop.permute.xlu0 %870
      %872 = vrot.lane.b32.xlu0 %v800, 110
      %v873 = vpop.permute.xlu0 %872
      %874 = vrot.lane.b32.xlu0 %v801, 110
      %v875 = vpop.permute.xlu0 %874
      %vm876 = vcmask 900096
      %v877 = vsel %vm876, %v871, %v873
      %v878 = vsel %vm876, %v873, %v875
      %v880 = vsel %vm396, %v869, 0
      %v883 = vsel %vm400, %v877, 0
      %v886 = vsel %vm400, %v878, 0
      %888 = vmatprep.subr.bf16.mxu0 %v886
      %889 = vmatpush1.bf16.msra.mxu0 %v883
      %890 = vmatprep.subr.bf16.mxu0 0
      %891 = vmatpush1.bf16.msra.mxu0 0
      %892 = vmatprep.subr.bf16.mxu0 0
      %893 = vmatpush1.bf16.msra.mxu0 0
      %894 = vmatprep.subr.bf16.mxu0 0
      %895 = vmatpush1.bf16.msra.mxu0 0
      %896 = vmatprep.subr.bf16.mxu0 0
      %897 = vmatpush1.bf16.msra.mxu0 0
      %898 = vmatprep.subr.bf16.mxu0 0
      %899 = vmatpush1.bf16.msra.mxu0 0
      %900 = vmatprep.subr.bf16.mxu0 0
      %901 = vmatpush1.bf16.msra.mxu0 0
      %902 = vmatprep.subr.bf16.mxu0 0
      %903 = vmatpush1.bf16.msra.mxu0 0
      %904 = vmatprep.subr.bf16.mxu0 0
      %905 = vmatpush1.bf16.msra.mxu0 0
      %906 = vmatprep.subr.bf16.mxu0 0
      %907 = vmatpush1.bf16.msra.mxu0 0
      %908 = vmatprep.subr.bf16.mxu0 0
      %909 = vmatpush1.bf16.msra.mxu0 0
      %910 = vmatprep.subr.bf16.mxu0 0
      %911 = vmatpush1.bf16.msra.mxu0 0
      %912 = vmatprep.subr.bf16.mxu0 0
      %913 = vmatpush1.bf16.msra.mxu0 0
      %914 = vmatprep.subr.bf16.mxu0 0
      %915 = vmatpush1.bf16.msra.mxu0 0
      %916 = vmatprep.subr.bf16.mxu0 0
      %917 = vmatpush1.bf16.msra.mxu0 0
      %918 = vmatprep.subr.bf16.mxu0 0
      %919 = vmatpush1.bf16.msra.mxu0 0
      %920 = vmatprep.mubr.bf16.mxu0 0
      %921 = vmatmul.mubr.bf16.gmra.mrb[0].mxu0 %v880
      %v922 = vpop.f32.mrb[0].mxu0
      %v923 = vadd.f32 0.0, %v922
      %v924 = vpop.f32.mrb[0].mxu0
      %v925 = vadd.f32 0.0, %v924
      %v926 = vpop.f32.mrb[0].mxu0
      %v927 = vpop.f32.mrb[0].mxu0
      %928 = vdwg.mxu0
      %v929 = vadd.f32 %v866, %v923
      %v930 = vadd.f32 %v867, %v925
      %s931 = scalar_lea.vmem %s3, 32
      %v932 = vld [vmem:[%s931] sm:$0xf]
      %933 = vrot.lane.b32.xlu0 %v799, 94
      %v934 = vpop.permute.xlu0 %933
      %935 = vrot.lane.b32.xlu0 %v800, 94
      %v936 = vpop.permute.xlu0 %935
      %937 = vrot.lane.b32.xlu0 %v801, 94
      %v938 = vpop.permute.xlu0 %937
      %vm939 = vcmask 769024
      %v940 = vsel %vm939, %v934, %v936
      %v941 = vsel %vm939, %v936, %v938
      %v943 = vsel %vm396, %v932, 0
      %v946 = vsel %vm400, %v940, 0
      %v949 = vsel %vm400, %v941, 0
      %951 = vmatprep.subr.bf16.mxu0 %v949
      %952 = vmatpush1.bf16.msra.mxu0 %v946
      %953 = vmatprep.subr.bf16.mxu0 0
      %954 = vmatpush1.bf16.msra.mxu0 0
      %955 = vmatprep.subr.bf16.mxu0 0
      %956 = vmatpush1.bf16.msra.mxu0 0
      %957 = vmatprep.subr.bf16.mxu0 0
      %958 = vmatpush1.bf16.msra.mxu0 0
      %959 = vmatprep.subr.bf16.mxu0 0
      %960 = vmatpush1.bf16.msra.mxu0 0
      %961 = vmatprep.subr.bf16.mxu0 0
      %962 = vmatpush1.bf16.msra.mxu0 0
      %963 = vmatprep.subr.bf16.mxu0 0
      %964 = vmatpush1.bf16.msra.mxu0 0
      %965 = vmatprep.subr.bf16.mxu0 0
      %966 = vmatpush1.bf16.msra.mxu0 0
      %967 = vmatprep.subr.bf16.mxu0 0
      %968 = vmatpush1.bf16.msra.mxu0 0
      %969 = vmatprep.subr.bf16.mxu0 0
      %970 = vmatpush1.bf16.msra.mxu0 0
      %971 = vmatprep.subr.bf16.mxu0 0
      %972 = vmatpush1.bf16.msra.mxu0 0
      %973 = vmatprep.subr.bf16.mxu0 0
      %974 = vmatpush1.bf16.msra.mxu0 0
      %975 = vmatprep.subr.bf16.mxu0 0
      %976 = vmatpush1.bf16.msra.mxu0 0
      %977 = vmatprep.subr.bf16.mxu0 0
      %978 = vmatpush1.bf16.msra.mxu0 0
      %979 = vmatprep.subr.bf16.mxu0 0
      %980 = vmatpush1.bf16.msra.mxu0 0
      %981 = vmatprep.subr.bf16.mxu0 0
      %982 = vmatpush1.bf16.msra.mxu0 0
      %983 = vmatprep.mubr.bf16.mxu0 0
      %984 = vmatmul.mubr.bf16.gmra.mrb[0].mxu0 %v943
      %v985 = vpop.f32.mrb[0].mxu0
      %v986 = vadd.f32 0.0, %v985
      %v987 = vpop.f32.mrb[0].mxu0
      %v988 = vadd.f32 0.0, %v987
      %v989 = vpop.f32.mrb[0].mxu0
      %v990 = vpop.f32.mrb[0].mxu0
      %991 = vdwg.mxu0
      %v992 = vadd.f32 %v929, %v986
      %v993 = vadd.f32 %v930, %v988
      %v994 = vpack.c.bf16 %v992, %v992
      %v995 = vpack.c.bf16 %v993, %v993
      %v998 = vunpack.c.l.b16 %v994
      %v999 = vunpack.c.l.b16 %v995
      %v1000 = vpack.c.b16 %v999, %v998
      %1002 = vst [vmem:[%s231] sm:$0xff] %v1000
      %v1003 = vadd.f32 %v992, %v993
      %1004 = vadd.xlane.f32.xlu0 %v1003
      %v1005 = vpop.xlane.xlu0 %1004
      %v1006 = vmul.f32 %v1005, 0.00390625
      %v1007 = vsub.f32 %v992, %v1006
      %v1008 = vsub.f32 %v993, %v1006
      %v1009 = vmul.f32 %v1007, %v1007
      %v1010 = vmul.f32 %v1008, %v1008
      %v1011 = vadd.f32 %v1009, %v1010
      %1012 = vadd.xlane.f32.xlu0 %v1011
      %v1013 = vpop.xlane.xlu0 %1012
      %vm1014 = vcmask 7168
      %v1015 = vsel %vm1014, %v1005, %v1013
      %vm1016 = vcmask 15360
      %1017 = vst.msk [vmem:[%s235] sm:$0xff] %vm1016, %v1015
      %p1018 = scmp.lt.s32.totalorder %s17, 1
      %s1019 = scalar_select %p1018, %s17, 1
      %s1020 = smul.addr %s1019, 2
      %s1021 = smul.addr %s1020, 4
      %s1022 = scalar_lea.vmem %s4, %s1021
      %p1023 = scmp.lt.s32.totalorder %s17, 1
      %s1024 = scalar_select %p1023, %s17, 1
      %s1025 = smul.addr %s1024, 8
      %s1026 = scalar_lea.vmem %s5, %s1025
      // Predicated region
      $region37: #{c3_block.7} parent=35 // pred_check
        %p1027 = pneg %p124
      $region38: #{c3_block.7} parent=35 // pred_check_branch
        %1029 = sbr.rel (%p1027) target = $region40
      $region39: #{c3_block.7} parent=35 // pred_region
        _
      $region40: #{c3_block.7} parent=35 // pred_fallthru
        _
      // Predicated region
      $region41: #{c3_block.7} parent=35 // pred_check
        %p1030 = pneg %p150
      $region42: #{c3_block.7} parent=35 // pred_check_branch
        %1032 = sbr.rel (%p1030) target = $region44
      $region43: #{c3_block.7} parent=35 // pred_region
        _
      $region44: #{c3_block.7} parent=35 // pred_fallthru
        _
    $region36: #{c3_block.7} parent=5 // pred_fallthru
      _
    %p1033 = scmp.le.s32.totalorder 2, %s12
    // Predicated region
    $region45: #{c3_block.7} parent=5 // pred_check
      %p1034 = pneg %p1033
    $region46: #{c3_block.7} parent=5 // pred_check_branch
      %1036 = sbr.rel (%p1034) target = $region48
    $region47: #{c3_block.7} parent=5 // pred_region
      %s1037 = ssub.s32 %s12, 2
      // Predicated region
      $region49: #{c3_block.7} parent=47 // pred_check
        %p1038 = pneg %p130
      $region50: #{c3_block.7} parent=47 // pred_check_branch
        %1040 = sbr.rel (%p1038) target = $region52
      $region51: #{c3_block.7} parent=47 // pred_region
        %p1041 = scmp.lt.s32.totalorder %s18, 1
        %s1042 = scalar_select %p1041, %s18, 1
        %s1043 = smul.addr %s1042, 2
        %s1044 = smul.addr %s1043, 4
        %s1045 = scalar_lea.vmem %s4, %s1044
      $region52: #{c3_block.7} parent=47 // pred_fallthru
        _
      // Predicated region
      $region53: #{c3_block.7} parent=47 // pred_check
        %p1046 = pneg %p156
      $region54: #{c3_block.7} parent=47 // pred_check_branch
        %1048 = sbr.rel (%p1046) target = $region56
      $region55: #{c3_block.7} parent=47 // pred_region
        %p1049 = scmp.lt.s32.totalorder %s18, 1
        %s1050 = scalar_select %p1049, %s18, 1
        %s1051 = smul.addr %s1050, 8
        %s1052 = scalar_lea.vmem %s5, %s1051
      $region56: #{c3_block.7} parent=47 // pred_fallthru
        _
    $region48: #{c3_block.7} parent=5 // pred_fallthru
      _
  $region6: #{c3_block.7} parent=0 // loop_footer
    %s16 = sadd.s32 1, %s12
  $region7: #{c3_block.7} parent=0 // loop_footer_branch
    %11 = sbr.rel target = $region3
  $region8: #{c3_block.7} parent=0 // loop_exit
    _

// kernel: c3_block.11
$region0: #{c3_block.11}
  #allocation0 [shape = 'u32[]', space=smem, size = 0x4, offset = 0x4, fixed_abs, tag = 'smem constant byte address 0x4 - core index']
  #allocation1 [shape = 'u32[144,128]{1,0:T(1,128)}', space=vmem, size = 0x12000, scoped, tag = 'internal scratch']
  %s0 = inlined_call_operand.vmem [shape: bf16[2,16,256], index: 0, kind: input, shape index: {}]
  %s1 = inlined_call_operand.vmem [shape: f32[16,1], index: 1, kind: input, shape index: {}]
  %s2 = inlined_call_operand.vmem [shape: f32[16,1], index: 2, kind: input, shape index: {}]
  %s3 = inlined_call_operand.vmem [shape: f32[2,16,256], index: 3, kind: output, shape index: {}]
  %s4 = sld [smem:[#allocation0]]
  $region45: #{c3_block.11} parent=0
    _
  %s6 = ssub.s32 1, %s4
  %s7 = scalar_select 0, %s6, %s4
  loop: start=0, step=1, limit=4
  $region2: #{c3_block.11} parent=0 // loop_pre_header
    _
  $region3: #{c3_block.11} parent=0 // loop_header
    %s9 = sphi 0, %s13
    %p10 = scmp.ge.s32.totalorder %s9, 4
    %s19 = sphi 0, %s21
    %s22 = sphi 0, %s19
    %s23 = sphi 0, %s22
    %s39 = sphi 0, %s23
    %s43 = sphi 0, %s43
    %s45 = sphi 0, %s43
    %s46 = sphi 0, %s45
    %s60 = sphi 0, %s46
    %s64 = sphi 0, %s64
    %s66 = sphi 0, %s64
    %s67 = sphi 0, %s66
    %s81 = sphi 0, %s67
    %s87 = sphi 0, %s89
    %s90 = sphi 0, %s87
    %s91 = sphi 0, %s90
    %s107 = sphi 0, %s91
  $region4: #{c3_block.11} parent=0 // loop_header_branch
    %12 = sbr.rel (%p10) target = $region8
  $region5: #{c3_block.11} parent=0 // loop_body
    %s14 = ssub.s32 %s9, 1
    %s15 = ssub.s32 %s9, 2
    %s16 = sadd.s32 %s9, 1
    %s17 = ssub.s32 %s9, %s16
    %p18 = scmp.eq.s32.totalorder %s17, 0
    %s20 = sadd.s32 %s19, 1
    %s21 = scalar_select %p18, %s19, %s20
    %p24 = pneg %p18
    %p25 = scmp.eq.s32.totalorder %s9, 1
    %p26 = por %p24, %p25
    %p27 = scmp.ne.s32.totalorder %s19, %s22
    %p28 = scmp.eq.s32.totalorder %s9, 0
    %p29 = por %p27, %p28
    %p30 = scmp.ne.s32.totalorder %s19, %s22
    %p31 = scmp.eq.s32.totalorder %s14, 1
    %p32 = por %p30, %p31
    %p33 = scmp.ne.s32.totalorder %s22, %s23
    %p34 = scmp.eq.s32.totalorder %s14, 0
    %p35 = por %p33, %p34
    %p36 = scmp.ne.s32.totalorder %s22, %s23
    %p37 = scmp.eq.s32.totalorder %s15, 1
    %p38 = por %p36, %p37
    %p40 = scmp.ne.s32.totalorder %s23, %s39
    %p41 = scmp.eq.s32.totalorder %s15, 0
    %p42 = por %p40, %p41
    %s44 = sadd.s32 %s43, 1
    %p47 = scmp.eq.s32.totalorder %s9, 1
    %p48 = scmp.ne.s32.totalorder %s43, %s45
    %p49 = scmp.eq.s32.totalorder %s9, 0
    %p50 = por %p48, %p49
    %p51 = scmp.ne.s32.totalorder %s43, %s45
    %p52 = scmp.eq.s32.totalorder %s14, 1
    %p53 = por %p51, %p52
    %p54 = scmp.ne.s32.totalorder %s45, %s46
    %p55 = scmp.eq.s32.totalorder %s14, 0
    %p56 = por %p54, %p55
    %p57 = scmp.ne.s32.totalorder %s45, %s46
    %p58 = scmp.eq.s32.totalorder %s15, 1
    %p59 = por %p57, %p58
    %p61 = scmp.ne.s32.totalorder %s46, %s60
    %p62 = scmp.eq.s32.totalorder %s15, 0
    %p63 = por %p61, %p62
    %s65 = sadd.s32 %s64, 1
    %p68 = scmp.eq.s32.totalorder %s9, 1
    %p69 = scmp.ne.s32.totalorder %s64, %s66
    %p70 = scmp.eq.s32.totalorder %s9, 0
    %p71 = por %p69, %p70
    %p72 = scmp.ne.s32.totalorder %s64, %s66
    %p73 = scmp.eq.s32.totalorder %s14, 1
    %p74 = por %p72, %p73
    %p75 = scmp.ne.s32.totalorder %s66, %s67
    %p76 = scmp.eq.s32.totalorder %s14, 0
    %p77 = por %p75, %p76
    %p78 = scmp.ne.s32.totalorder %s66, %s67
    %p79 = scmp.eq.s32.totalorder %s15, 1
    %p80 = por %p78, %p79
    %p82 = scmp.ne.s32.totalorder %s67, %s81
    %p83 = scmp.eq.s32.totalorder %s15, 0
    %p84 = por %p82, %p83
    %s85 = ssub.s32 %s9, %s16
    %p86 = scmp.eq.s32.totalorder %s85, 0
    %s88 = sadd.s32 %s87, 1
    %s89 = scalar_select %p86, %s87, %s88
    %p92 = pneg %p86
    %p93 = scmp.eq.s32.totalorder %s9, 1
    %p94 = por %p92, %p93
    %p95 = scmp.ne.s32.totalorder %s87, %s90
    %p96 = scmp.eq.s32.totalorder %s9, 0
    %p97 = por %p95, %p96
    %p98 = scmp.ne.s32.totalorder %s87, %s90
    %p99 = scmp.eq.s32.totalorder %s14, 1
    %p100 = por %p98, %p99
    %p101 = scmp.ne.s32.totalorder %s90, %s91
    %p102 = scmp.eq.s32.totalorder %s14, 0
    %p103 = por %p101, %p102
    %p104 = scmp.ne.s32.totalorder %s90, %s91
    %p105 = scmp.eq.s32.totalorder %s15, 1
    %p106 = por %p104, %p105
    %p108 = scmp.ne.s32.totalorder %s91, %s107
    %p109 = scmp.eq.s32.totalorder %s15, 0
    %p110 = por %p108, %p109
    %p111 = scmp.le.s32.totalorder 1, %s9
    %p112 = scmp.lt.s32.totalorder %s9, 3
    %p113 = pnand %p111, %p112
    %p114 = pneg %p113
    // Predicated region
    $region9: #{c3_block.11} parent=5 // pred_check
      _
    $region10: #{c3_block.11} parent=5 // pred_check_branch
      %116 = sbr.rel (%p113) target = $region12
    $region11: #{c3_block.11} parent=5 // pred_region
      %s117 = ssub.s32 %s9, 1
      // Predicated region
      $region13: #{c3_block.11} parent=11 // pred_check
        %p118 = pneg %p56
      $region14: #{c3_block.11} parent=11 // pred_check_branch
        %120 = sbr.rel (%p118) target = $region16
      $region15: #{c3_block.11} parent=11 // pred_region
        _
      $region16: #{c3_block.11} parent=11 // pred_fallthru
        _
      // Predicated region
      $region17: #{c3_block.11} parent=11 // pred_check
        %p121 = pneg %p77
      $region18: #{c3_block.11} parent=11 // pred_check_branch
        %123 = sbr.rel (%p121) target = $region20
      $region19: #{c3_block.11} parent=11 // pred_region
        _
      $region20: #{c3_block.11} parent=11 // pred_fallthru
        _
    $region12: #{c3_block.11} parent=5 // pred_fallthru
      _
    %p124 = scmp.lt.s32.totalorder %s9, 2
    // Predicated region
    $region21: #{c3_block.11} parent=5 // pred_check
      %p125 = pneg %p124
    $region22: #{c3_block.11} parent=5 // pred_check_branch
      %127 = sbr.rel (%p125) target = $region24
    $region23: #{c3_block.11} parent=5 // pred_region
      // Predicated region
      $region25: #{c3_block.11} parent=23 // pred_check
        %p128 = pneg %p29
      $region26: #{c3_block.11} parent=23 // pred_check_branch
        %130 = sbr.rel (%p128) target = $region28
      $region27: #{c3_block.11} parent=23 // pred_region
        %p131 = scmp.lt.s32.totalorder %s9, 1
        %s132 = scalar_select %p131, %s9, 1
        %s133 = smul.addr %s132, 4
        %s134 = smul.addr %s133, 4
        %s135 = scalar_lea.vmem %s0, %s134
      $region28: #{c3_block.11} parent=23 // pred_fallthru
        _
    $region24: #{c3_block.11} parent=5 // pred_fallthru
      _
    %p136 = scmp.le.s32.totalorder 1, %s9
    %p137 = scmp.lt.s32.totalorder %s9, 3
    %p138 = pnand %p136, %p137
    %p139 = pneg %p138
    // Predicated region
    $region29: #{c3_block.11} parent=5 // pred_check
      _
    $region30: #{c3_block.11} parent=5 // pred_check_branch
      %141 = sbr.rel (%p138) target = $region32
    $region31: #{c3_block.11} parent=5 // pred_region
      %s142 = ssub.s32 %s9, 1
      %p143 = scmp.lt.s32.totalorder %s14, 1
      %s144 = scalar_select %p143, %s14, 1
      %s145 = smul.addr %s144, 4
      %s146 = smul.addr %s145, 4
      %s147 = scalar_lea.vmem %s0, %s146
      %p148 = pneg %p35
      %p149 = pneg %p32
      %p150 = pneg %p56
      %p151 = pneg %p53
      %p152 = pneg %p77
      %p153 = pneg %p74
      %p154 = pneg %p103
      %p155 = pneg %p100
      %p156 = scmp.lt.s32.totalorder %s14, 1
      %s157 = scalar_select %p156, %s14, 1
      %s158 = smul.addr %s157, 4
      %s159 = smul.addr %s158, 8
      %s160 = scalar_lea.vmem %s3, %s159
      %p161 = scmp.lt.s32.totalorder %s14, 1
      %s162 = scalar_select %p161, %s14, 1
      %s163 = smul.addr %s162, 4
      %s164 = smul.addr %s163, 4
      %s165 = scalar_lea.vmem %s0, %s164
      %p166 = scmp.lt.s32.totalorder %s14, 1
      %s167 = scalar_select %p166, %s14, 1
      %s168 = smul.addr %s167, 4
      %s169 = smul.addr %s168, 8
      %s170 = scalar_lea.vmem %s3, %s169
      %v171 = vld [vmem:[%s165] sm:$0xff]
      %v172 = vld [vmem:[%s165 + $0x8] sm:$0xff]
      %v173 = vunpack.c.l.bf16 %v171
      %v174 = vunpack.c.h.bf16 %v171
      %v175 = vunpack.c.l.bf16 %v172
      %v176 = vunpack.c.h.bf16 %v172
      %v177 = vld [vmem:[%s1] sm:$0xff]
      %v178 = vld [vmem:[%s1 + $0x8] sm:$0xff]
      %180 = vset.pattern.permute.xlu0 0
      %181 = vperm.xlu0 %180, %v177
      %v182 = vpop.permute.xlu0 %181
      %185 = vset.pattern.permute.xlu0 0
      %186 = vperm.xlu0 %185, %v178
      %v187 = vpop.permute.xlu0 %186
      %v189 = vmul.f32 %v173, %v182
      %v190 = vmul.f32 %v174, %v182
      %v191 = vmul.f32 %v175, %v187
      %v192 = vmul.f32 %v176, %v187
      %v193 = vld [vmem:[%s2] sm:$0xff]
      %v194 = vld [vmem:[%s2 + $0x8] sm:$0xff]
      %196 = vset.pattern.permute.xlu0 0
      %197 = vperm.xlu0 %196, %v193
      %v198 = vpop.permute.xlu0 %197
      %201 = vset.pattern.permute.xlu0 0
      %202 = vperm.xlu0 %201, %v194
      %v203 = vpop.permute.xlu0 %202
      %v205 = vadd.f32 %v189, %v198
      %v206 = vadd.f32 %v190, %v198
      %v207 = vadd.f32 %v191, %v203
      %v208 = vadd.f32 %v192, %v203
      %v209 = vsub.f32 0.0, %v205
      %v210 = vsub.f32 0.0, %v206
      %v211 = vsub.f32 0.0, %v207
      %v212 = vsub.f32 0.0, %v208
      %v213 = vmul.f32 %v209, 1.442695
      %v214 = vpow.pop %v213
      %v215 = vmul.f32 %v210, 1.442695
      %v216 = vpow.pop %v215
      %v217 = vmul.f32 %v211, 1.442695
      %v218 = vpow.pop %v217
      %v219 = vmul.f32 %v212, 1.442695
      %v220 = vpow.pop %v219
      %v221 = vadd.f32 %v214, 1.0
      %v222 = vadd.f32 %v216, 1.0
      %v223 = vadd.f32 %v218, 1.0
      %v224 = vadd.f32 %v220, 1.0
      %v225 = vrcp.pop %v221
      %v226 = vrcp.pop %v222
      %v227 = vrcp.pop %v223
      %v228 = vrcp.pop %v224
      %v229 = vmul.f32 %v205, %v225
      %v230 = vmul.f32 %v206, %v226
      %v231 = vmul.f32 %v207, %v227
      %v232 = vmul.f32 %v208, %v228
      %233 = vst [vmem:[%s170] sm:$0xff] %v229
      %234 = vst [vmem:[%s170 + $0x8] sm:$0xff] %v230
      %235 = vst [vmem:[%s170 + $0x10] sm:$0xff] %v231
      %236 = vst [vmem:[%s170 + $0x18] sm:$0xff] %v232
      %p237 = scmp.lt.s32.totalorder %s14, 1
      %s238 = scalar_select %p237, %s14, 1
      %s239 = smul.addr %s238, 4
      %s240 = smul.addr %s239, 8
      %s241 = scalar_lea.vmem %s3, %s240
      // Predicated region
      $region33: #{c3_block.11} parent=31 // pred_check
        %p242 = pneg %p100
      $region34: #{c3_block.11} parent=31 // pred_check_branch
        %244 = sbr.rel (%p242) target = $region36
      $region35: #{c3_block.11} parent=31 // pred_region
        _
      $region36: #{c3_block.11} parent=31 // pred_fallthru
        _
    $region32: #{c3_block.11} parent=5 // pred_fallthru
      _
    %p245 = scmp.le.s32.totalorder 2, %s9
    // Predicated region
    $region37: #{c3_block.11} parent=5 // pred_check
      %p246 = pneg %p245
    $region38: #{c3_block.11} parent=5 // pred_check_branch
      %248 = sbr.rel (%p246) target = $region40
    $region39: #{c3_block.11} parent=5 // pred_region
      %s249 = ssub.s32 %s9, 2
      // Predicated region
      $region41: #{c3_block.11} parent=39 // pred_check
        %p250 = pneg %p106
      $region42: #{c3_block.11} parent=39 // pred_check_branch
        %252 = sbr.rel (%p250) target = $region44
      $region43: #{c3_block.11} parent=39 // pred_region
        %p253 = scmp.lt.s32.totalorder %s15, 1
        %s254 = scalar_select %p253, %s15, 1
        %s255 = smul.addr %s254, 4
        %s256 = smul.addr %s255, 8
        %s257 = scalar_lea.vmem %s3, %s256
      $region44: #{c3_block.11} parent=39 // pred_fallthru
        _
    $region40: #{c3_block.11} parent=5 // pred_fallthru
      _
  $region6: #{c3_block.11} parent=0 // loop_footer
    %s13 = sadd.s32 1, %s9
  $region7: #{c3_block.11} parent=0 // loop_footer_branch
    %8 = sbr.rel target = $region3
  $region8: #{c3_block.11} parent=0 // loop_exit
    _

</llo_original>
